<compile_context>
chip_gen: v7x
topology: tpu7x:2x2x1
jax: 0.10.0
libtpu: 0.0.40
codegen_flags: <defaults>
</compile_context>

<pallas_src>
import jax
import jax.numpy as jnp
import numpy as np
from jax.experimental import pallas as pl
from jax.experimental.pallas import tpu as pltpu


# ----------------------------------------------------------------------------
# In-kernel helpers (traced inside the Pallas kernel)
# ----------------------------------------------------------------------------
def _shift_left_matrix(n):
    """S such that (y @ S)[:, c] == y[:, c + 1] (last column becomes 0)."""
    r = jax.lax.broadcasted_iota(jnp.int32, (n, n), 0)
    c = jax.lax.broadcasted_iota(jnp.int32, (n, n), 1)
    return (r == c + 1).astype(jnp.float32)


def _even_odd_row_select(n_out, n_in):
    """(n_out, n_in) 0/1 matrices selecting rows 2r and 2r+1."""
    r = jax.lax.broadcasted_iota(jnp.int32, (n_out, n_in), 0)
    c = jax.lax.broadcasted_iota(jnp.int32, (n_out, n_in), 1)
    return ((c == 2 * r).astype(jnp.float32),
            (c == 2 * r + 1).astype(jnp.float32))


def _maxpool2x2(y, h_out):
    """y: (2*h_out, n_cols), columns laid out as co*W + w with W even.
    Returns (h_out, n_cols); valid entries sit at columns co*W + 2*w'."""
    f32 = jnp.float32
    n = y.shape[1]
    shift = _shift_left_matrix(n)
    ym = jnp.maximum(y, jnp.dot(y, shift, preferred_element_type=f32))
    sel_e, sel_o = _even_odd_row_select(h_out, 2 * h_out)
    return jnp.maximum(jnp.dot(sel_e, ym, preferred_element_type=f32),
                       jnp.dot(sel_o, ym, preferred_element_type=f32))


# ----------------------------------------------------------------------------
# The fused LeNet5 kernel (one image per grid step)
# ----------------------------------------------------------------------------
def _lenet5_kernel(x_ref, m1_ref, b1_ref, m2_ref, b2_ref, a1_ref, b3_ref,
                   w4_ref, b4_ref, w5_ref, b5_ref, o_ref):
    f32 = jnp.float32

    # conv1 (input pre-padded to 32x32) + bias + relu -> (28, 6*28), col=co*28+w
    x = x_ref[0]                                            # (32, 32*Cin)
    y1 = jnp.dot(x[0:28, :], m1_ref[0], preferred_element_type=f32)
    for i in range(1, 5):
        y1 = y1 + jnp.dot(x[i:i + 28, :], m1_ref[i], preferred_element_type=f32)
    y1 = jnp.maximum(y1 + b1_ref[...], 0.0)

    # maxpool 2x2 -> (14, 168); valid entries at columns ci*28 + 2*w'
    p1 = _maxpool2x2(y1, 14)

    # conv2 + bias + relu -> (10, 16*10), col = co*10 + w
    y2 = jnp.dot(p1[0:10, :], m2_ref[0], preferred_element_type=f32)
    for i in range(1, 5):
        y2 = y2 + jnp.dot(p1[i:i + 10, :], m2_ref[i], preferred_element_type=f32)
    y2 = jnp.maximum(y2 + b2_ref[...], 0.0)

    # maxpool 2x2 -> (5, 160); valid entries at columns co*10 + 2*w'
    p2 = _maxpool2x2(y2, 5)

    # fc1 (PyTorch NCHW flatten absorbed into a1) + relu -> (1, 120)
    h = jnp.dot(p2[0:1, :], a1_ref[0], preferred_element_type=f32)
    for r in range(1, 5):
        h = h + jnp.dot(p2[r:r + 1, :], a1_ref[r], preferred_element_type=f32)
    h = jnp.maximum(h + b3_ref[...], 0.0)

    # fc2 + relu, fc3
    h = jnp.maximum(jnp.dot(h, w4_ref[...], preferred_element_type=f32)
                    + b4_ref[...], 0.0)
    out = jnp.dot(h, w5_ref[...], preferred_element_type=f32) + b5_ref[...]
    o_ref[0] = out                                           # (1, num_classes)


# ----------------------------------------------------------------------------
# One-time host-side weight repacking (plain JAX / numpy glue)
# ----------------------------------------------------------------------------
def _banded_conv_mats(w, w_out, in_col, n_in_cols, out_col, n_out_cols):
    """Rewrite a KHxKW conv (PyTorch OIHW weight) as KH row-shifted matmuls.

    Returns (KH, n_in_cols, n_out_cols) f32 such that
        Y[h, out_col(co, wo)] = sum_i (X[h + i, :] @ M[i])[out_col(co, wo)]
    where X[row, in_col(ci, wi)] holds input(row, wi, ci)."""
    cout, cin, kh, kw = w.shape
    j_ix, ci_ix, co_ix, wo_ix = np.meshgrid(
        np.arange(kw), np.arange(cin), np.arange(cout), np.arange(w_out),
        indexing="ij")
    rows = in_col(ci_ix, wo_ix + j_ix).ravel()
    cols = out_col(co_ix, wo_ix).ravel()
    w = jnp.asarray(w)
    mats = []
    for i in range(kh):
        vals = w[co_ix, ci_ix, i, j_ix].ravel().astype(jnp.float32)
        mats.append(jnp.zeros((n_in_cols, n_out_cols), jnp.float32)
                    .at[rows, cols].set(vals))
    return jnp.stack(mats)


def _fc1_rowwise_mats(fc1_w, n_p2_cols=160):
    """Absorb PyTorch's view(-1, 16*5*5) flatten into fc1:
        fc1(x) = sum_h P2[h, :] @ A[h],   P2[h, co*10 + 2*w] = pool2(h, w, co)."""
    fc1_w = jnp.asarray(fc1_w)
    n_feat = fc1_w.shape[0]                   # 120
    co_ix, w_ix, f_ix = np.meshgrid(
        np.arange(16), np.arange(5), np.arange(n_feat), indexing="ij")
    rows = (co_ix * 10 + 2 * w_ix).ravel()
    cols = f_ix.ravel()
    mats = []
    for h in range(5):
        k = (co_ix * 25 + h * 5 + w_ix).ravel()
        vals = fc1_w[cols, k].astype(jnp.float32)
        mats.append(jnp.zeros((n_p2_cols, n_feat), jnp.float32)
                    .at[rows, cols].set(vals))
    return jnp.stack(mats)


def prepare_lenet5_params(params, image_c):
    cin = image_c
    m1 = _banded_conv_mats(
        params["conv1_w"], w_out=28,
        in_col=lambda ci, w: w * cin + ci, n_in_cols=32 * cin,
        out_col=lambda co, w: co * 28 + w, n_out_cols=6 * 28)
    m2 = _banded_conv_mats(
        params["conv2_w"], w_out=10,
        in_col=lambda ci, w: ci * 28 + 2 * w, n_in_cols=6 * 28,
        out_col=lambda co, w: co * 10 + w, n_out_cols=16 * 10)
    return dict(
        m1=m1,
        b1=jnp.repeat(params["conv1_b"].astype(jnp.float32), 28)[None, :],
        m2=m2,
        b2=jnp.repeat(params["conv2_b"].astype(jnp.float32), 10)[None, :],
        a1=_fc1_rowwise_mats(params["fc1_w"]),
        b3=params["fc1_b"].astype(jnp.float32)[None, :],
        w4=params["fc2_w"].astype(jnp.float32).T,
        b4=params["fc2_b"].astype(jnp.float32)[None, :],
        w5=params["fc3_w"].astype(jnp.float32).T,
        b5=params["fc3_b"].astype(jnp.float32)[None, :],
    )


# ----------------------------------------------------------------------------
# Forward pass (single pallas_call)
# ----------------------------------------------------------------------------
def _full_block(a):
    nd = a.ndim
    return pl.BlockSpec(a.shape, lambda *_: (0,) * nd)


def lenet5_forward(x_nchw, prep):
    n, cin, hh, ww = x_nchw.shape
    assert (hh, ww) == (28, 28)               # forced by fc1 = 16*5*5
    nc = prep["b5"].shape[1]

    # cheap layout glue on the tiny input: NCHW -> NHWC -> pad(2) -> (N,32,32*Cin)
    x = jnp.transpose(x_nchw, (0, 2, 3, 1)).astype(jnp.float32)
    x = jnp.pad(x, ((0, 0), (2, 2), (2, 2), (0, 0)))
    x = x.reshape(n, 32, 32 * cin)

    out = pl.pallas_call(
        _lenet5_kernel,
        out_shape=jax.ShapeDtypeStruct((n, 1, nc), jnp.float32),
        grid=(n,),
        in_specs=[
            pl.BlockSpec((1, 32, 32 * cin), lambda b: (b, 0, 0)),
            _full_block(prep["m1"]), _full_block(prep["b1"]),
            _full_block(prep["m2"]), _full_block(prep["b2"]),
            _full_block(prep["a1"]), _full_block(prep["b3"]),
            _full_block(prep["w4"]), _full_block(prep["b4"]),
            _full_block(prep["w5"]), _full_block(prep["b5"]),
        ],
        out_specs=pl.BlockSpec((1, 1, nc), lambda b: (b, 0, 0)),
        compiler_params=pltpu.CompilerParams(
            dimension_semantics=("parallel",)),
    )(x, prep["m1"], prep["b1"], prep["m2"], prep["b2"], prep["a1"],
      prep["b3"], prep["w4"], prep["b4"], prep["w5"], prep["b5"])
    return out.reshape(n, nc)


# ----------------------------------------------------------------------------
# Pure-JAX reference (sanity check only)
# ----------------------------------------------------------------------------
def lenet5_reference(x_nchw, params):
    dn = jax.lax.conv_dimension_numbers(x_nchw.shape, params["conv1_w"].shape,
                                        ("NCHW", "OIHW", "NCHW"))
    y = jax.lax.conv_general_dilated(x_nchw, params["conv1_w"], (1, 1),
                                     ((2, 2), (2, 2)), dimension_numbers=dn)
    y = jnp.maximum(y + params["conv1_b"][None, :, None, None], 0.0)
    y = jax.lax.reduce_window(y, -jnp.inf, jax.lax.max,
                              (1, 1, 2, 2), (1, 1, 2, 2), "VALID")
    dn = jax.lax.conv_dimension_numbers(y.shape, params["conv2_w"].shape,
                                        ("NCHW", "OIHW", "NCHW"))
    y = jax.lax.conv_general_dilated(y, params["conv2_w"], (1, 1),
                                     "VALID", dimension_numbers=dn)
    y = jnp.maximum(y + params["conv2_b"][None, :, None, None], 0.0)
    y = jax.lax.reduce_window(y, -jnp.inf, jax.lax.max,
                              (1, 1, 2, 2), (1, 1, 2, 2), "VALID")
    y = y.reshape(y.shape[0], 16 * 5 * 5)
    y = jnp.maximum(y @ params["fc1_w"].T + params["fc1_b"], 0.0)
    y = jnp.maximum(y @ params["fc2_w"].T + params["fc2_b"], 0.0)
    return y @ params["fc3_w"].T + params["fc3_b"]


# ----------------------------------------------------------------------------
# main
# ----------------------------------------------------------------------------
if __name__ == "__main__":
    batch, image_C, num_classes = 2, 1, 10   # fc1's 16*5*5 forces 28x28 inputs

    key = jax.random.PRNGKey(0)
    ks = jax.random.split(key, 11)
    s = 0.1
    params = {
        "conv1_w": s * jax.random.normal(ks[0], (6, image_C, 5, 5), jnp.float32),
        "conv1_b": s * jax.random.normal(ks[1], (6,), jnp.float32),
        "conv2_w": s * jax.random.normal(ks[2], (16, 6, 5, 5), jnp.float32),
        "conv2_b": s * jax.random.normal(ks[3], (16,), jnp.float32),
        "fc1_w":   s * jax.random.normal(ks[4], (120, 16 * 5 * 5), jnp.float32),
        "fc1_b":   s * jax.random.normal(ks[5], (120,), jnp.float32),
        "fc2_w":   s * jax.random.normal(ks[6], (84, 120), jnp.float32),
        "fc2_b":   s * jax.random.normal(ks[7], (84,), jnp.float32),
        "fc3_w":   s * jax.random.normal(ks[8], (num_classes, 84), jnp.float32),
        "fc3_b":   s * jax.random.normal(ks[9], (num_classes,), jnp.float32),
    }
    x = jax.random.normal(ks[10], (batch, image_C, 28, 28), jnp.float32)

    prep = prepare_lenet5_params(params, image_C)     # one-time weight repacking
    fwd = jax.jit(lenet5_forward)
    out = jax.block_until_ready(fwd(x, prep))
    assert out.shape == (batch, num_classes)

    ref = jax.block_until_ready(lenet5_reference(x, params))
    np.testing.assert_allclose(np.asarray(out), np.asarray(ref),
                               rtol=5e-2, atol=5e-2)

    print("KERNEL_OK")
</pallas_src>

<mosaic_0001>
module attributes {stable_mosaic.version = 11 : i64} {
  func.func @_lenet5_kernel(%arg0: i32, %arg1: memref<1x32x32xf32, #tpu.memory_space<vmem>>, %arg2: memref<5x32x168xf32, #tpu.memory_space<vmem>>, %arg3: memref<1x168xf32, #tpu.memory_space<vmem>>, %arg4: memref<5x168x160xf32, #tpu.memory_space<vmem>>, %arg5: memref<1x160xf32, #tpu.memory_space<vmem>>, %arg6: memref<5x160x120xf32, #tpu.memory_space<vmem>>, %arg7: memref<1x120xf32, #tpu.memory_space<vmem>>, %arg8: memref<120x84xf32, #tpu.memory_space<vmem>>, %arg9: memref<1x84xf32, #tpu.memory_space<vmem>>, %arg10: memref<84x10xf32, #tpu.memory_space<vmem>>, %arg11: memref<1x10xf32, #tpu.memory_space<vmem>>, %arg12: memref<1x1x10xf32, #tpu.memory_space<vmem>>) attributes {dimension_semantics = [#tpu.dimension_semantics<parallel>], iteration_bounds = array<i64: 2>, scalar_prefetch = 0 : i64, scratch_operands = 0 : i64, tpu.core_type = #tpu.core_type<tc>, window_params = [{transform_indices = @transform_0, window_bounds = array<i64: 1, 32, 32>}, {pipeline_mode = #tpu.pipeline_mode<synchronous>, transform_indices = @transform_1, window_bounds = array<i64: 5, 32, 168>}, {pipeline_mode = #tpu.pipeline_mode<synchronous>, transform_indices = @transform_2, window_bounds = array<i64: 1, 168>}, {pipeline_mode = #tpu.pipeline_mode<synchronous>, transform_indices = @transform_3, window_bounds = array<i64: 5, 168, 160>}, {pipeline_mode = #tpu.pipeline_mode<synchronous>, transform_indices = @transform_4, window_bounds = array<i64: 1, 160>}, {pipeline_mode = #tpu.pipeline_mode<synchronous>, transform_indices = @transform_5, window_bounds = array<i64: 5, 160, 120>}, {pipeline_mode = #tpu.pipeline_mode<synchronous>, transform_indices = @transform_6, window_bounds = array<i64: 1, 120>}, {pipeline_mode = #tpu.pipeline_mode<synchronous>, transform_indices = @transform_7, window_bounds = array<i64: 120, 84>}, {pipeline_mode = #tpu.pipeline_mode<synchronous>, transform_indices = @transform_8, window_bounds = array<i64: 1, 84>}, {pipeline_mode = #tpu.pipeline_mode<synchronous>, transform_indices = @transform_9, window_bounds = array<i64: 84, 10>}, {pipeline_mode = #tpu.pipeline_mode<synchronous>, transform_indices = @transform_10, window_bounds = array<i64: 1, 10>}, {transform_indices = @transform_11, window_bounds = array<i64: 1, 1, 10>}]} {
    %c0 = arith.constant 0 : index
    %c0_0 = arith.constant 0 : index
    %c0_1 = arith.constant 0 : index
    %0 = vector.load %arg1[%c0, %c0_0, %c0_1] : memref<1x32x32xf32, #tpu.memory_space<vmem>>, vector<1x32x32xf32>
    %1 = vector.shape_cast %0 : vector<1x32x32xf32> to vector<32x32xf32>
    %2 = vector.extract_strided_slice %1 {offsets = [0, 0], sizes = [28, 32], strides = [1, 1]} : vector<32x32xf32> to vector<28x32xf32>
    %c0_2 = arith.constant 0 : index
    %c0_3 = arith.constant 0 : index
    %c0_4 = arith.constant 0 : index
    %3 = vector.load %arg2[%c0_2, %c0_3, %c0_4] : memref<5x32x168xf32, #tpu.memory_space<vmem>>, vector<1x32x168xf32>
    %4 = vector.shape_cast %3 : vector<1x32x168xf32> to vector<32x168xf32>
    %cst = arith.constant dense<0.000000e+00> : vector<28x168xf32>
    %5 = tpu.matmul %2, %4, %cst {dimension_numbers = #tpu.dot_dimension_numbers<[1], [0], [0], [1], [0, 0, 1, 1], [], []>} : vector<28x32xf32>, vector<32x168xf32>, vector<28x168xf32> -> vector<28x168xf32>
    %6 = vector.extract_strided_slice %1 {offsets = [1, 0], sizes = [28, 32], strides = [1, 1]} : vector<32x32xf32> to vector<28x32xf32>
    %c1 = arith.constant 1 : index
    %c0_5 = arith.constant 0 : index
    %c0_6 = arith.constant 0 : index
    %7 = vector.load %arg2[%c1, %c0_5, %c0_6] : memref<5x32x168xf32, #tpu.memory_space<vmem>>, vector<1x32x168xf32>
    %8 = vector.shape_cast %7 : vector<1x32x168xf32> to vector<32x168xf32>
    %cst_7 = arith.constant dense<0.000000e+00> : vector<28x168xf32>
    %9 = tpu.matmul %6, %8, %cst_7 {dimension_numbers = #tpu.dot_dimension_numbers<[1], [0], [0], [1], [0, 0, 1, 1], [], []>} : vector<28x32xf32>, vector<32x168xf32>, vector<28x168xf32> -> vector<28x168xf32>
    %10 = arith.addf %5, %9 : vector<28x168xf32>
    %11 = vector.extract_strided_slice %1 {offsets = [2, 0], sizes = [28, 32], strides = [1, 1]} : vector<32x32xf32> to vector<28x32xf32>
    %c2 = arith.constant 2 : index
    %c0_8 = arith.constant 0 : index
    %c0_9 = arith.constant 0 : index
    %12 = vector.load %arg2[%c2, %c0_8, %c0_9] : memref<5x32x168xf32, #tpu.memory_space<vmem>>, vector<1x32x168xf32>
    %13 = vector.shape_cast %12 : vector<1x32x168xf32> to vector<32x168xf32>
    %cst_10 = arith.constant dense<0.000000e+00> : vector<28x168xf32>
    %14 = tpu.matmul %11, %13, %cst_10 {dimension_numbers = #tpu.dot_dimension_numbers<[1], [0], [0], [1], [0, 0, 1, 1], [], []>} : vector<28x32xf32>, vector<32x168xf32>, vector<28x168xf32> -> vector<28x168xf32>
    %15 = arith.addf %10, %14 : vector<28x168xf32>
    %16 = vector.extract_strided_slice %1 {offsets = [3, 0], sizes = [28, 32], strides = [1, 1]} : vector<32x32xf32> to vector<28x32xf32>
    %c3 = arith.constant 3 : index
    %c0_11 = arith.constant 0 : index
    %c0_12 = arith.constant 0 : index
    %17 = vector.load %arg2[%c3, %c0_11, %c0_12] : memref<5x32x168xf32, #tpu.memory_space<vmem>>, vector<1x32x168xf32>
    %18 = vector.shape_cast %17 : vector<1x32x168xf32> to vector<32x168xf32>
    %cst_13 = arith.constant dense<0.000000e+00> : vector<28x168xf32>
    %19 = tpu.matmul %16, %18, %cst_13 {dimension_numbers = #tpu.dot_dimension_numbers<[1], [0], [0], [1], [0, 0, 1, 1], [], []>} : vector<28x32xf32>, vector<32x168xf32>, vector<28x168xf32> -> vector<28x168xf32>
    %20 = arith.addf %15, %19 : vector<28x168xf32>
    %21 = vector.extract_strided_slice %1 {offsets = [4, 0], sizes = [28, 32], strides = [1, 1]} : vector<32x32xf32> to vector<28x32xf32>
    %c4 = arith.constant 4 : index
    %c0_14 = arith.constant 0 : index
    %c0_15 = arith.constant 0 : index
    %22 = vector.load %arg2[%c4, %c0_14, %c0_15] : memref<5x32x168xf32, #tpu.memory_space<vmem>>, vector<1x32x168xf32>
    %23 = vector.shape_cast %22 : vector<1x32x168xf32> to vector<32x168xf32>
    %cst_16 = arith.constant dense<0.000000e+00> : vector<28x168xf32>
    %24 = tpu.matmul %21, %23, %cst_16 {dimension_numbers = #tpu.dot_dimension_numbers<[1], [0], [0], [1], [0, 0, 1, 1], [], []>} : vector<28x32xf32>, vector<32x168xf32>, vector<28x168xf32> -> vector<28x168xf32>
    %25 = arith.addf %20, %24 : vector<28x168xf32>
    %c0_17 = arith.constant 0 : index
    %c0_18 = arith.constant 0 : index
    %26 = vector.load %arg3[%c0_17, %c0_18] : memref<1x168xf32, #tpu.memory_space<vmem>>, vector<1x168xf32>
    %27 = vector.broadcast %26 : vector<1x168xf32> to vector<28x168xf32>
    %28 = arith.addf %25, %27 : vector<28x168xf32>
    %cst_19 = arith.constant 0.000000e+00 : f32
    %29 = vector.broadcast %cst_19 : f32 to vector<28x168xf32>
    %30 = arith.maximumf %28, %29 : vector<28x168xf32>
    %31 = tpu.iota {dimensions = array<i32: 0>} : vector<168x168xi32>
    %32 = tpu.iota {dimensions = array<i32: 1>} : vector<168x168xi32>
    %c1_i32 = arith.constant 1 : i32
    %33 = vector.broadcast %c1_i32 : i32 to vector<168x168xi32>
    %34 = arith.addi %32, %33 : vector<168x168xi32>
    %35 = arith.cmpi eq, %31, %34 : vector<168x168xi32>
    %36 = arith.extui %35 : vector<168x168xi1> to vector<168x168xi32>
    %37 = arith.sitofp %36 : vector<168x168xi32> to vector<168x168xf32>
    %cst_20 = arith.constant dense<0.000000e+00> : vector<28x168xf32>
    %38 = tpu.matmul %30, %37, %cst_20 {dimension_numbers = #tpu.dot_dimension_numbers<[1], [0], [0], [1], [0, 0, 1, 1], [], []>} : vector<28x168xf32>, vector<168x168xf32>, vector<28x168xf32> -> vector<28x168xf32>
    %39 = arith.maximumf %30, %38 : vector<28x168xf32>
    %40 = tpu.iota {dimensions = array<i32: 0>} : vector<14x28xi32>
    %41 = tpu.iota {dimensions = array<i32: 1>} : vector<14x28xi32>
    %c2_i32 = arith.constant 2 : i32
    %42 = vector.broadcast %c2_i32 : i32 to vector<14x28xi32>
    %43 = arith.muli %42, %40 : vector<14x28xi32>
    %44 = arith.cmpi eq, %41, %43 : vector<14x28xi32>
    %45 = arith.extui %44 : vector<14x28xi1> to vector<14x28xi32>
    %46 = arith.sitofp %45 : vector<14x28xi32> to vector<14x28xf32>
    %c2_i32_21 = arith.constant 2 : i32
    %47 = vector.broadcast %c2_i32_21 : i32 to vector<14x28xi32>
    %48 = arith.muli %47, %40 : vector<14x28xi32>
    %c1_i32_22 = arith.constant 1 : i32
    %49 = vector.broadcast %c1_i32_22 : i32 to vector<14x28xi32>
    %50 = arith.addi %48, %49 : vector<14x28xi32>
    %51 = arith.cmpi eq, %41, %50 : vector<14x28xi32>
    %52 = arith.extui %51 : vector<14x28xi1> to vector<14x28xi32>
    %53 = arith.sitofp %52 : vector<14x28xi32> to vector<14x28xf32>
    %cst_23 = arith.constant dense<0.000000e+00> : vector<14x168xf32>
    %54 = tpu.matmul %46, %39, %cst_23 {dimension_numbers = #tpu.dot_dimension_numbers<[1], [0], [0], [1], [0, 0, 1, 1], [], []>} : vector<14x28xf32>, vector<28x168xf32>, vector<14x168xf32> -> vector<14x168xf32>
    %cst_24 = arith.constant dense<0.000000e+00> : vector<14x168xf32>
    %55 = tpu.matmul %53, %39, %cst_24 {dimension_numbers = #tpu.dot_dimension_numbers<[1], [0], [0], [1], [0, 0, 1, 1], [], []>} : vector<14x28xf32>, vector<28x168xf32>, vector<14x168xf32> -> vector<14x168xf32>
    %56 = arith.maximumf %54, %55 : vector<14x168xf32>
    %57 = vector.extract_strided_slice %56 {offsets = [0, 0], sizes = [10, 168], strides = [1, 1]} : vector<14x168xf32> to vector<10x168xf32>
    %c0_25 = arith.constant 0 : index
    %c0_26 = arith.constant 0 : index
    %c0_27 = arith.constant 0 : index
    %58 = vector.load %arg4[%c0_25, %c0_26, %c0_27] : memref<5x168x160xf32, #tpu.memory_space<vmem>>, vector<1x168x160xf32>
    %59 = vector.shape_cast %58 : vector<1x168x160xf32> to vector<168x160xf32>
    %cst_28 = arith.constant dense<0.000000e+00> : vector<10x160xf32>
    %60 = tpu.matmul %57, %59, %cst_28 {dimension_numbers = #tpu.dot_dimension_numbers<[1], [0], [0], [1], [0, 0, 1, 1], [], []>} : vector<10x168xf32>, vector<168x160xf32>, vector<10x160xf32> -> vector<10x160xf32>
    %61 = vector.extract_strided_slice %56 {offsets = [1, 0], sizes = [10, 168], strides = [1, 1]} : vector<14x168xf32> to vector<10x168xf32>
    %c1_29 = arith.constant 1 : index
    %c0_30 = arith.constant 0 : index
    %c0_31 = arith.constant 0 : index
    %62 = vector.load %arg4[%c1_29, %c0_30, %c0_31] : memref<5x168x160xf32, #tpu.memory_space<vmem>>, vector<1x168x160xf32>
    %63 = vector.shape_cast %62 : vector<1x168x160xf32> to vector<168x160xf32>
    %cst_32 = arith.constant dense<0.000000e+00> : vector<10x160xf32>
    %64 = tpu.matmul %61, %63, %cst_32 {dimension_numbers = #tpu.dot_dimension_numbers<[1], [0], [0], [1], [0, 0, 1, 1], [], []>} : vector<10x168xf32>, vector<168x160xf32>, vector<10x160xf32> -> vector<10x160xf32>
    %65 = arith.addf %60, %64 : vector<10x160xf32>
    %66 = vector.extract_strided_slice %56 {offsets = [2, 0], sizes = [10, 168], strides = [1, 1]} : vector<14x168xf32> to vector<10x168xf32>
    %c2_33 = arith.constant 2 : index
    %c0_34 = arith.constant 0 : index
    %c0_35 = arith.constant 0 : index
    %67 = vector.load %arg4[%c2_33, %c0_34, %c0_35] : memref<5x168x160xf32, #tpu.memory_space<vmem>>, vector<1x168x160xf32>
    %68 = vector.shape_cast %67 : vector<1x168x160xf32> to vector<168x160xf32>
    %cst_36 = arith.constant dense<0.000000e+00> : vector<10x160xf32>
    %69 = tpu.matmul %66, %68, %cst_36 {dimension_numbers = #tpu.dot_dimension_numbers<[1], [0], [0], [1], [0, 0, 1, 1], [], []>} : vector<10x168xf32>, vector<168x160xf32>, vector<10x160xf32> -> vector<10x160xf32>
    %70 = arith.addf %65, %69 : vector<10x160xf32>
    %71 = vector.extract_strided_slice %56 {offsets = [3, 0], sizes = [10, 168], strides = [1, 1]} : vector<14x168xf32> to vector<10x168xf32>
    %c3_37 = arith.constant 3 : index
    %c0_38 = arith.constant 0 : index
    %c0_39 = arith.constant 0 : index
    %72 = vector.load %arg4[%c3_37, %c0_38, %c0_39] : memref<5x168x160xf32, #tpu.memory_space<vmem>>, vector<1x168x160xf32>
    %73 = vector.shape_cast %72 : vector<1x168x160xf32> to vector<168x160xf32>
    %cst_40 = arith.constant dense<0.000000e+00> : vector<10x160xf32>
    %74 = tpu.matmul %71, %73, %cst_40 {dimension_numbers = #tpu.dot_dimension_numbers<[1], [0], [0], [1], [0, 0, 1, 1], [], []>} : vector<10x168xf32>, vector<168x160xf32>, vector<10x160xf32> -> vector<10x160xf32>
    %75 = arith.addf %70, %74 : vector<10x160xf32>
    %76 = vector.extract_strided_slice %56 {offsets = [4, 0], sizes = [10, 168], strides = [1, 1]} : vector<14x168xf32> to vector<10x168xf32>
    %c4_41 = arith.constant 4 : index
    %c0_42 = arith.constant 0 : index
    %c0_43 = arith.constant 0 : index
    %77 = vector.load %arg4[%c4_41, %c0_42, %c0_43] : memref<5x168x160xf32, #tpu.memory_space<vmem>>, vector<1x168x160xf32>
    %78 = vector.shape_cast %77 : vector<1x168x160xf32> to vector<168x160xf32>
    %cst_44 = arith.constant dense<0.000000e+00> : vector<10x160xf32>
    %79 = tpu.matmul %76, %78, %cst_44 {dimension_numbers = #tpu.dot_dimension_numbers<[1], [0], [0], [1], [0, 0, 1, 1], [], []>} : vector<10x168xf32>, vector<168x160xf32>, vector<10x160xf32> -> vector<10x160xf32>
    %80 = arith.addf %75, %79 : vector<10x160xf32>
    %c0_45 = arith.constant 0 : index
    %c0_46 = arith.constant 0 : index
    %81 = vector.load %arg5[%c0_45, %c0_46] : memref<1x160xf32, #tpu.memory_space<vmem>>, vector<1x160xf32>
    %82 = vector.broadcast %81 : vector<1x160xf32> to vector<10x160xf32>
    %83 = arith.addf %80, %82 : vector<10x160xf32>
    %cst_47 = arith.constant 0.000000e+00 : f32
    %84 = vector.broadcast %cst_47 : f32 to vector<10x160xf32>
    %85 = arith.maximumf %83, %84 : vector<10x160xf32>
    %86 = tpu.iota {dimensions = array<i32: 0>} : vector<160x160xi32>
    %87 = tpu.iota {dimensions = array<i32: 1>} : vector<160x160xi32>
    %c1_i32_48 = arith.constant 1 : i32
    %88 = vector.broadcast %c1_i32_48 : i32 to vector<160x160xi32>
    %89 = arith.addi %87, %88 : vector<160x160xi32>
    %90 = arith.cmpi eq, %86, %89 : vector<160x160xi32>
    %91 = arith.extui %90 : vector<160x160xi1> to vector<160x160xi32>
    %92 = arith.sitofp %91 : vector<160x160xi32> to vector<160x160xf32>
    %cst_49 = arith.constant dense<0.000000e+00> : vector<10x160xf32>
    %93 = tpu.matmul %85, %92, %cst_49 {dimension_numbers = #tpu.dot_dimension_numbers<[1], [0], [0], [1], [0, 0, 1, 1], [], []>} : vector<10x160xf32>, vector<160x160xf32>, vector<10x160xf32> -> vector<10x160xf32>
    %94 = arith.maximumf %85, %93 : vector<10x160xf32>
    %95 = tpu.iota {dimensions = array<i32: 0>} : vector<5x10xi32>
    %96 = tpu.iota {dimensions = array<i32: 1>} : vector<5x10xi32>
    %c2_i32_50 = arith.constant 2 : i32
    %97 = vector.broadcast %c2_i32_50 : i32 to vector<5x10xi32>
    %98 = arith.muli %97, %95 : vector<5x10xi32>
    %99 = arith.cmpi eq, %96, %98 : vector<5x10xi32>
    %100 = arith.extui %99 : vector<5x10xi1> to vector<5x10xi32>
    %101 = arith.sitofp %100 : vector<5x10xi32> to vector<5x10xf32>
    %c2_i32_51 = arith.constant 2 : i32
    %102 = vector.broadcast %c2_i32_51 : i32 to vector<5x10xi32>
    %103 = arith.muli %102, %95 : vector<5x10xi32>
    %c1_i32_52 = arith.constant 1 : i32
    %104 = vector.broadcast %c1_i32_52 : i32 to vector<5x10xi32>
    %105 = arith.addi %103, %104 : vector<5x10xi32>
    %106 = arith.cmpi eq, %96, %105 : vector<5x10xi32>
    %107 = arith.extui %106 : vector<5x10xi1> to vector<5x10xi32>
    %108 = arith.sitofp %107 : vector<5x10xi32> to vector<5x10xf32>
    %cst_53 = arith.constant dense<0.000000e+00> : vector<5x160xf32>
    %109 = tpu.matmul %101, %94, %cst_53 {dimension_numbers = #tpu.dot_dimension_numbers<[1], [0], [0], [1], [0, 0, 1, 1], [], []>} : vector<5x10xf32>, vector<10x160xf32>, vector<5x160xf32> -> vector<5x160xf32>
    %cst_54 = arith.constant dense<0.000000e+00> : vector<5x160xf32>
    %110 = tpu.matmul %108, %94, %cst_54 {dimension_numbers = #tpu.dot_dimension_numbers<[1], [0], [0], [1], [0, 0, 1, 1], [], []>} : vector<5x10xf32>, vector<10x160xf32>, vector<5x160xf32> -> vector<5x160xf32>
    %111 = arith.maximumf %109, %110 : vector<5x160xf32>
    %112 = vector.extract_strided_slice %111 {offsets = [0, 0], sizes = [1, 160], strides = [1, 1]} : vector<5x160xf32> to vector<1x160xf32>
    %c0_55 = arith.constant 0 : index
    %c0_56 = arith.constant 0 : index
    %c0_57 = arith.constant 0 : index
    %113 = vector.load %arg6[%c0_55, %c0_56, %c0_57] : memref<5x160x120xf32, #tpu.memory_space<vmem>>, vector<1x160x120xf32>
    %114 = vector.shape_cast %113 : vector<1x160x120xf32> to vector<160x120xf32>
    %cst_58 = arith.constant dense<0.000000e+00> : vector<1x120xf32>
    %115 = tpu.matmul %112, %114, %cst_58 {dimension_numbers = #tpu.dot_dimension_numbers<[1], [0], [0], [1], [0, 0, 1, 1], [], []>} : vector<1x160xf32>, vector<160x120xf32>, vector<1x120xf32> -> vector<1x120xf32>
    %116 = vector.extract_strided_slice %111 {offsets = [1, 0], sizes = [1, 160], strides = [1, 1]} : vector<5x160xf32> to vector<1x160xf32>
    %c1_59 = arith.constant 1 : index
    %c0_60 = arith.constant 0 : index
    %c0_61 = arith.constant 0 : index
    %117 = vector.load %arg6[%c1_59, %c0_60, %c0_61] : memref<5x160x120xf32, #tpu.memory_space<vmem>>, vector<1x160x120xf32>
    %118 = vector.shape_cast %117 : vector<1x160x120xf32> to vector<160x120xf32>
    %cst_62 = arith.constant dense<0.000000e+00> : vector<1x120xf32>
    %119 = tpu.matmul %116, %118, %cst_62 {dimension_numbers = #tpu.dot_dimension_numbers<[1], [0], [0], [1], [0, 0, 1, 1], [], []>} : vector<1x160xf32>, vector<160x120xf32>, vector<1x120xf32> -> vector<1x120xf32>
    %120 = arith.addf %115, %119 : vector<1x120xf32>
    %121 = vector.extract_strided_slice %111 {offsets = [2, 0], sizes = [1, 160], strides = [1, 1]} : vector<5x160xf32> to vector<1x160xf32>
    %c2_63 = arith.constant 2 : index
    %c0_64 = arith.constant 0 : index
    %c0_65 = arith.constant 0 : index
    %122 = vector.load %arg6[%c2_63, %c0_64, %c0_65] : memref<5x160x120xf32, #tpu.memory_space<vmem>>, vector<1x160x120xf32>
    %123 = vector.shape_cast %122 : vector<1x160x120xf32> to vector<160x120xf32>
    %cst_66 = arith.constant dense<0.000000e+00> : vector<1x120xf32>
    %124 = tpu.matmul %121, %123, %cst_66 {dimension_numbers = #tpu.dot_dimension_numbers<[1], [0], [0], [1], [0, 0, 1, 1], [], []>} : vector<1x160xf32>, vector<160x120xf32>, vector<1x120xf32> -> vector<1x120xf32>
    %125 = arith.addf %120, %124 : vector<1x120xf32>
    %126 = vector.extract_strided_slice %111 {offsets = [3, 0], sizes = [1, 160], strides = [1, 1]} : vector<5x160xf32> to vector<1x160xf32>
    %c3_67 = arith.constant 3 : index
    %c0_68 = arith.constant 0 : index
    %c0_69 = arith.constant 0 : index
    %127 = vector.load %arg6[%c3_67, %c0_68, %c0_69] : memref<5x160x120xf32, #tpu.memory_space<vmem>>, vector<1x160x120xf32>
    %128 = vector.shape_cast %127 : vector<1x160x120xf32> to vector<160x120xf32>
    %cst_70 = arith.constant dense<0.000000e+00> : vector<1x120xf32>
    %129 = tpu.matmul %126, %128, %cst_70 {dimension_numbers = #tpu.dot_dimension_numbers<[1], [0], [0], [1], [0, 0, 1, 1], [], []>} : vector<1x160xf32>, vector<160x120xf32>, vector<1x120xf32> -> vector<1x120xf32>
    %130 = arith.addf %125, %129 : vector<1x120xf32>
    %131 = vector.extract_strided_slice %111 {offsets = [4, 0], sizes = [1, 160], strides = [1, 1]} : vector<5x160xf32> to vector<1x160xf32>
    %c4_71 = arith.constant 4 : index
    %c0_72 = arith.constant 0 : index
    %c0_73 = arith.constant 0 : index
    %132 = vector.load %arg6[%c4_71, %c0_72, %c0_73] : memref<5x160x120xf32, #tpu.memory_space<vmem>>, vector<1x160x120xf32>
    %133 = vector.shape_cast %132 : vector<1x160x120xf32> to vector<160x120xf32>
    %cst_74 = arith.constant dense<0.000000e+00> : vector<1x120xf32>
    %134 = tpu.matmul %131, %133, %cst_74 {dimension_numbers = #tpu.dot_dimension_numbers<[1], [0], [0], [1], [0, 0, 1, 1], [], []>} : vector<1x160xf32>, vector<160x120xf32>, vector<1x120xf32> -> vector<1x120xf32>
    %135 = arith.addf %130, %134 : vector<1x120xf32>
    %c0_75 = arith.constant 0 : index
    %c0_76 = arith.constant 0 : index
    %136 = vector.load %arg7[%c0_75, %c0_76] : memref<1x120xf32, #tpu.memory_space<vmem>>, vector<1x120xf32>
    %137 = arith.addf %135, %136 : vector<1x120xf32>
    %cst_77 = arith.constant 0.000000e+00 : f32
    %138 = vector.broadcast %cst_77 : f32 to vector<1x120xf32>
    %139 = arith.maximumf %137, %138 : vector<1x120xf32>
    %c0_78 = arith.constant 0 : index
    %c0_79 = arith.constant 0 : index
    %140 = vector.load %arg8[%c0_78, %c0_79] : memref<120x84xf32, #tpu.memory_space<vmem>>, vector<120x84xf32>
    %cst_80 = arith.constant dense<0.000000e+00> : vector<1x84xf32>
    %141 = tpu.matmul %139, %140, %cst_80 {dimension_numbers = #tpu.dot_dimension_numbers<[1], [0], [0], [1], [0, 0, 1, 1], [], []>} : vector<1x120xf32>, vector<120x84xf32>, vector<1x84xf32> -> vector<1x84xf32>
    %c0_81 = arith.constant 0 : index
    %c0_82 = arith.constant 0 : index
    %142 = vector.load %arg9[%c0_81, %c0_82] : memref<1x84xf32, #tpu.memory_space<vmem>>, vector<1x84xf32>
    %143 = arith.addf %141, %142 : vector<1x84xf32>
    %cst_83 = arith.constant 0.000000e+00 : f32
    %144 = vector.broadcast %cst_83 : f32 to vector<1x84xf32>
    %145 = arith.maximumf %143, %144 : vector<1x84xf32>
    %c0_84 = arith.constant 0 : index
    %c0_85 = arith.constant 0 : index
    %146 = vector.load %arg10[%c0_84, %c0_85] : memref<84x10xf32, #tpu.memory_space<vmem>>, vector<84x10xf32>
    %cst_86 = arith.constant dense<0.000000e+00> : vector<1x10xf32>
    %147 = tpu.matmul %145, %146, %cst_86 {dimension_numbers = #tpu.dot_dimension_numbers<[1], [0], [0], [1], [0, 0, 1, 1], [], []>} : vector<1x84xf32>, vector<84x10xf32>, vector<1x10xf32> -> vector<1x10xf32>
    %c0_87 = arith.constant 0 : index
    %c0_88 = arith.constant 0 : index
    %148 = vector.load %arg11[%c0_87, %c0_88] : memref<1x10xf32, #tpu.memory_space<vmem>>, vector<1x10xf32>
    %149 = arith.addf %147, %148 : vector<1x10xf32>
    %c0_89 = arith.constant 0 : index
    %c0_90 = arith.constant 0 : index
    %c0_91 = arith.constant 0 : index
    %150 = vector.load %arg12[%c0_89, %c0_90, %c0_91] : memref<1x1x10xf32, #tpu.memory_space<vmem>>, vector<1x1x10xf32>
    %151 = vector.shape_cast %150 : vector<1x1x10xf32> to vector<1x10xf32>
    %152 = vector.shape_cast %149 : vector<1x10xf32> to vector<1x1x10xf32>
    tpu.vector_store %arg12[%c0_89, %c0_90, %c0_91], %152 {strides = array<i32>} : memref<1x1x10xf32, #tpu.memory_space<vmem>>, vector<1x1x10xf32>,
    return
  }
  func.func @transform_0(%arg0: i32) -> (i32, i32, i32) {
    %c0_i32 = arith.constant 0 : i32
    %c0_i32_0 = arith.constant 0 : i32
    %c0_i32_1 = arith.constant 0 : i32
    return %arg0, %c0_i32, %c0_i32_0 : i32, i32, i32
  }
  func.func @transform_1(%arg0: i32) -> (i32, i32, i32) {
    %c0_i32 = arith.constant 0 : i32
    %c0_i32_0 = arith.constant 0 : i32
    %c0_i32_1 = arith.constant 0 : i32
    %c0_i32_2 = arith.constant 0 : i32
    return %c0_i32, %c0_i32_0, %c0_i32_1 : i32, i32, i32
  }
  func.func @transform_2(%arg0: i32) -> (i32, i32) {
    %c0_i32 = arith.constant 0 : i32
    %c0_i32_0 = arith.constant 0 : i32
    %c0_i32_1 = arith.constant 0 : i32
    return %c0_i32, %c0_i32_0 : i32, i32
  }
  func.func @transform_3(%arg0: i32) -> (i32, i32, i32) {
    %c0_i32 = arith.constant 0 : i32
    %c0_i32_0 = arith.constant 0 : i32
    %c0_i32_1 = arith.constant 0 : i32
    %c0_i32_2 = arith.constant 0 : i32
    return %c0_i32, %c0_i32_0, %c0_i32_1 : i32, i32, i32
  }
  func.func @transform_4(%arg0: i32) -> (i32, i32) {
    %c0_i32 = arith.constant 0 : i32
    %c0_i32_0 = arith.constant 0 : i32
    %c0_i32_1 = arith.constant 0 : i32
    return %c0_i32, %c0_i32_0 : i32, i32
  }
  func.func @transform_5(%arg0: i32) -> (i32, i32, i32) {
    %c0_i32 = arith.constant 0 : i32
    %c0_i32_0 = arith.constant 0 : i32
    %c0_i32_1 = arith.constant 0 : i32
    %c0_i32_2 = arith.constant 0 : i32
    return %c0_i32, %c0_i32_0, %c0_i32_1 : i32, i32, i32
  }
  func.func @transform_6(%arg0: i32) -> (i32, i32) {
    %c0_i32 = arith.constant 0 : i32
    %c0_i32_0 = arith.constant 0 : i32
    %c0_i32_1 = arith.constant 0 : i32
    return %c0_i32, %c0_i32_0 : i32, i32
  }
  func.func @transform_7(%arg0: i32) -> (i32, i32) {
    %c0_i32 = arith.constant 0 : i32
    %c0_i32_0 = arith.constant 0 : i32
    %c0_i32_1 = arith.constant 0 : i32
    return %c0_i32, %c0_i32_0 : i32, i32
  }
  func.func @transform_8(%arg0: i32) -> (i32, i32) {
    %c0_i32 = arith.constant 0 : i32
    %c0_i32_0 = arith.constant 0 : i32
    %c0_i32_1 = arith.constant 0 : i32
    return %c0_i32, %c0_i32_0 : i32, i32
  }
  func.func @transform_9(%arg0: i32) -> (i32, i32) {
    %c0_i32 = arith.constant 0 : i32
    %c0_i32_0 = arith.constant 0 : i32
    %c0_i32_1 = arith.constant 0 : i32
    return %c0_i32, %c0_i32_0 : i32, i32
  }
  func.func @transform_10(%arg0: i32) -> (i32, i32) {
    %c0_i32 = arith.constant 0 : i32
    %c0_i32_0 = arith.constant 0 : i32
    %c0_i32_1 = arith.constant 0 : i32
    return %c0_i32, %c0_i32_0 : i32, i32
  }
  func.func @transform_11(%arg0: i32) -> (i32, i32, i32) {
    %c0_i32 = arith.constant 0 : i32
    %c0_i32_0 = arith.constant 0 : i32
    %c0_i32_1 = arith.constant 0 : i32
    return %arg0, %c0_i32, %c0_i32_0 : i32, i32, i32
  }
}

</mosaic_0001>

<llo_original>
// kernel: lenet5_forward.1
$region0: #{lenet5_forward.1}
  #allocation0 [shape = 'u32[]', space=smem, size = 0x4, offset = 0x4, fixed_abs, tag = 'smem constant byte address 0x4 - core index']
  #allocation1 [shape = 'u32[144,128]{1,0:T(1,128)}', space=vmem, size = 0x12000, scoped, tag = 'internal scratch']
  %s0 = inlined_call_operand.vmem [shape: f32[2,32,32], index: 0, kind: input, shape index: {}]
  %s1 = inlined_call_operand.vmem [shape: f32[5,32,168], index: 1, kind: input, shape index: {}]
  %s2 = inlined_call_operand.vmem [shape: f32[1,168], index: 2, kind: input, shape index: {}]
  %s3 = inlined_call_operand.vmem [shape: f32[5,168,160], index: 3, kind: input, shape index: {}]
  %s4 = inlined_call_operand.vmem [shape: f32[1,160], index: 4, kind: input, shape index: {}]
  %s5 = inlined_call_operand.vmem [shape: f32[5,160,120], index: 5, kind: input, shape index: {}]
  %s6 = inlined_call_operand.vmem [shape: f32[1,120], index: 6, kind: input, shape index: {}]
  %s7 = inlined_call_operand.vmem [shape: f32[120,84], index: 7, kind: input, shape index: {}]
  %s8 = inlined_call_operand.vmem [shape: f32[1,84], index: 8, kind: input, shape index: {}]
  %s9 = inlined_call_operand.vmem [shape: f32[84,10], index: 9, kind: input, shape index: {}]
  %s10 = inlined_call_operand.vmem [shape: f32[1,10], index: 10, kind: input, shape index: {}]
  %s11 = inlined_call_operand.hbm [shape: f32[2,1,10], index: 11, kind: output, shape index: {}]
  %s12 = sld [smem:[#allocation0]]
  $region77: #{lenet5_forward.1} parent=0
    _
  %s14 = ssub.s32 1, %s12
  %s15 = scalar_select 0, %s14, %s12
  $region1: #{lenet5_forward.1} parent=0
    #allocation2 [shape = 'u8[1024]{0}', space=vmem, size = 0x400, scoped, tag = 'output window, operand 0']
    #allocation3 [shape = 's32[2]{0}', space=sflag, size = 0x8, scoped, tag = 'scoped memory for lenet5_forward.1']
    %16 = vsyncpa [#allocation3], 0
    %s17 = scalar_lea.sflag [#allocation3], 1
    %18 = vsyncpa %s17, 0
    loop: start=0, step=1, limit=4
    $region2: #{lenet5_forward.1} parent=1 // loop_pre_header
      _
    $region3: #{lenet5_forward.1} parent=1 // loop_header
      %s20 = sphi 0, %s24
      %p21 = scmp.ge.s32.totalorder %s20, 4
      %s30 = sphi 0, %s32
      %s33 = sphi 0, %s30
      %s34 = sphi 0, %s33
      %s50 = sphi 0, %s34
      %s54 = sphi 0, %s54
      %s56 = sphi 0, %s54
      %s57 = sphi 0, %s56
      %s71 = sphi 0, %s57
      %s75 = sphi 0, %s75
      %s77 = sphi 0, %s75
      %s78 = sphi 0, %s77
      %s92 = sphi 0, %s78
      %s96 = sphi 0, %s96
      %s98 = sphi 0, %s96
      %s99 = sphi 0, %s98
      %s113 = sphi 0, %s99
      %s117 = sphi 0, %s117
      %s119 = sphi 0, %s117
      %s120 = sphi 0, %s119
      %s134 = sphi 0, %s120
      %s138 = sphi 0, %s138
      %s140 = sphi 0, %s138
      %s141 = sphi 0, %s140
      %s155 = sphi 0, %s141
      %s159 = sphi 0, %s159
      %s161 = sphi 0, %s159
      %s162 = sphi 0, %s161
      %s176 = sphi 0, %s162
      %s180 = sphi 0, %s180
      %s182 = sphi 0, %s180
      %s183 = sphi 0, %s182
      %s197 = sphi 0, %s183
      %s201 = sphi 0, %s201
      %s203 = sphi 0, %s201
      %s204 = sphi 0, %s203
      %s218 = sphi 0, %s204
      %s222 = sphi 0, %s222
      %s224 = sphi 0, %s222
      %s225 = sphi 0, %s224
      %s239 = sphi 0, %s225
      %s243 = sphi 0, %s243
      %s245 = sphi 0, %s243
      %s246 = sphi 0, %s245
      %s260 = sphi 0, %s246
      %s266 = sphi 0, %s268
      %s269 = sphi 0, %s266
      %s270 = sphi 0, %s269
      %s286 = sphi 0, %s270
    $region4: #{lenet5_forward.1} parent=1 // loop_header_branch
      %23 = sbr.rel (%p21) target = $region8
    $region5: #{lenet5_forward.1} parent=1 // loop_body
      %s25 = ssub.s32 %s20, 1
      %s26 = ssub.s32 %s20, 2
      %s27 = sadd.s32 %s20, 1
      %s28 = ssub.s32 %s20, %s27
      %p29 = scmp.eq.s32.totalorder %s28, 0
      %s31 = sadd.s32 %s30, 1
      %s32 = scalar_select %p29, %s30, %s31
      %p35 = pneg %p29
      %p36 = scmp.eq.s32.totalorder %s20, 1
      %p37 = por %p35, %p36
      %p38 = scmp.ne.s32.totalorder %s30, %s33
      %p39 = scmp.eq.s32.totalorder %s20, 0
      %p40 = por %p38, %p39
      %p41 = scmp.ne.s32.totalorder %s30, %s33
      %p42 = scmp.eq.s32.totalorder %s25, 1
      %p43 = por %p41, %p42
      %p44 = scmp.ne.s32.totalorder %s33, %s34
      %p45 = scmp.eq.s32.totalorder %s25, 0
      %p46 = por %p44, %p45
      %p47 = scmp.ne.s32.totalorder %s33, %s34
      %p48 = scmp.eq.s32.totalorder %s26, 1
      %p49 = por %p47, %p48
      %p51 = scmp.ne.s32.totalorder %s34, %s50
      %p52 = scmp.eq.s32.totalorder %s26, 0
      %p53 = por %p51, %p52
      %s55 = sadd.s32 %s54, 1
      %p58 = scmp.eq.s32.totalorder %s20, 1
      %p59 = scmp.ne.s32.totalorder %s54, %s56
      %p60 = scmp.eq.s32.totalorder %s20, 0
      %p61 = por %p59, %p60
      %p62 = scmp.ne.s32.totalorder %s54, %s56
      %p63 = scmp.eq.s32.totalorder %s25, 1
      %p64 = por %p62, %p63
      %p65 = scmp.ne.s32.totalorder %s56, %s57
      %p66 = scmp.eq.s32.totalorder %s25, 0
      %p67 = por %p65, %p66
      %p68 = scmp.ne.s32.totalorder %s56, %s57
      %p69 = scmp.eq.s32.totalorder %s26, 1
      %p70 = por %p68, %p69
      %p72 = scmp.ne.s32.totalorder %s57, %s71
      %p73 = scmp.eq.s32.totalorder %s26, 0
      %p74 = por %p72, %p73
      %s76 = sadd.s32 %s75, 1
      %p79 = scmp.eq.s32.totalorder %s20, 1
      %p80 = scmp.ne.s32.totalorder %s75, %s77
      %p81 = scmp.eq.s32.totalorder %s20, 0
      %p82 = por %p80, %p81
      %p83 = scmp.ne.s32.totalorder %s75, %s77
      %p84 = scmp.eq.s32.totalorder %s25, 1
      %p85 = por %p83, %p84
      %p86 = scmp.ne.s32.totalorder %s77, %s78
      %p87 = scmp.eq.s32.totalorder %s25, 0
      %p88 = por %p86, %p87
      %p89 = scmp.ne.s32.totalorder %s77, %s78
      %p90 = scmp.eq.s32.totalorder %s26, 1
      %p91 = por %p89, %p90
      %p93 = scmp.ne.s32.totalorder %s78, %s92
      %p94 = scmp.eq.s32.totalorder %s26, 0
      %p95 = por %p93, %p94
      %s97 = sadd.s32 %s96, 1
      %p100 = scmp.eq.s32.totalorder %s20, 1
      %p101 = scmp.ne.s32.totalorder %s96, %s98
      %p102 = scmp.eq.s32.totalorder %s20, 0
      %p103 = por %p101, %p102
      %p104 = scmp.ne.s32.totalorder %s96, %s98
      %p105 = scmp.eq.s32.totalorder %s25, 1
      %p106 = por %p104, %p105
      %p107 = scmp.ne.s32.totalorder %s98, %s99
      %p108 = scmp.eq.s32.totalorder %s25, 0
      %p109 = por %p107, %p108
      %p110 = scmp.ne.s32.totalorder %s98, %s99
      %p111 = scmp.eq.s32.totalorder %s26, 1
      %p112 = por %p110, %p111
      %p114 = scmp.ne.s32.totalorder %s99, %s113
      %p115 = scmp.eq.s32.totalorder %s26, 0
      %p116 = por %p114, %p115
      %s118 = sadd.s32 %s117, 1
      %p121 = scmp.eq.s32.totalorder %s20, 1
      %p122 = scmp.ne.s32.totalorder %s117, %s119
      %p123 = scmp.eq.s32.totalorder %s20, 0
      %p124 = por %p122, %p123
      %p125 = scmp.ne.s32.totalorder %s117, %s119
      %p126 = scmp.eq.s32.totalorder %s25, 1
      %p127 = por %p125, %p126
      %p128 = scmp.ne.s32.totalorder %s119, %s120
      %p129 = scmp.eq.s32.totalorder %s25, 0
      %p130 = por %p128, %p129
      %p131 = scmp.ne.s32.totalorder %s119, %s120
      %p132 = scmp.eq.s32.totalorder %s26, 1
      %p133 = por %p131, %p132
      %p135 = scmp.ne.s32.totalorder %s120, %s134
      %p136 = scmp.eq.s32.totalorder %s26, 0
      %p137 = por %p135, %p136
      %s139 = sadd.s32 %s138, 1
      %p142 = scmp.eq.s32.totalorder %s20, 1
      %p143 = scmp.ne.s32.totalorder %s138, %s140
      %p144 = scmp.eq.s32.totalorder %s20, 0
      %p145 = por %p143, %p144
      %p146 = scmp.ne.s32.totalorder %s138, %s140
      %p147 = scmp.eq.s32.totalorder %s25, 1
      %p148 = por %p146, %p147
      %p149 = scmp.ne.s32.totalorder %s140, %s141
      %p150 = scmp.eq.s32.totalorder %s25, 0
      %p151 = por %p149, %p150
      %p152 = scmp.ne.s32.totalorder %s140, %s141
      %p153 = scmp.eq.s32.totalorder %s26, 1
      %p154 = por %p152, %p153
      %p156 = scmp.ne.s32.totalorder %s141, %s155
      %p157 = scmp.eq.s32.totalorder %s26, 0
      %p158 = por %p156, %p157
      %s160 = sadd.s32 %s159, 1
      %p163 = scmp.eq.s32.totalorder %s20, 1
      %p164 = scmp.ne.s32.totalorder %s159, %s161
      %p165 = scmp.eq.s32.totalorder %s20, 0
      %p166 = por %p164, %p165
      %p167 = scmp.ne.s32.totalorder %s159, %s161
      %p168 = scmp.eq.s32.totalorder %s25, 1
      %p169 = por %p167, %p168
      %p170 = scmp.ne.s32.totalorder %s161, %s162
      %p171 = scmp.eq.s32.totalorder %s25, 0
      %p172 = por %p170, %p171
      %p173 = scmp.ne.s32.totalorder %s161, %s162
      %p174 = scmp.eq.s32.totalorder %s26, 1
      %p175 = por %p173, %p174
      %p177 = scmp.ne.s32.totalorder %s162, %s176
      %p178 = scmp.eq.s32.totalorder %s26, 0
      %p179 = por %p177, %p178
      %s181 = sadd.s32 %s180, 1
      %p184 = scmp.eq.s32.totalorder %s20, 1
      %p185 = scmp.ne.s32.totalorder %s180, %s182
      %p186 = scmp.eq.s32.totalorder %s20, 0
      %p187 = por %p185, %p186
      %p188 = scmp.ne.s32.totalorder %s180, %s182
      %p189 = scmp.eq.s32.totalorder %s25, 1
      %p190 = por %p188, %p189
      %p191 = scmp.ne.s32.totalorder %s182, %s183
      %p192 = scmp.eq.s32.totalorder %s25, 0
      %p193 = por %p191, %p192
      %p194 = scmp.ne.s32.totalorder %s182, %s183
      %p195 = scmp.eq.s32.totalorder %s26, 1
      %p196 = por %p194, %p195
      %p198 = scmp.ne.s32.totalorder %s183, %s197
      %p199 = scmp.eq.s32.totalorder %s26, 0
      %p200 = por %p198, %p199
      %s202 = sadd.s32 %s201, 1
      %p205 = scmp.eq.s32.totalorder %s20, 1
      %p206 = scmp.ne.s32.totalorder %s201, %s203
      %p207 = scmp.eq.s32.totalorder %s20, 0
      %p208 = por %p206, %p207
      %p209 = scmp.ne.s32.totalorder %s201, %s203
      %p210 = scmp.eq.s32.totalorder %s25, 1
      %p211 = por %p209, %p210
      %p212 = scmp.ne.s32.totalorder %s203, %s204
      %p213 = scmp.eq.s32.totalorder %s25, 0
      %p214 = por %p212, %p213
      %p215 = scmp.ne.s32.totalorder %s203, %s204
      %p216 = scmp.eq.s32.totalorder %s26, 1
      %p217 = por %p215, %p216
      %p219 = scmp.ne.s32.totalorder %s204, %s218
      %p220 = scmp.eq.s32.totalorder %s26, 0
      %p221 = por %p219, %p220
      %s223 = sadd.s32 %s222, 1
      %p226 = scmp.eq.s32.totalorder %s20, 1
      %p227 = scmp.ne.s32.totalorder %s222, %s224
      %p228 = scmp.eq.s32.totalorder %s20, 0
      %p229 = por %p227, %p228
      %p230 = scmp.ne.s32.totalorder %s222, %s224
      %p231 = scmp.eq.s32.totalorder %s25, 1
      %p232 = por %p230, %p231
      %p233 = scmp.ne.s32.totalorder %s224, %s225
      %p234 = scmp.eq.s32.totalorder %s25, 0
      %p235 = por %p233, %p234
      %p236 = scmp.ne.s32.totalorder %s224, %s225
      %p237 = scmp.eq.s32.totalorder %s26, 1
      %p238 = por %p236, %p237
      %p240 = scmp.ne.s32.totalorder %s225, %s239
      %p241 = scmp.eq.s32.totalorder %s26, 0
      %p242 = por %p240, %p241
      %s244 = sadd.s32 %s243, 1
      %p247 = scmp.eq.s32.totalorder %s20, 1
      %p248 = scmp.ne.s32.totalorder %s243, %s245
      %p249 = scmp.eq.s32.totalorder %s20, 0
      %p250 = por %p248, %p249
      %p251 = scmp.ne.s32.totalorder %s243, %s245
      %p252 = scmp.eq.s32.totalorder %s25, 1
      %p253 = por %p251, %p252
      %p254 = scmp.ne.s32.totalorder %s245, %s246
      %p255 = scmp.eq.s32.totalorder %s25, 0
      %p256 = por %p254, %p255
      %p257 = scmp.ne.s32.totalorder %s245, %s246
      %p258 = scmp.eq.s32.totalorder %s26, 1
      %p259 = por %p257, %p258
      %p261 = scmp.ne.s32.totalorder %s246, %s260
      %p262 = scmp.eq.s32.totalorder %s26, 0
      %p263 = por %p261, %p262
      %s264 = ssub.s32 %s20, %s27
      %p265 = scmp.eq.s32.totalorder %s264, 0
      %s267 = sadd.s32 %s266, 1
      %s268 = scalar_select %p265, %s266, %s267
      %p271 = pneg %p265
      %p272 = scmp.eq.s32.totalorder %s20, 1
      %p273 = por %p271, %p272
      %p274 = scmp.ne.s32.totalorder %s266, %s269
      %p275 = scmp.eq.s32.totalorder %s20, 0
      %p276 = por %p274, %p275
      %p277 = scmp.ne.s32.totalorder %s266, %s269
      %p278 = scmp.eq.s32.totalorder %s25, 1
      %p279 = por %p277, %p278
      %p280 = scmp.ne.s32.totalorder %s269, %s270
      %p281 = scmp.eq.s32.totalorder %s25, 0
      %p282 = por %p280, %p281
      %p283 = scmp.ne.s32.totalorder %s269, %s270
      %p284 = scmp.eq.s32.totalorder %s26, 1
      %p285 = por %p283, %p284
      %p287 = scmp.ne.s32.totalorder %s270, %s286
      %p288 = scmp.eq.s32.totalorder %s26, 0
      %p289 = por %p287, %p288
      %p290 = scmp.le.s32.totalorder 1, %s20
      %p291 = scmp.lt.s32.totalorder %s20, 3
      %p292 = pnand %p290, %p291
      %p293 = pneg %p292
      // Predicated region
      $region9: #{lenet5_forward.1} parent=5 // pred_check
        _
      $region10: #{lenet5_forward.1} parent=5 // pred_check_branch
        %295 = sbr.rel (%p292) target = $region12
      $region11: #{lenet5_forward.1} parent=5 // pred_region
        %s296 = ssub.s32 %s20, 1
        // Predicated region
        $region13: #{lenet5_forward.1} parent=11 // pred_check
          %p297 = pneg %p67
        $region14: #{lenet5_forward.1} parent=11 // pred_check_branch
          %299 = sbr.rel (%p297) target = $region16
        $region15: #{lenet5_forward.1} parent=11 // pred_region
          _
        $region16: #{lenet5_forward.1} parent=11 // pred_fallthru
          _
        // Predicated region
        $region17: #{lenet5_forward.1} parent=11 // pred_check
          %p300 = pneg %p88
        $region18: #{lenet5_forward.1} parent=11 // pred_check_branch
          %302 = sbr.rel (%p300) target = $region20
        $region19: #{lenet5_forward.1} parent=11 // pred_region
          _
        $region20: #{lenet5_forward.1} parent=11 // pred_fallthru
          _
        // Predicated region
        $region21: #{lenet5_forward.1} parent=11 // pred_check
          %p303 = pneg %p109
        $region22: #{lenet5_forward.1} parent=11 // pred_check_branch
          %305 = sbr.rel (%p303) target = $region24
        $region23: #{lenet5_forward.1} parent=11 // pred_region
          _
        $region24: #{lenet5_forward.1} parent=11 // pred_fallthru
          _
        // Predicated region
        $region25: #{lenet5_forward.1} parent=11 // pred_check
          %p306 = pneg %p130
        $region26: #{lenet5_forward.1} parent=11 // pred_check_branch
          %308 = sbr.rel (%p306) target = $region28
        $region27: #{lenet5_forward.1} parent=11 // pred_region
          _
        $region28: #{lenet5_forward.1} parent=11 // pred_fallthru
          _
        // Predicated region
        $region29: #{lenet5_forward.1} parent=11 // pred_check
          %p309 = pneg %p151
        $region30: #{lenet5_forward.1} parent=11 // pred_check_branch
          %311 = sbr.rel (%p309) target = $region32
        $region31: #{lenet5_forward.1} parent=11 // pred_region
          _
        $region32: #{lenet5_forward.1} parent=11 // pred_fallthru
          _
        // Predicated region
        $region33: #{lenet5_forward.1} parent=11 // pred_check
          %p312 = pneg %p172
        $region34: #{lenet5_forward.1} parent=11 // pred_check_branch
          %314 = sbr.rel (%p312) target = $region36
        $region35: #{lenet5_forward.1} parent=11 // pred_region
          _
        $region36: #{lenet5_forward.1} parent=11 // pred_fallthru
          _
        // Predicated region
        $region37: #{lenet5_forward.1} parent=11 // pred_check
          %p315 = pneg %p193
        $region38: #{lenet5_forward.1} parent=11 // pred_check_branch
          %317 = sbr.rel (%p315) target = $region40
        $region39: #{lenet5_forward.1} parent=11 // pred_region
          _
        $region40: #{lenet5_forward.1} parent=11 // pred_fallthru
          _
        // Predicated region
        $region41: #{lenet5_forward.1} parent=11 // pred_check
          %p318 = pneg %p214
        $region42: #{lenet5_forward.1} parent=11 // pred_check_branch
          %320 = sbr.rel (%p318) target = $region44
        $region43: #{lenet5_forward.1} parent=11 // pred_region
          _
        $region44: #{lenet5_forward.1} parent=11 // pred_fallthru
          _
        // Predicated region
        $region45: #{lenet5_forward.1} parent=11 // pred_check
          %p321 = pneg %p235
        $region46: #{lenet5_forward.1} parent=11 // pred_check_branch
          %323 = sbr.rel (%p321) target = $region48
        $region47: #{lenet5_forward.1} parent=11 // pred_region
          _
        $region48: #{lenet5_forward.1} parent=11 // pred_fallthru
          _
        // Predicated region
        $region49: #{lenet5_forward.1} parent=11 // pred_check
          %p324 = pneg %p256
        $region50: #{lenet5_forward.1} parent=11 // pred_check_branch
          %326 = sbr.rel (%p324) target = $region52
        $region51: #{lenet5_forward.1} parent=11 // pred_region
          _
        $region52: #{lenet5_forward.1} parent=11 // pred_fallthru
          _
      $region12: #{lenet5_forward.1} parent=5 // pred_fallthru
        _
      %p327 = scmp.lt.s32.totalorder %s20, 2
      // Predicated region
      $region53: #{lenet5_forward.1} parent=5 // pred_check
        %p328 = pneg %p327
      $region54: #{lenet5_forward.1} parent=5 // pred_check_branch
        %330 = sbr.rel (%p328) target = $region56
      $region55: #{lenet5_forward.1} parent=5 // pred_region
        // Predicated region
        $region57: #{lenet5_forward.1} parent=55 // pred_check
          %p331 = pneg %p40
        $region58: #{lenet5_forward.1} parent=55 // pred_check_branch
          %333 = sbr.rel (%p331) target = $region60
        $region59: #{lenet5_forward.1} parent=55 // pred_region
          %p334 = scmp.lt.s32.totalorder %s20, 1
          %s335 = scalar_select %p334, %s20, 1
          %s336 = smul.addr %s335, 4
          %s337 = smul.addr %s336, 8
          %s338 = scalar_lea.vmem %s0, %s337
        $region60: #{lenet5_forward.1} parent=55 // pred_fallthru
          _
      $region56: #{lenet5_forward.1} parent=5 // pred_fallthru
        _
      %p339 = scmp.le.s32.totalorder 1, %s20
      %p340 = scmp.lt.s32.totalorder %s20, 3
      %p341 = pnand %p339, %p340
      %p342 = pneg %p341
      // Predicated region
      $region61: #{lenet5_forward.1} parent=5 // pred_check
        _
      $region62: #{lenet5_forward.1} parent=5 // pred_check_branch
        %344 = sbr.rel (%p341) target = $region64
      $region63: #{lenet5_forward.1} parent=5 // pred_region
        %s345 = ssub.s32 %s20, 1
        %p346 = scmp.lt.s32.totalorder %s25, 1
        %s347 = scalar_select %p346, %s25, 1
        %s348 = smul.addr %s347, 4
        %s349 = smul.addr %s348, 8
        %s350 = scalar_lea.vmem %s0, %s349
        %p351 = pneg %p46
        %p352 = pneg %p43
        %p353 = pneg %p67
        %p354 = pneg %p64
        %p355 = pneg %p88
        %p356 = pneg %p85
        %p357 = pneg %p109
        %p358 = pneg %p106
        %p359 = pneg %p130
        %p360 = pneg %p127
        %p361 = pneg %p151
        %p362 = pneg %p148
        %p363 = pneg %p172
        %p364 = pneg %p169
        %p365 = pneg %p193
        %p366 = pneg %p190
        %p367 = pneg %p214
        %p368 = pneg %p211
        %p369 = pneg %p235
        %p370 = pneg %p232
        %p371 = pneg %p256
        %p372 = pneg %p253
        %p373 = pneg %p282
        %p374 = pneg %p279
        %s375 = sand.u32 %s269, 1
        %s376 = scalar_lea.sflag [#allocation3], %s375
        %s377 = sand.u32 %s269, 1
        %s378 = scalar_lea.vmem [#allocation2], %s377
        %p379 = scmp.lt.s32.totalorder %s25, 1
        %s380 = scalar_select %p379, %s25, 1
        %s381 = smul.addr %s380, 4
        %s382 = smul.addr %s381, 8
        %s383 = scalar_lea.vmem %s0, %s382
        %v384 = vld [vmem:[%s383] sm:$0xff]
        %v385 = vld [vmem:[%s383 + $0x8] sm:$0xff]
        %v386 = vld [vmem:[%s383 + $0x10] sm:$0xff]
        %v387 = vld [vmem:[%s383 + $0x18] sm:$0xff]
        %v388 = vld [vmem:[%s1] sm:$0xff]
        %v389 = vld [vmem:[%s1 + $0x8] sm:$0xff]
        %v390 = vld [vmem:[%s1 + $0x10] sm:$0xff]
        %v391 = vld [vmem:[%s1 + $0x18] sm:$0xff]
        %v392 = vld [vmem:[%s1 + $0x20] sm:$0xff]
        %v393 = vld [vmem:[%s1 + $0x28] sm:$0xff]
        %v394 = vld [vmem:[%s1 + $0x30] sm:$0xff]
        %v395 = vld [vmem:[%s1 + $0x38] sm:$0xff]
        %s396 = scalar_lea.vmem %s1, 64
        %v397 = vld [vmem:[%s396] sm:$0xff]
        %v398 = vld [vmem:[%s396 + $0x8] sm:$0xff]
        %v399 = vld [vmem:[%s396 + $0x10] sm:$0xff]
        %v400 = vld [vmem:[%s396 + $0x18] sm:$0xff]
        %v401 = vld [vmem:[%s396 + $0x20] sm:$0xff]
        %v402 = vld [vmem:[%s396 + $0x28] sm:$0xff]
        %v403 = vld [vmem:[%s396 + $0x30] sm:$0xff]
        %v404 = vld [vmem:[%s396 + $0x38] sm:$0xff]
        %vm409 = vcmask 1046528
        %v410 = vrot.slane %v384, 1
        %v411 = vrot.slane %v385, 1
        %v412 = vsel %vm409, %v410, %v411
        %v413 = vrot.slane %v386, 1
        %v414 = vsel %vm409, %v411, %v413
        %v415 = vrot.slane %v387, 1
        %v416 = vsel %vm409, %v413, %v415
        %vm417 = vcmask 261120
        %v418 = vsel %vm417, %v412, 0
        %v420 = vsel %vm417, %v414, 0
        %v422 = vsel %vm417, %v416, 0
        %v424 = vsel %vm417, %v415, 0
        %426 = vmatprep.subr.mxu0 %v398
        %427 = vmatpush1.msra.mxu0 %v397
        %428 = vmatprep.subr.mxu0 %v400
        %429 = vmatpush1.msra.mxu0 %v399
        %430 = vmatprep.subr.mxu0 %v402
        %431 = vmatpush1.msra.mxu0 %v401
        %432 = vmatprep.subr.mxu0 %v404
        %433 = vmatpush1.msra.mxu0 %v403
        %434 = vmatprep.subr.mxu0 0.0
        %435 = vmatpush1.msra.mxu0 0.0
        %436 = vmatprep.subr.mxu0 0.0
        %437 = vmatpush1.msra.mxu0 0.0
        %438 = vmatprep.subr.mxu0 0.0
        %439 = vmatpush1.msra.mxu0 0.0
        %440 = vmatprep.subr.mxu0 0.0
        %441 = vmatpush1.msra.mxu0 0.0
        %442 = vmatprep.subr.mxu0 0.0
        %443 = vmatpush1.msra.mxu0 0.0
        %444 = vmatprep.subr.mxu0 0.0
        %445 = vmatpush1.msra.mxu0 0.0
        %446 = vmatprep.subr.mxu0 0.0
        %447 = vmatpush1.msra.mxu0 0.0
        %448 = vmatprep.subr.mxu0 0.0
        %449 = vmatpush1.msra.mxu0 0.0
        %450 = vmatprep.subr.mxu0 0.0
        %451 = vmatpush1.msra.mxu0 0.0
        %452 = vmatprep.subr.mxu0 0.0
        %453 = vmatpush1.msra.mxu0 0.0
        %454 = vmatprep.subr.mxu0 0.0
        %455 = vmatpush1.msra.mxu0 0.0
        %456 = vmatprep.subr.mxu0 0.0
        %457 = vmatpush1.msra.mxu0 0.0
        %458 = vmatprep.subr.mxu0 0.0
        %459 = vmatpush1.msra.mxu0 0.0
        %460 = vmatprep.subr.mxu0 0.0
        %461 = vmatpush1.msra.mxu0 0.0
        %462 = vmatprep.subr.mxu0 0.0
        %463 = vmatpush1.msra.mxu0 0.0
        %464 = vmatprep.subr.mxu0 0.0
        %465 = vmatpush1.msra.mxu0 0.0
        %466 = vmatprep.subr.mxu0 0.0
        %467 = vmatpush1.msra.mxu0 0.0
        %468 = vmatprep.subr.mxu0 0.0
        %469 = vmatpush1.msra.mxu0 0.0
        %470 = vmatprep.subr.mxu0 0.0
        %471 = vmatpush1.msra.mxu0 0.0
        %472 = vmatprep.subr.mxu0 0.0
        %473 = vmatpush1.msra.mxu0 0.0
        %474 = vmatprep.subr.mxu0 0.0
        %475 = vmatpush1.msra.mxu0 0.0
        %476 = vmatprep.subr.mxu0 0.0
        %477 = vmatpush1.msra.mxu0 0.0
        %478 = vmatprep.subr.mxu0 0.0
        %479 = vmatpush1.msra.mxu0 0.0
        %480 = vmatprep.subr.mxu0 0.0
        %481 = vmatpush1.msra.mxu0 0.0
        %482 = vmatprep.subr.mxu0 0.0
        %483 = vmatpush1.msra.mxu0 0.0
        %484 = vmatprep.subr.mxu0 0.0
        %485 = vmatpush1.msra.mxu0 0.0
        %486 = vmatprep.subr.mxu0 0.0
        %487 = vmatpush1.msra.mxu0 0.0
        %488 = vmatprep.subr.mxu0 0.0
        %489 = vmatpush1.msra.mxu0 0.0
        %490 = vmatprep.mubr.f32.mxu0 0.0
        %491 = vmatmul.mubr.f32.gmra.mrb[0].mxu0 %v418
        %v492 = vpop.f32.mrb[0].mxu0
        %v493 = vadd.f32 0.0, %v492
        %v494 = vpop.f32.mrb[0].mxu0
        %v495 = vadd.f32 0.0, %v494
        %496 = vmatprep.mubr.f32.mxu0 0.0
        %497 = vmatmul.mubr.f32.gmra.mrb[0].mxu0 %v420
        %v498 = vpop.f32.mrb[0].mxu0
        %v499 = vadd.f32 0.0, %v498
        %v500 = vpop.f32.mrb[0].mxu0
        %v501 = vadd.f32 0.0, %v500
        %502 = vmatprep.mubr.f32.mxu0 0.0
        %503 = vmatmul.mubr.f32.gmra.mrb[0].mxu0 %v422
        %v504 = vpop.f32.mrb[0].mxu0
        %v505 = vadd.f32 0.0, %v504
        %v506 = vpop.f32.mrb[0].mxu0
        %v507 = vadd.f32 0.0, %v506
        %508 = vmatprep.mubr.f32.mxu0 0.0
        %509 = vmatmul.mubr.f32.gmra.mrb[0].mxu0 %v424
        %v510 = vpop.f32.mrb[0].mxu0
        %v511 = vadd.f32 0.0, %v510
        %v512 = vpop.f32.mrb[0].mxu0
        %v513 = vadd.f32 0.0, %v512
        %514 = vdwg.mxu0
        %v515 = vsel %vm417, %v384, 0
        %v517 = vsel %vm417, %v385, 0
        %v519 = vsel %vm417, %v386, 0
        %v521 = vsel %vm417, %v387, 0
        %523 = vmatprep.subr.mxu0 %v389
        %524 = vmatpush1.msra.mxu0 %v388
        %525 = vmatprep.subr.mxu0 %v391
        %526 = vmatpush1.msra.mxu0 %v390
        %527 = vmatprep.subr.mxu0 %v393
        %528 = vmatpush1.msra.mxu0 %v392
        %529 = vmatprep.subr.mxu0 %v395
        %530 = vmatpush1.msra.mxu0 %v394
        %531 = vmatprep.subr.mxu0 0.0
        %532 = vmatpush1.msra.mxu0 0.0
        %533 = vmatprep.subr.mxu0 0.0
        %534 = vmatpush1.msra.mxu0 0.0
        %535 = vmatprep.subr.mxu0 0.0
        %536 = vmatpush1.msra.mxu0 0.0
        %537 = vmatprep.subr.mxu0 0.0
        %538 = vmatpush1.msra.mxu0 0.0
        %539 = vmatprep.subr.mxu0 0.0
        %540 = vmatpush1.msra.mxu0 0.0
        %541 = vmatprep.subr.mxu0 0.0
        %542 = vmatpush1.msra.mxu0 0.0
        %543 = vmatprep.subr.mxu0 0.0
        %544 = vmatpush1.msra.mxu0 0.0
        %545 = vmatprep.subr.mxu0 0.0
        %546 = vmatpush1.msra.mxu0 0.0
        %547 = vmatprep.subr.mxu0 0.0
        %548 = vmatpush1.msra.mxu0 0.0
        %549 = vmatprep.subr.mxu0 0.0
        %550 = vmatpush1.msra.mxu0 0.0
        %551 = vmatprep.subr.mxu0 0.0
        %552 = vmatpush1.msra.mxu0 0.0
        %553 = vmatprep.subr.mxu0 0.0
        %554 = vmatpush1.msra.mxu0 0.0
        %555 = vmatprep.subr.mxu0 0.0
        %556 = vmatpush1.msra.mxu0 0.0
        %557 = vmatprep.subr.mxu0 0.0
        %558 = vmatpush1.msra.mxu0 0.0
        %559 = vmatprep.subr.mxu0 0.0
        %560 = vmatpush1.msra.mxu0 0.0
        %561 = vmatprep.subr.mxu0 0.0
        %562 = vmatpush1.msra.mxu0 0.0
        %563 = vmatprep.subr.mxu0 0.0
        %564 = vmatpush1.msra.mxu0 0.0
        %565 = vmatprep.subr.mxu0 0.0
        %566 = vmatpush1.msra.mxu0 0.0
        %567 = vmatprep.subr.mxu0 0.0
        %568 = vmatpush1.msra.mxu0 0.0
        %569 = vmatprep.subr.mxu0 0.0
        %570 = vmatpush1.msra.mxu0 0.0
        %571 = vmatprep.subr.mxu0 0.0
        %572 = vmatpush1.msra.mxu0 0.0
        %573 = vmatprep.subr.mxu0 0.0
        %574 = vmatpush1.msra.mxu0 0.0
        %575 = vmatprep.subr.mxu0 0.0
        %576 = vmatpush1.msra.mxu0 0.0
        %577 = vmatprep.subr.mxu0 0.0
        %578 = vmatpush1.msra.mxu0 0.0
        %579 = vmatprep.subr.mxu0 0.0
        %580 = vmatpush1.msra.mxu0 0.0
        %581 = vmatprep.subr.mxu0 0.0
        %582 = vmatpush1.msra.mxu0 0.0
        %583 = vmatprep.subr.mxu0 0.0
        %584 = vmatpush1.msra.mxu0 0.0
        %585 = vmatprep.subr.mxu0 0.0
        %586 = vmatpush1.msra.mxu0 0.0
        %587 = vmatprep.mubr.f32.mxu0 0.0
        %588 = vmatmul.mubr.f32.gmra.mrb[0].mxu0 %v515
        %v589 = vpop.f32.mrb[0].mxu0
        %v590 = vadd.f32 %v493, %v589
        %v591 = vpop.f32.mrb[0].mxu0
        %v592 = vadd.f32 %v495, %v591
        %593 = vmatprep.mubr.f32.mxu0 0.0
        %594 = vmatmul.mubr.f32.gmra.mrb[0].mxu0 %v517
        %v595 = vpop.f32.mrb[0].mxu0
        %v596 = vadd.f32 %v499, %v595
        %v597 = vpop.f32.mrb[0].mxu0
        %v598 = vadd.f32 %v501, %v597
        %599 = vmatprep.mubr.f32.mxu0 0.0
        %600 = vmatmul.mubr.f32.gmra.mrb[0].mxu0 %v519
        %v601 = vpop.f32.mrb[0].mxu0
        %v602 = vadd.f32 %v505, %v601
        %v603 = vpop.f32.mrb[0].mxu0
        %v604 = vadd.f32 %v507, %v603
        %605 = vmatprep.mubr.f32.mxu0 0.0
        %606 = vmatmul.mubr.f32.gmra.mrb[0].mxu0 %v521
        %v607 = vpop.f32.mrb[0].mxu0
        %v608 = vadd.f32 %v511, %v607
        %v609 = vpop.f32.mrb[0].mxu0
        %v610 = vadd.f32 %v513, %v609
        %611 = vdwg.mxu0
        %s612 = scalar_lea.vmem %s1, 128
        %v613 = vld [vmem:[%s612] sm:$0xff]
        %v614 = vld [vmem:[%s612 + $0x8] sm:$0xff]
        %v615 = vld [vmem:[%s612 + $0x10] sm:$0xff]
        %v616 = vld [vmem:[%s612 + $0x18] sm:$0xff]
        %v617 = vld [vmem:[%s612 + $0x20] sm:$0xff]
        %v618 = vld [vmem:[%s612 + $0x28] sm:$0xff]
        %v619 = vld [vmem:[%s612 + $0x30] sm:$0xff]
        %v620 = vld [vmem:[%s612 + $0x38] sm:$0xff]
        %vm621 = vcmask 1045504
        %v622 = vrot.slane %v384, 2
        %v623 = vrot.slane %v385, 2
        %v624 = vsel %vm621, %v622, %v623
        %v625 = vrot.slane %v386, 2
        %v626 = vsel %vm621, %v623, %v625
        %v627 = vrot.slane %v387, 2
        %v628 = vsel %vm621, %v625, %v627
        %v629 = vsel %vm417, %v624, 0
        %v631 = vsel %vm417, %v626, 0
        %v633 = vsel %vm417, %v628, 0
        %v635 = vsel %vm417, %v627, 0
        %637 = vmatprep.subr.mxu0 %v614
        %638 = vmatpush1.msra.mxu0 %v613
        %639 = vmatprep.subr.mxu0 %v616
        %640 = vmatpush1.msra.mxu0 %v615
        %641 = vmatprep.subr.mxu0 %v618
        %642 = vmatpush1.msra.mxu0 %v617
        %643 = vmatprep.subr.mxu0 %v620
        %644 = vmatpush1.msra.mxu0 %v619
        %645 = vmatprep.subr.mxu0 0.0
        %646 = vmatpush1.msra.mxu0 0.0
        %647 = vmatprep.subr.mxu0 0.0
        %648 = vmatpush1.msra.mxu0 0.0
        %649 = vmatprep.subr.mxu0 0.0
        %650 = vmatpush1.msra.mxu0 0.0
        %651 = vmatprep.subr.mxu0 0.0
        %652 = vmatpush1.msra.mxu0 0.0
        %653 = vmatprep.subr.mxu0 0.0
        %654 = vmatpush1.msra.mxu0 0.0
        %655 = vmatprep.subr.mxu0 0.0
        %656 = vmatpush1.msra.mxu0 0.0
        %657 = vmatprep.subr.mxu0 0.0
        %658 = vmatpush1.msra.mxu0 0.0
        %659 = vmatprep.subr.mxu0 0.0
        %660 = vmatpush1.msra.mxu0 0.0
        %661 = vmatprep.subr.mxu0 0.0
        %662 = vmatpush1.msra.mxu0 0.0
        %663 = vmatprep.subr.mxu0 0.0
        %664 = vmatpush1.msra.mxu0 0.0
        %665 = vmatprep.subr.mxu0 0.0
        %666 = vmatpush1.msra.mxu0 0.0
        %667 = vmatprep.subr.mxu0 0.0
        %668 = vmatpush1.msra.mxu0 0.0
        %669 = vmatprep.subr.mxu0 0.0
        %670 = vmatpush1.msra.mxu0 0.0
        %671 = vmatprep.subr.mxu0 0.0
        %672 = vmatpush1.msra.mxu0 0.0
        %673 = vmatprep.subr.mxu0 0.0
        %674 = vmatpush1.msra.mxu0 0.0
        %675 = vmatprep.subr.mxu0 0.0
        %676 = vmatpush1.msra.mxu0 0.0
        %677 = vmatprep.subr.mxu0 0.0
        %678 = vmatpush1.msra.mxu0 0.0
        %679 = vmatprep.subr.mxu0 0.0
        %680 = vmatpush1.msra.mxu0 0.0
        %681 = vmatprep.subr.mxu0 0.0
        %682 = vmatpush1.msra.mxu0 0.0
        %683 = vmatprep.subr.mxu0 0.0
        %684 = vmatpush1.msra.mxu0 0.0
        %685 = vmatprep.subr.mxu0 0.0
        %686 = vmatpush1.msra.mxu0 0.0
        %687 = vmatprep.subr.mxu0 0.0
        %688 = vmatpush1.msra.mxu0 0.0
        %689 = vmatprep.subr.mxu0 0.0
        %690 = vmatpush1.msra.mxu0 0.0
        %691 = vmatprep.subr.mxu0 0.0
        %692 = vmatpush1.msra.mxu0 0.0
        %693 = vmatprep.subr.mxu0 0.0
        %694 = vmatpush1.msra.mxu0 0.0
        %695 = vmatprep.subr.mxu0 0.0
        %696 = vmatpush1.msra.mxu0 0.0
        %697 = vmatprep.subr.mxu0 0.0
        %698 = vmatpush1.msra.mxu0 0.0
        %699 = vmatprep.subr.mxu0 0.0
        %700 = vmatpush1.msra.mxu0 0.0
        %701 = vmatprep.mubr.f32.mxu0 0.0
        %702 = vmatmul.mubr.f32.gmra.mrb[0].mxu0 %v629
        %v703 = vpop.f32.mrb[0].mxu0
        %v704 = vadd.f32 0.0, %v703
        %v705 = vpop.f32.mrb[0].mxu0
        %v706 = vadd.f32 0.0, %v705
        %707 = vmatprep.mubr.f32.mxu0 0.0
        %708 = vmatmul.mubr.f32.gmra.mrb[0].mxu0 %v631
        %v709 = vpop.f32.mrb[0].mxu0
        %v710 = vadd.f32 0.0, %v709
        %v711 = vpop.f32.mrb[0].mxu0
        %v712 = vadd.f32 0.0, %v711
        %713 = vmatprep.mubr.f32.mxu0 0.0
        %714 = vmatmul.mubr.f32.gmra.mrb[0].mxu0 %v633
        %v715 = vpop.f32.mrb[0].mxu0
        %v716 = vadd.f32 0.0, %v715
        %v717 = vpop.f32.mrb[0].mxu0
        %v718 = vadd.f32 0.0, %v717
        %719 = vmatprep.mubr.f32.mxu0 0.0
        %720 = vmatmul.mubr.f32.gmra.mrb[0].mxu0 %v635
        %v721 = vpop.f32.mrb[0].mxu0
        %v722 = vadd.f32 0.0, %v721
        %v723 = vpop.f32.mrb[0].mxu0
        %v724 = vadd.f32 0.0, %v723
        %725 = vdwg.mxu0
        %v726 = vadd.f32 %v590, %v704
        %v727 = vadd.f32 %v592, %v706
        %v728 = vadd.f32 %v596, %v710
        %v729 = vadd.f32 %v598, %v712
        %v730 = vadd.f32 %v602, %v716
        %v731 = vadd.f32 %v604, %v718
        %v732 = vadd.f32 %v608, %v722
        %v733 = vadd.f32 %v610, %v724
        %s734 = scalar_lea.vmem %s1, 192
        %v735 = vld [vmem:[%s734] sm:$0xff]
        %v736 = vld [vmem:[%s734 + $0x8] sm:$0xff]
        %v737 = vld [vmem:[%s734 + $0x10] sm:$0xff]
        %v738 = vld [vmem:[%s734 + $0x18] sm:$0xff]
        %v739 = vld [vmem:[%s734 + $0x20] sm:$0xff]
        %v740 = vld [vmem:[%s734 + $0x28] sm:$0xff]
        %v741 = vld [vmem:[%s734 + $0x30] sm:$0xff]
        %v742 = vld [vmem:[%s734 + $0x38] sm:$0xff]
        %vm743 = vcmask 1044480
        %v744 = vrot.slane %v384, 3
        %v745 = vrot.slane %v385, 3
        %v746 = vsel %vm743, %v744, %v745
        %v747 = vrot.slane %v386, 3
        %v748 = vsel %vm743, %v745, %v747
        %v749 = vrot.slane %v387, 3
        %v750 = vsel %vm743, %v747, %v749
        %v751 = vsel %vm417, %v746, 0
        %v753 = vsel %vm417, %v748, 0
        %v755 = vsel %vm417, %v750, 0
        %v757 = vsel %vm417, %v749, 0
        %759 = vmatprep.subr.mxu0 %v736
        %760 = vmatpush1.msra.mxu0 %v735
        %761 = vmatprep.subr.mxu0 %v738
        %762 = vmatpush1.msra.mxu0 %v737
        %763 = vmatprep.subr.mxu0 %v740
        %764 = vmatpush1.msra.mxu0 %v739
        %765 = vmatprep.subr.mxu0 %v742
        %766 = vmatpush1.msra.mxu0 %v741
        %767 = vmatprep.subr.mxu0 0.0
        %768 = vmatpush1.msra.mxu0 0.0
        %769 = vmatprep.subr.mxu0 0.0
        %770 = vmatpush1.msra.mxu0 0.0
        %771 = vmatprep.subr.mxu0 0.0
        %772 = vmatpush1.msra.mxu0 0.0
        %773 = vmatprep.subr.mxu0 0.0
        %774 = vmatpush1.msra.mxu0 0.0
        %775 = vmatprep.subr.mxu0 0.0
        %776 = vmatpush1.msra.mxu0 0.0
        %777 = vmatprep.subr.mxu0 0.0
        %778 = vmatpush1.msra.mxu0 0.0
        %779 = vmatprep.subr.mxu0 0.0
        %780 = vmatpush1.msra.mxu0 0.0
        %781 = vmatprep.subr.mxu0 0.0
        %782 = vmatpush1.msra.mxu0 0.0
        %783 = vmatprep.subr.mxu0 0.0
        %784 = vmatpush1.msra.mxu0 0.0
        %785 = vmatprep.subr.mxu0 0.0
        %786 = vmatpush1.msra.mxu0 0.0
        %787 = vmatprep.subr.mxu0 0.0
        %788 = vmatpush1.msra.mxu0 0.0
        %789 = vmatprep.subr.mxu0 0.0
        %790 = vmatpush1.msra.mxu0 0.0
        %791 = vmatprep.subr.mxu0 0.0
        %792 = vmatpush1.msra.mxu0 0.0
        %793 = vmatprep.subr.mxu0 0.0
        %794 = vmatpush1.msra.mxu0 0.0
        %795 = vmatprep.subr.mxu0 0.0
        %796 = vmatpush1.msra.mxu0 0.0
        %797 = vmatprep.subr.mxu0 0.0
        %798 = vmatpush1.msra.mxu0 0.0
        %799 = vmatprep.subr.mxu0 0.0
        %800 = vmatpush1.msra.mxu0 0.0
        %801 = vmatprep.subr.mxu0 0.0
        %802 = vmatpush1.msra.mxu0 0.0
        %803 = vmatprep.subr.mxu0 0.0
        %804 = vmatpush1.msra.mxu0 0.0
        %805 = vmatprep.subr.mxu0 0.0
        %806 = vmatpush1.msra.mxu0 0.0
        %807 = vmatprep.subr.mxu0 0.0
        %808 = vmatpush1.msra.mxu0 0.0
        %809 = vmatprep.subr.mxu0 0.0
        %810 = vmatpush1.msra.mxu0 0.0
        %811 = vmatprep.subr.mxu0 0.0
        %812 = vmatpush1.msra.mxu0 0.0
        %813 = vmatprep.subr.mxu0 0.0
        %814 = vmatpush1.msra.mxu0 0.0
        %815 = vmatprep.subr.mxu0 0.0
        %816 = vmatpush1.msra.mxu0 0.0
        %817 = vmatprep.subr.mxu0 0.0
        %818 = vmatpush1.msra.mxu0 0.0
        %819 = vmatprep.subr.mxu0 0.0
        %820 = vmatpush1.msra.mxu0 0.0
        %821 = vmatprep.subr.mxu0 0.0
        %822 = vmatpush1.msra.mxu0 0.0
        %823 = vmatprep.mubr.f32.mxu0 0.0
        %824 = vmatmul.mubr.f32.gmra.mrb[0].mxu0 %v751
        %v825 = vpop.f32.mrb[0].mxu0
        %v826 = vadd.f32 0.0, %v825
        %v827 = vpop.f32.mrb[0].mxu0
        %v828 = vadd.f32 0.0, %v827
        %829 = vmatprep.mubr.f32.mxu0 0.0
        %830 = vmatmul.mubr.f32.gmra.mrb[0].mxu0 %v753
        %v831 = vpop.f32.mrb[0].mxu0
        %v832 = vadd.f32 0.0, %v831
        %v833 = vpop.f32.mrb[0].mxu0
        %v834 = vadd.f32 0.0, %v833
        %835 = vmatprep.mubr.f32.mxu0 0.0
        %836 = vmatmul.mubr.f32.gmra.mrb[0].mxu0 %v755
        %v837 = vpop.f32.mrb[0].mxu0
        %v838 = vadd.f32 0.0, %v837
        %v839 = vpop.f32.mrb[0].mxu0
        %v840 = vadd.f32 0.0, %v839
        %841 = vmatprep.mubr.f32.mxu0 0.0
        %842 = vmatmul.mubr.f32.gmra.mrb[0].mxu0 %v757
        %v843 = vpop.f32.mrb[0].mxu0
        %v844 = vadd.f32 0.0, %v843
        %v845 = vpop.f32.mrb[0].mxu0
        %v846 = vadd.f32 0.0, %v845
        %847 = vdwg.mxu0
        %v848 = vadd.f32 %v726, %v826
        %v849 = vadd.f32 %v727, %v828
        %v850 = vadd.f32 %v728, %v832
        %v851 = vadd.f32 %v729, %v834
        %v852 = vadd.f32 %v730, %v838
        %v853 = vadd.f32 %v731, %v840
        %v854 = vadd.f32 %v732, %v844
        %v855 = vadd.f32 %v733, %v846
        %s856 = scalar_lea.vmem %s1, 256
        %v857 = vld [vmem:[%s856] sm:$0xff]
        %v858 = vld [vmem:[%s856 + $0x8] sm:$0xff]
        %v859 = vld [vmem:[%s856 + $0x10] sm:$0xff]
        %v860 = vld [vmem:[%s856 + $0x18] sm:$0xff]
        %v861 = vld [vmem:[%s856 + $0x20] sm:$0xff]
        %v862 = vld [vmem:[%s856 + $0x28] sm:$0xff]
        %v863 = vld [vmem:[%s856 + $0x30] sm:$0xff]
        %v864 = vld [vmem:[%s856 + $0x38] sm:$0xff]
        %vm865 = vcmask 1043456
        %v866 = vrot.slane %v384, 4
        %v867 = vrot.slane %v385, 4
        %v868 = vsel %vm865, %v866, %v867
        %v869 = vrot.slane %v386, 4
        %v870 = vsel %vm865, %v867, %v869
        %v871 = vrot.slane %v387, 4
        %v872 = vsel %vm865, %v869, %v871
        %v873 = vsel %vm417, %v868, 0
        %v875 = vsel %vm417, %v870, 0
        %v877 = vsel %vm417, %v872, 0
        %v879 = vsel %vm417, %v871, 0
        %881 = vmatprep.subr.mxu0 %v858
        %882 = vmatpush1.msra.mxu0 %v857
        %883 = vmatprep.subr.mxu0 %v860
        %884 = vmatpush1.msra.mxu0 %v859
        %885 = vmatprep.subr.mxu0 %v862
        %886 = vmatpush1.msra.mxu0 %v861
        %887 = vmatprep.subr.mxu0 %v864
        %888 = vmatpush1.msra.mxu0 %v863
        %889 = vmatprep.subr.mxu0 0.0
        %890 = vmatpush1.msra.mxu0 0.0
        %891 = vmatprep.subr.mxu0 0.0
        %892 = vmatpush1.msra.mxu0 0.0
        %893 = vmatprep.subr.mxu0 0.0
        %894 = vmatpush1.msra.mxu0 0.0
        %895 = vmatprep.subr.mxu0 0.0
        %896 = vmatpush1.msra.mxu0 0.0
        %897 = vmatprep.subr.mxu0 0.0
        %898 = vmatpush1.msra.mxu0 0.0
        %899 = vmatprep.subr.mxu0 0.0
        %900 = vmatpush1.msra.mxu0 0.0
        %901 = vmatprep.subr.mxu0 0.0
        %902 = vmatpush1.msra.mxu0 0.0
        %903 = vmatprep.subr.mxu0 0.0
        %904 = vmatpush1.msra.mxu0 0.0
        %905 = vmatprep.subr.mxu0 0.0
        %906 = vmatpush1.msra.mxu0 0.0
        %907 = vmatprep.subr.mxu0 0.0
        %908 = vmatpush1.msra.mxu0 0.0
        %909 = vmatprep.subr.mxu0 0.0
        %910 = vmatpush1.msra.mxu0 0.0
        %911 = vmatprep.subr.mxu0 0.0
        %912 = vmatpush1.msra.mxu0 0.0
        %913 = vmatprep.subr.mxu0 0.0
        %914 = vmatpush1.msra.mxu0 0.0
        %915 = vmatprep.subr.mxu0 0.0
        %916 = vmatpush1.msra.mxu0 0.0
        %917 = vmatprep.subr.mxu0 0.0
        %918 = vmatpush1.msra.mxu0 0.0
        %919 = vmatprep.subr.mxu0 0.0
        %920 = vmatpush1.msra.mxu0 0.0
        %921 = vmatprep.subr.mxu0 0.0
        %922 = vmatpush1.msra.mxu0 0.0
        %923 = vmatprep.subr.mxu0 0.0
        %924 = vmatpush1.msra.mxu0 0.0
        %925 = vmatprep.subr.mxu0 0.0
        %926 = vmatpush1.msra.mxu0 0.0
        %927 = vmatprep.subr.mxu0 0.0
        %928 = vmatpush1.msra.mxu0 0.0
        %929 = vmatprep.subr.mxu0 0.0
        %930 = vmatpush1.msra.mxu0 0.0
        %931 = vmatprep.subr.mxu0 0.0
        %932 = vmatpush1.msra.mxu0 0.0
        %933 = vmatprep.subr.mxu0 0.0
        %934 = vmatpush1.msra.mxu0 0.0
        %935 = vmatprep.subr.mxu0 0.0
        %936 = vmatpush1.msra.mxu0 0.0
        %937 = vmatprep.subr.mxu0 0.0
        %938 = vmatpush1.msra.mxu0 0.0
        %939 = vmatprep.subr.mxu0 0.0
        %940 = vmatpush1.msra.mxu0 0.0
        %941 = vmatprep.subr.mxu0 0.0
        %942 = vmatpush1.msra.mxu0 0.0
        %943 = vmatprep.subr.mxu0 0.0
        %944 = vmatpush1.msra.mxu0 0.0
        %945 = vmatprep.mubr.f32.mxu0 0.0
        %946 = vmatmul.mubr.f32.gmra.mrb[0].mxu0 %v873
        %v947 = vpop.f32.mrb[0].mxu0
        %v948 = vadd.f32 0.0, %v947
        %v949 = vpop.f32.mrb[0].mxu0
        %v950 = vadd.f32 0.0, %v949
        %951 = vmatprep.mubr.f32.mxu0 0.0
        %952 = vmatmul.mubr.f32.gmra.mrb[0].mxu0 %v875
        %v953 = vpop.f32.mrb[0].mxu0
        %v954 = vadd.f32 0.0, %v953
        %v955 = vpop.f32.mrb[0].mxu0
        %v956 = vadd.f32 0.0, %v955
        %957 = vmatprep.mubr.f32.mxu0 0.0
        %958 = vmatmul.mubr.f32.gmra.mrb[0].mxu0 %v877
        %v959 = vpop.f32.mrb[0].mxu0
        %v960 = vadd.f32 0.0, %v959
        %v961 = vpop.f32.mrb[0].mxu0
        %v962 = vadd.f32 0.0, %v961
        %963 = vmatprep.mubr.f32.mxu0 0.0
        %964 = vmatmul.mubr.f32.gmra.mrb[0].mxu0 %v879
        %v965 = vpop.f32.mrb[0].mxu0
        %v966 = vadd.f32 0.0, %v965
        %v967 = vpop.f32.mrb[0].mxu0
        %v968 = vadd.f32 0.0, %v967
        %969 = vdwg.mxu0
        %v970 = vadd.f32 %v848, %v948
        %v971 = vadd.f32 %v849, %v950
        %v972 = vadd.f32 %v850, %v954
        %v973 = vadd.f32 %v851, %v956
        %v974 = vadd.f32 %v852, %v960
        %v975 = vadd.f32 %v853, %v962
        %v976 = vadd.f32 %v854, %v966
        %v977 = vadd.f32 %v855, %v968
        %v978 = vld [vmem:[%s2] sm:$0x3]
        %v980 = vlaneseq
        %v981 = vshrl.u32 %v980, 7
        %v982 = vsub.s32 0, %v981
        %v983 = vrot.slane %v978, %v982
        %v984 = vlaneseq
        %v985 = vshrl.u32 %v984, 7
        %v986 = vsub.s32 1, %v985
        %v987 = vrot.slane %v978, %v986
        %v990 = vadd.f32 %v970, %v983
        %v991 = vadd.f32 %v971, %v987
        %v992 = vadd.f32 %v972, %v983
        %v993 = vadd.f32 %v973, %v987
        %v994 = vadd.f32 %v974, %v983
        %v995 = vadd.f32 %v975, %v987
        %v996 = vadd.f32 %v976, %v983
        %v997 = vadd.f32 %v977, %v987
        %v998 = vmax.f32 %v990, 0.0
        %v999 = vmax.f32 %v991, 0.0
        %v1000 = vmax.f32 %v992, 0.0
        %v1001 = vmax.f32 %v993, 0.0
        %v1002 = vmax.f32 %v994, 0.0
        %v1003 = vmax.f32 %v995, 0.0
        %v1004 = vmax.f32 %v996, 0.0
        %v1005 = vmax.f32 %v997, 0.0
        %v1006 = vlaneseq
        %v1007 = vshrl.u32 %v1006, 7
        %v1008 = vadd.s32 %v1007, 8
        %v1009 = vadd.s32 %v1007, 16
        %v1010 = vadd.s32 %v1007, 24
        %v1011 = vadd.s32 %v1007, 32
        %v1012 = vadd.s32 %v1007, 40
        %v1013 = vadd.s32 %v1007, 48
        %v1014 = vadd.s32 %v1007, 56
        %v1015 = vadd.s32 %v1007, 64
        %v1016 = vadd.s32 %v1007, 72
        %v1017 = vadd.s32 %v1007, 80
        %v1018 = vadd.s32 %v1007, 88
        %v1019 = vadd.s32 %v1007, 96
        %v1020 = vadd.s32 %v1007, 104
        %v1021 = vadd.s32 %v1007, 112
        %v1022 = vadd.s32 %v1007, 120
        %v1023 = vadd.s32 %v1007, 128
        %v1024 = vadd.s32 %v1007, 136
        %v1025 = vadd.s32 %v1007, 144
        %v1026 = vadd.s32 %v1007, 152
        %v1027 = vadd.s32 %v1007, 160
        %v1028 = vlaneseq
        %v1029 = vand.u32 %v1028, 127
        %v1030 = vadd.s32 %v1029, 128
        %v1031 = vadd.s32 %v1029, 1
        %v1032 = vadd.s32 %v1030, 1
        %vm1033 = vcmp.eq.s32.totalorder %v1007, %v1031
        %vm1034 = vcmp.eq.s32.totalorder %v1007, %v1032
        %vm1035 = vcmp.eq.s32.totalorder %v1008, %v1031
        %vm1036 = vcmp.eq.s32.totalorder %v1008, %v1032
        %vm1037 = vcmp.eq.s32.totalorder %v1009, %v1031
        %vm1038 = vcmp.eq.s32.totalorder %v1009, %v1032
        %vm1039 = vcmp.eq.s32.totalorder %v1010, %v1031
        %vm1040 = vcmp.eq.s32.totalorder %v1010, %v1032
        %vm1041 = vcmp.eq.s32.totalorder %v1011, %v1031
        %vm1042 = vcmp.eq.s32.totalorder %v1011, %v1032
        %vm1043 = vcmp.eq.s32.totalorder %v1012, %v1031
        %vm1044 = vcmp.eq.s32.totalorder %v1012, %v1032
        %vm1045 = vcmp.eq.s32.totalorder %v1013, %v1031
        %vm1046 = vcmp.eq.s32.totalorder %v1013, %v1032
        %vm1047 = vcmp.eq.s32.totalorder %v1014, %v1031
        %vm1048 = vcmp.eq.s32.totalorder %v1014, %v1032
        %vm1049 = vcmp.eq.s32.totalorder %v1015, %v1031
        %vm1050 = vcmp.eq.s32.totalorder %v1015, %v1032
        %vm1051 = vcmp.eq.s32.totalorder %v1016, %v1031
        %vm1052 = vcmp.eq.s32.totalorder %v1016, %v1032
        %vm1053 = vcmp.eq.s32.totalorder %v1017, %v1031
        %vm1054 = vcmp.eq.s32.totalorder %v1017, %v1032
        %vm1055 = vcmp.eq.s32.totalorder %v1018, %v1031
        %vm1056 = vcmp.eq.s32.totalorder %v1018, %v1032
        %vm1057 = vcmp.eq.s32.totalorder %v1019, %v1031
        %vm1058 = vcmp.eq.s32.totalorder %v1019, %v1032
        %vm1059 = vcmp.eq.s32.totalorder %v1020, %v1031
        %vm1060 = vcmp.eq.s32.totalorder %v1020, %v1032
        %vm1061 = vcmp.eq.s32.totalorder %v1021, %v1031
        %vm1062 = vcmp.eq.s32.totalorder %v1021, %v1032
        %vm1063 = vcmp.eq.s32.totalorder %v1022, %v1031
        %vm1064 = vcmp.eq.s32.totalorder %v1022, %v1032
        %vm1065 = vcmp.eq.s32.totalorder %v1023, %v1031
        %vm1066 = vcmp.eq.s32.totalorder %v1023, %v1032
        %vm1067 = vcmp.eq.s32.totalorder %v1024, %v1031
        %vm1068 = vcmp.eq.s32.totalorder %v1024, %v1032
        %vm1069 = vcmp.eq.s32.totalorder %v1025, %v1031
        %vm1070 = vcmp.eq.s32.totalorder %v1025, %v1032
        %vm1071 = vcmp.eq.s32.totalorder %v1026, %v1031
        %vm1072 = vcmp.eq.s32.totalorder %v1026, %v1032
        %vm1073 = vcmp.eq.s32.totalorder %v1027, %v1031
        %vm1074 = vcmp.eq.s32.totalorder %v1027, %v1032
        %v1075 = vsel %vm1033, 1, 0
        %v1076 = vsel %vm1034, 1, 0
        %v1077 = vsel %vm1035, 1, 0
        %v1078 = vsel %vm1036, 1, 0
        %v1079 = vsel %vm1037, 1, 0
        %v1080 = vsel %vm1038, 1, 0
        %v1081 = vsel %vm1039, 1, 0
        %v1082 = vsel %vm1040, 1, 0
        %v1083 = vsel %vm1041, 1, 0
        %v1084 = vsel %vm1042, 1, 0
        %v1085 = vsel %vm1043, 1, 0
        %v1086 = vsel %vm1044, 1, 0
        %v1087 = vsel %vm1045, 1, 0
        %v1088 = vsel %vm1046, 1, 0
        %v1089 = vsel %vm1047, 1, 0
        %v1090 = vsel %vm1048, 1, 0
        %v1091 = vsel %vm1049, 1, 0
        %v1092 = vsel %vm1050, 1, 0
        %v1093 = vsel %vm1051, 1, 0
        %v1094 = vsel %vm1052, 1, 0
        %v1095 = vsel %vm1053, 1, 0
        %v1096 = vsel %vm1054, 1, 0
        %v1097 = vsel %vm1055, 1, 0
        %v1098 = vsel %vm1056, 1, 0
        %v1099 = vsel %vm1057, 1, 0
        %v1100 = vsel %vm1058, 1, 0
        %v1101 = vsel %vm1059, 1, 0
        %v1102 = vsel %vm1060, 1, 0
        %v1103 = vsel %vm1061, 1, 0
        %v1104 = vsel %vm1062, 1, 0
        %v1105 = vsel %vm1063, 1, 0
        %v1106 = vsel %vm1064, 1, 0
        %v1107 = vsel %vm1065, 1, 0
        %v1108 = vsel %vm1066, 1, 0
        %v1109 = vsel %vm1067, 1, 0
        %v1110 = vsel %vm1068, 1, 0
        %v1111 = vsel %vm1069, 1, 0
        %v1112 = vsel %vm1070, 1, 0
        %v1113 = vsel %vm1071, 1, 0
        %v1114 = vsel %vm1072, 1, 0
        %v1115 = vsel %vm1073, 1, 0
        %v1116 = vsel %vm1074, 1, 0
        %v1117 = vcvt.s32.f32 %v1075
        %v1118 = vcvt.s32.f32 %v1076
        %v1119 = vcvt.s32.f32 %v1077
        %v1120 = vcvt.s32.f32 %v1078
        %v1121 = vcvt.s32.f32 %v1079
        %v1122 = vcvt.s32.f32 %v1080
        %v1123 = vcvt.s32.f32 %v1081
        %v1124 = vcvt.s32.f32 %v1082
        %v1125 = vcvt.s32.f32 %v1083
        %v1126 = vcvt.s32.f32 %v1084
        %v1127 = vcvt.s32.f32 %v1085
        %v1128 = vcvt.s32.f32 %v1086
        %v1129 = vcvt.s32.f32 %v1087
        %v1130 = vcvt.s32.f32 %v1088
        %v1131 = vcvt.s32.f32 %v1089
        %v1132 = vcvt.s32.f32 %v1090
        %v1133 = vcvt.s32.f32 %v1091
        %v1134 = vcvt.s32.f32 %v1092
        %v1135 = vcvt.s32.f32 %v1093
        %v1136 = vcvt.s32.f32 %v1094
        %v1137 = vcvt.s32.f32 %v1095
        %v1138 = vcvt.s32.f32 %v1096
        %v1139 = vcvt.s32.f32 %v1097
        %v1140 = vcvt.s32.f32 %v1098
        %v1141 = vcvt.s32.f32 %v1099
        %v1142 = vcvt.s32.f32 %v1100
        %v1143 = vcvt.s32.f32 %v1101
        %v1144 = vcvt.s32.f32 %v1102
        %v1145 = vcvt.s32.f32 %v1103
        %v1146 = vcvt.s32.f32 %v1104
        %v1147 = vcvt.s32.f32 %v1105
        %v1148 = vcvt.s32.f32 %v1106
        %v1149 = vcvt.s32.f32 %v1107
        %v1150 = vcvt.s32.f32 %v1108
        %v1151 = vcvt.s32.f32 %v1109
        %v1152 = vcvt.s32.f32 %v1110
        %v1153 = vcvt.s32.f32 %v1111
        %v1154 = vcvt.s32.f32 %v1112
        %v1155 = vcvt.s32.f32 %v1113
        %v1156 = vcvt.s32.f32 %v1114
        %v1157 = vcvt.s32.f32 %v1115
        %v1158 = vcvt.s32.f32 %v1116
        %vm1159 = vcmask 326656
        %v1161 = vsel %vm1159, %v999, 0
        %v1164 = vsel %vm1159, %v1001, 0
        %v1167 = vsel %vm1159, %v1003, 0
        %v1170 = vsel %vm1159, %v1005, 0
        %1172 = vmatprep.subr.mxu0 %v1118
        %1173 = vmatpush1.msra.mxu0 %v1117
        %1174 = vmatprep.subr.mxu0 %v1120
        %1175 = vmatpush1.msra.mxu0 %v1119
        %1176 = vmatprep.subr.mxu0 %v1122
        %1177 = vmatpush1.msra.mxu0 %v1121
        %1178 = vmatprep.subr.mxu0 %v1124
        %1179 = vmatpush1.msra.mxu0 %v1123
        %1180 = vmatprep.subr.mxu0 %v1126
        %1181 = vmatpush1.msra.mxu0 %v1125
        %1182 = vmatprep.subr.mxu0 %v1128
        %1183 = vmatpush1.msra.mxu0 %v1127
        %1184 = vmatprep.subr.mxu0 %v1130
        %1185 = vmatpush1.msra.mxu0 %v1129
        %1186 = vmatprep.subr.mxu0 %v1132
        %1187 = vmatpush1.msra.mxu0 %v1131
        %1188 = vmatprep.subr.mxu0 %v1134
        %1189 = vmatpush1.msra.mxu0 %v1133
        %1190 = vmatprep.subr.mxu0 %v1136
        %1191 = vmatpush1.msra.mxu0 %v1135
        %1192 = vmatprep.subr.mxu0 %v1138
        %1193 = vmatpush1.msra.mxu0 %v1137
        %1194 = vmatprep.subr.mxu0 %v1140
        %1195 = vmatpush1.msra.mxu0 %v1139
        %1196 = vmatprep.subr.mxu0 %v1142
        %1197 = vmatpush1.msra.mxu0 %v1141
        %1198 = vmatprep.subr.mxu0 %v1144
        %1199 = vmatpush1.msra.mxu0 %v1143
        %1200 = vmatprep.subr.mxu0 %v1146
        %1201 = vmatpush1.msra.mxu0 %v1145
        %1202 = vmatprep.subr.mxu0 %v1148
        %1203 = vmatpush1.msra.mxu0 %v1147
        %1204 = vmatprep.subr.mxu0 %v1150
        %1205 = vmatpush1.msra.mxu0 %v1149
        %1206 = vmatprep.subr.mxu0 %v1152
        %1207 = vmatpush1.msra.mxu0 %v1151
        %1208 = vmatprep.subr.mxu0 %v1154
        %1209 = vmatpush1.msra.mxu0 %v1153
        %1210 = vmatprep.subr.mxu0 %v1156
        %1211 = vmatpush1.msra.mxu0 %v1155
        %1212 = vmatprep.subr.mxu0 %v1158
        %1213 = vmatpush1.msra.mxu0 %v1157
        %1214 = vmatprep.subr.mxu0 0.0
        %1215 = vmatpush1.msra.mxu0 0.0
        %1216 = vmatprep.subr.mxu0 0.0
        %1217 = vmatpush1.msra.mxu0 0.0
        %1218 = vmatprep.subr.mxu0 0.0
        %1219 = vmatpush1.msra.mxu0 0.0
        %1220 = vmatprep.subr.mxu0 0.0
        %1221 = vmatpush1.msra.mxu0 0.0
        %1222 = vmatprep.subr.mxu0 0.0
        %1223 = vmatpush1.msra.mxu0 0.0
        %1224 = vmatprep.subr.mxu0 0.0
        %1225 = vmatpush1.msra.mxu0 0.0
        %1226 = vmatprep.subr.mxu0 0.0
        %1227 = vmatpush1.msra.mxu0 0.0
        %1228 = vmatprep.subr.mxu0 0.0
        %1229 = vmatpush1.msra.mxu0 0.0
        %1230 = vmatprep.subr.mxu0 0.0
        %1231 = vmatpush1.msra.mxu0 0.0
        %1232 = vmatprep.subr.mxu0 0.0
        %1233 = vmatpush1.msra.mxu0 0.0
        %1234 = vmatprep.subr.mxu0 0.0
        %1235 = vmatpush1.msra.mxu0 0.0
        %1236 = vmatprep.mubr.f32.mxu0 %v1161
        %1237 = vmatmul.mubr.f32.gmra.mrb[0].mxu0 %v998
        %v1238 = vpop.f32.mrb[0].mxu0
        %v1239 = vadd.f32 0.0, %v1238
        %v1240 = vpop.f32.mrb[0].mxu0
        %v1241 = vadd.f32 0.0, %v1240
        %1242 = vmatprep.mubr.f32.mxu0 %v1164
        %1243 = vmatmul.mubr.f32.gmra.mrb[0].mxu0 %v1000
        %v1244 = vpop.f32.mrb[0].mxu0
        %v1245 = vadd.f32 0.0, %v1244
        %v1246 = vpop.f32.mrb[0].mxu0
        %v1247 = vadd.f32 0.0, %v1246
        %1248 = vmatprep.mubr.f32.mxu0 %v1167
        %1249 = vmatmul.mubr.f32.gmra.mrb[0].mxu0 %v1002
        %v1250 = vpop.f32.mrb[0].mxu0
        %v1251 = vadd.f32 0.0, %v1250
        %v1252 = vpop.f32.mrb[0].mxu0
        %v1253 = vadd.f32 0.0, %v1252
        %1254 = vmatprep.mubr.f32.mxu0 %v1170
        %1255 = vmatmul.mubr.f32.gmra.mrb[0].mxu0 %v1004
        %v1256 = vpop.f32.mrb[0].mxu0
        %v1257 = vadd.f32 0.0, %v1256
        %v1258 = vpop.f32.mrb[0].mxu0
        %v1259 = vadd.f32 0.0, %v1258
        %1260 = vdwg.mxu0
        %v1261 = vmax.f32 %v998, %v1239
        %v1262 = vmax.f32 %v999, %v1241
        %v1263 = vmax.f32 %v1000, %v1245
        %v1264 = vmax.f32 %v1001, %v1247
        %v1265 = vmax.f32 %v1002, %v1251
        %v1266 = vmax.f32 %v1003, %v1253
        %v1267 = vmax.f32 %v1004, %v1257
        %v1268 = vmax.f32 %v1005, %v1259
        %v1269 = vmul.u32 %v1007, 2
        %v1270 = vmul.u32 %v1008, 2
        %vm1271 = vcmp.eq.s32.totalorder %v1029, %v1269
        %vm1272 = vcmp.eq.s32.totalorder %v1029, %v1270
        %v1273 = vsel %vm1271, 1, 0
        %v1274 = vsel %vm1272, 1, 0
        %v1275 = vcvt.s32.f32 %v1273
        %v1276 = vcvt.s32.f32 %v1274
        %v1277 = vadd.s32 %v1269, 1
        %v1278 = vadd.s32 %v1270, 1
        %vm1279 = vcmp.eq.s32.totalorder %v1029, %v1277
        %vm1280 = vcmp.eq.s32.totalorder %v1029, %v1278
        %v1281 = vsel %vm1279, 1, 0
        %v1282 = vsel %vm1280, 1, 0
        %v1283 = vcvt.s32.f32 %v1281
        %v1284 = vcvt.s32.f32 %v1282
        %vm1285 = vcmask 228352
        %v1287 = vsel %vm1285, %v1275, 0
        %v1290 = vsel %vm1285, %v1276, 0
        %v1293 = vsel %vm865, %v1267, 0
        %v1296 = vsel %vm865, %v1268, 0
        %1298 = vmatprep.subr.mxu0 %v1262
        %1299 = vmatpush1.msra.mxu0 %v1261
        %1300 = vmatprep.subr.mxu0 %v1264
        %1301 = vmatpush1.msra.mxu0 %v1263
        %1302 = vmatprep.subr.mxu0 %v1266
        %1303 = vmatpush1.msra.mxu0 %v1265
        %1304 = vmatprep.subr.mxu0 %v1296
        %1305 = vmatpush1.msra.mxu0 %v1293
        %1306 = vmatprep.subr.mxu0 0.0
        %1307 = vmatpush1.msra.mxu0 0.0
        %1308 = vmatprep.subr.mxu0 0.0
        %1309 = vmatpush1.msra.mxu0 0.0
        %1310 = vmatprep.subr.mxu0 0.0
        %1311 = vmatpush1.msra.mxu0 0.0
        %1312 = vmatprep.subr.mxu0 0.0
        %1313 = vmatpush1.msra.mxu0 0.0
        %1314 = vmatprep.subr.mxu0 0.0
        %1315 = vmatpush1.msra.mxu0 0.0
        %1316 = vmatprep.subr.mxu0 0.0
        %1317 = vmatpush1.msra.mxu0 0.0
        %1318 = vmatprep.subr.mxu0 0.0
        %1319 = vmatpush1.msra.mxu0 0.0
        %1320 = vmatprep.subr.mxu0 0.0
        %1321 = vmatpush1.msra.mxu0 0.0
        %1322 = vmatprep.subr.mxu0 0.0
        %1323 = vmatpush1.msra.mxu0 0.0
        %1324 = vmatprep.subr.mxu0 0.0
        %1325 = vmatpush1.msra.mxu0 0.0
        %1326 = vmatprep.subr.mxu0 0.0
        %1327 = vmatpush1.msra.mxu0 0.0
        %1328 = vmatprep.subr.mxu0 0.0
        %1329 = vmatpush1.msra.mxu0 0.0
        %1330 = vmatprep.subr.mxu0 0.0
        %1331 = vmatpush1.msra.mxu0 0.0
        %1332 = vmatprep.subr.mxu0 0.0
        %1333 = vmatpush1.msra.mxu0 0.0
        %1334 = vmatprep.subr.mxu0 0.0
        %1335 = vmatpush1.msra.mxu0 0.0
        %1336 = vmatprep.subr.mxu0 0.0
        %1337 = vmatpush1.msra.mxu0 0.0
        %1338 = vmatprep.subr.mxu0 0.0
        %1339 = vmatpush1.msra.mxu0 0.0
        %1340 = vmatprep.subr.mxu0 0.0
        %1341 = vmatpush1.msra.mxu0 0.0
        %1342 = vmatprep.subr.mxu0 0.0
        %1343 = vmatpush1.msra.mxu0 0.0
        %1344 = vmatprep.subr.mxu0 0.0
        %1345 = vmatpush1.msra.mxu0 0.0
        %1346 = vmatprep.subr.mxu0 0.0
        %1347 = vmatpush1.msra.mxu0 0.0
        %1348 = vmatprep.subr.mxu0 0.0
        %1349 = vmatpush1.msra.mxu0 0.0
        %1350 = vmatprep.subr.mxu0 0.0
        %1351 = vmatpush1.msra.mxu0 0.0
        %1352 = vmatprep.subr.mxu0 0.0
        %1353 = vmatpush1.msra.mxu0 0.0
        %1354 = vmatprep.subr.mxu0 0.0
        %1355 = vmatpush1.msra.mxu0 0.0
        %1356 = vmatprep.subr.mxu0 0.0
        %1357 = vmatpush1.msra.mxu0 0.0
        %1358 = vmatprep.subr.mxu0 0.0
        %1359 = vmatpush1.msra.mxu0 0.0
        %1360 = vmatprep.subr.mxu0 0.0
        %1361 = vmatpush1.msra.mxu0 0.0
        %1362 = vmatprep.mubr.f32.mxu0 0.0
        %1363 = vmatmul.mubr.f32.gmra.mrb[0].mxu0 %v1287
        %v1364 = vpop.f32.mrb[0].mxu0
        %v1365 = vadd.f32 0.0, %v1364
        %v1366 = vpop.f32.mrb[0].mxu0
        %v1367 = vadd.f32 0.0, %v1366
        %1368 = vmatprep.mubr.f32.mxu0 0.0
        %1369 = vmatmul.mubr.f32.gmra.mrb[0].mxu0 %v1290
        %v1370 = vpop.f32.mrb[0].mxu0
        %v1371 = vadd.f32 0.0, %v1370
        %v1372 = vpop.f32.mrb[0].mxu0
        %v1373 = vadd.f32 0.0, %v1372
        %1374 = vdwg.mxu0
        %v1376 = vsel %vm1285, %v1283, 0
        %v1379 = vsel %vm1285, %v1284, 0
        %1381 = vmatprep.subr.mxu0 %v1262
        %1382 = vmatpush1.msra.mxu0 %v1261
        %1383 = vmatprep.subr.mxu0 %v1264
        %1384 = vmatpush1.msra.mxu0 %v1263
        %1385 = vmatprep.subr.mxu0 %v1266
        %1386 = vmatpush1.msra.mxu0 %v1265
        %1387 = vmatprep.subr.mxu0 %v1296
        %1388 = vmatpush1.msra.mxu0 %v1293
        %1389 = vmatprep.subr.mxu0 0.0
        %1390 = vmatpush1.msra.mxu0 0.0
        %1391 = vmatprep.subr.mxu0 0.0
        %1392 = vmatpush1.msra.mxu0 0.0
        %1393 = vmatprep.subr.mxu0 0.0
        %1394 = vmatpush1.msra.mxu0 0.0
        %1395 = vmatprep.subr.mxu0 0.0
        %1396 = vmatpush1.msra.mxu0 0.0
        %1397 = vmatprep.subr.mxu0 0.0
        %1398 = vmatpush1.msra.mxu0 0.0
        %1399 = vmatprep.subr.mxu0 0.0
        %1400 = vmatpush1.msra.mxu0 0.0
        %1401 = vmatprep.subr.mxu0 0.0
        %1402 = vmatpush1.msra.mxu0 0.0
        %1403 = vmatprep.subr.mxu0 0.0
        %1404 = vmatpush1.msra.mxu0 0.0
        %1405 = vmatprep.subr.mxu0 0.0
        %1406 = vmatpush1.msra.mxu0 0.0
        %1407 = vmatprep.subr.mxu0 0.0
        %1408 = vmatpush1.msra.mxu0 0.0
        %1409 = vmatprep.subr.mxu0 0.0
        %1410 = vmatpush1.msra.mxu0 0.0
        %1411 = vmatprep.subr.mxu0 0.0
        %1412 = vmatpush1.msra.mxu0 0.0
        %1413 = vmatprep.subr.mxu0 0.0
        %1414 = vmatpush1.msra.mxu0 0.0
        %1415 = vmatprep.subr.mxu0 0.0
        %1416 = vmatpush1.msra.mxu0 0.0
        %1417 = vmatprep.subr.mxu0 0.0
        %1418 = vmatpush1.msra.mxu0 0.0
        %1419 = vmatprep.subr.mxu0 0.0
        %1420 = vmatpush1.msra.mxu0 0.0
        %1421 = vmatprep.subr.mxu0 0.0
        %1422 = vmatpush1.msra.mxu0 0.0
        %1423 = vmatprep.subr.mxu0 0.0
        %1424 = vmatpush1.msra.mxu0 0.0
        %1425 = vmatprep.subr.mxu0 0.0
        %1426 = vmatpush1.msra.mxu0 0.0
        %1427 = vmatprep.subr.mxu0 0.0
        %1428 = vmatpush1.msra.mxu0 0.0
        %1429 = vmatprep.subr.mxu0 0.0
        %1430 = vmatpush1.msra.mxu0 0.0
        %1431 = vmatprep.subr.mxu0 0.0
        %1432 = vmatpush1.msra.mxu0 0.0
        %1433 = vmatprep.subr.mxu0 0.0
        %1434 = vmatpush1.msra.mxu0 0.0
        %1435 = vmatprep.subr.mxu0 0.0
        %1436 = vmatpush1.msra.mxu0 0.0
        %1437 = vmatprep.subr.mxu0 0.0
        %1438 = vmatpush1.msra.mxu0 0.0
        %1439 = vmatprep.subr.mxu0 0.0
        %1440 = vmatpush1.msra.mxu0 0.0
        %1441 = vmatprep.subr.mxu0 0.0
        %1442 = vmatpush1.msra.mxu0 0.0
        %1443 = vmatprep.subr.mxu0 0.0
        %1444 = vmatpush1.msra.mxu0 0.0
        %1445 = vmatprep.mubr.f32.mxu0 0.0
        %1446 = vmatmul.mubr.f32.gmra.mrb[0].mxu0 %v1376
        %v1447 = vpop.f32.mrb[0].mxu0
        %v1448 = vadd.f32 0.0, %v1447
        %v1449 = vpop.f32.mrb[0].mxu0
        %v1450 = vadd.f32 0.0, %v1449
        %1451 = vmatprep.mubr.f32.mxu0 0.0
        %1452 = vmatmul.mubr.f32.gmra.mrb[0].mxu0 %v1379
        %v1453 = vpop.f32.mrb[0].mxu0
        %v1454 = vadd.f32 0.0, %v1453
        %v1455 = vpop.f32.mrb[0].mxu0
        %v1456 = vadd.f32 0.0, %v1455
        %1457 = vdwg.mxu0
        %v1458 = vmax.f32 %v1365, %v1448
        %v1459 = vmax.f32 %v1367, %v1450
        %v1460 = vmax.f32 %v1371, %v1454
        %v1461 = vmax.f32 %v1373, %v1456
        %v1462 = vld [vmem:[%s3] sm:$0xff]
        %v1463 = vld [vmem:[%s3 + $0x8] sm:$0xff]
        %v1464 = vld [vmem:[%s3 + $0x10] sm:$0xff]
        %v1465 = vld [vmem:[%s3 + $0x18] sm:$0xff]
        %v1466 = vld [vmem:[%s3 + $0x20] sm:$0xff]
        %v1467 = vld [vmem:[%s3 + $0x28] sm:$0xff]
        %v1468 = vld [vmem:[%s3 + $0x30] sm:$0xff]
        %v1469 = vld [vmem:[%s3 + $0x38] sm:$0xff]
        %v1470 = vld [vmem:[%s3 + $0x40] sm:$0xff]
        %v1471 = vld [vmem:[%s3 + $0x48] sm:$0xff]
        %v1472 = vld [vmem:[%s3 + $0x50] sm:$0xff]
        %v1473 = vld [vmem:[%s3 + $0x58] sm:$0xff]
        %v1474 = vld [vmem:[%s3 + $0x60] sm:$0xff]
        %v1475 = vld [vmem:[%s3 + $0x68] sm:$0xff]
        %v1476 = vld [vmem:[%s3 + $0x70] sm:$0xff]
        %v1477 = vld [vmem:[%s3 + $0x78] sm:$0xff]
        %v1478 = vld [vmem:[%s3 + $0x80] sm:$0xff]
        %v1479 = vld [vmem:[%s3 + $0x88] sm:$0xff]
        %v1480 = vld [vmem:[%s3 + $0x90] sm:$0xff]
        %v1481 = vld [vmem:[%s3 + $0x98] sm:$0xff]
        %v1482 = vld [vmem:[%s3 + $0xa0] sm:$0xff]
        %v1483 = vld [vmem:[%s3 + $0xa8] sm:$0xff]
        %v1484 = vld [vmem:[%s3 + $0xb0] sm:$0xff]
        %v1485 = vld [vmem:[%s3 + $0xb8] sm:$0xff]
        %v1486 = vld [vmem:[%s3 + $0xc0] sm:$0xff]
        %v1487 = vld [vmem:[%s3 + $0xc8] sm:$0xff]
        %v1488 = vld [vmem:[%s3 + $0xd0] sm:$0xff]
        %v1489 = vld [vmem:[%s3 + $0xd8] sm:$0xff]
        %v1490 = vld [vmem:[%s3 + $0xe0] sm:$0xff]
        %v1491 = vld [vmem:[%s3 + $0xe8] sm:$0xff]
        %v1492 = vld [vmem:[%s3 + $0xf0] sm:$0xff]
        %v1493 = vld [vmem:[%s3 + $0xf8] sm:$0xff]
        %v1494 = vld [vmem:[%s3 + $0x100] sm:$0xff]
        %v1495 = vld [vmem:[%s3 + $0x108] sm:$0xff]
        %v1496 = vld [vmem:[%s3 + $0x110] sm:$0xff]
        %v1497 = vld [vmem:[%s3 + $0x118] sm:$0xff]
        %v1498 = vld [vmem:[%s3 + $0x120] sm:$0xff]
        %v1499 = vld [vmem:[%s3 + $0x128] sm:$0xff]
        %v1500 = vld [vmem:[%s3 + $0x130] sm:$0xff]
        %v1501 = vld [vmem:[%s3 + $0x138] sm:$0xff]
        %v1502 = vld [vmem:[%s3 + $0x140] sm:$0xff]
        %v1503 = vld [vmem:[%s3 + $0x148] sm:$0xff]
        %s1504 = scalar_lea.vmem %s3, 336
        %v1505 = vld [vmem:[%s1504] sm:$0xff]
        %v1506 = vld [vmem:[%s1504 + $0x8] sm:$0xff]
        %v1507 = vld [vmem:[%s1504 + $0x10] sm:$0xff]
        %v1508 = vld [vmem:[%s1504 + $0x18] sm:$0xff]
        %v1509 = vld [vmem:[%s1504 + $0x20] sm:$0xff]
        %v1510 = vld [vmem:[%s1504 + $0x28] sm:$0xff]
        %v1511 = vld [vmem:[%s1504 + $0x30] sm:$0xff]
        %v1512 = vld [vmem:[%s1504 + $0x38] sm:$0xff]
        %v1513 = vld [vmem:[%s1504 + $0x40] sm:$0xff]
        %v1514 = vld [vmem:[%s1504 + $0x48] sm:$0xff]
        %v1515 = vld [vmem:[%s1504 + $0x50] sm:$0xff]
        %v1516 = vld [vmem:[%s1504 + $0x58] sm:$0xff]
        %v1517 = vld [vmem:[%s1504 + $0x60] sm:$0xff]
        %v1518 = vld [vmem:[%s1504 + $0x68] sm:$0xff]
        %v1519 = vld [vmem:[%s1504 + $0x70] sm:$0xff]
        %v1520 = vld [vmem:[%s1504 + $0x78] sm:$0xff]
        %v1521 = vld [vmem:[%s1504 + $0x80] sm:$0xff]
        %v1522 = vld [vmem:[%s1504 + $0x88] sm:$0xff]
        %v1523 = vld [vmem:[%s1504 + $0x90] sm:$0xff]
        %v1524 = vld [vmem:[%s1504 + $0x98] sm:$0xff]
        %v1525 = vld [vmem:[%s1504 + $0xa0] sm:$0xff]
        %v1526 = vld [vmem:[%s1504 + $0xa8] sm:$0xff]
        %v1527 = vld [vmem:[%s1504 + $0xb0] sm:$0xff]
        %v1528 = vld [vmem:[%s1504 + $0xb8] sm:$0xff]
        %v1529 = vld [vmem:[%s1504 + $0xc0] sm:$0xff]
        %v1530 = vld [vmem:[%s1504 + $0xc8] sm:$0xff]
        %v1531 = vld [vmem:[%s1504 + $0xd0] sm:$0xff]
        %v1532 = vld [vmem:[%s1504 + $0xd8] sm:$0xff]
        %v1533 = vld [vmem:[%s1504 + $0xe0] sm:$0xff]
        %v1534 = vld [vmem:[%s1504 + $0xe8] sm:$0xff]
        %v1535 = vld [vmem:[%s1504 + $0xf0] sm:$0xff]
        %v1536 = vld [vmem:[%s1504 + $0xf8] sm:$0xff]
        %v1537 = vld [vmem:[%s1504 + $0x100] sm:$0xff]
        %v1538 = vld [vmem:[%s1504 + $0x108] sm:$0xff]
        %v1539 = vld [vmem:[%s1504 + $0x110] sm:$0xff]
        %v1540 = vld [vmem:[%s1504 + $0x118] sm:$0xff]
        %v1541 = vld [vmem:[%s1504 + $0x120] sm:$0xff]
        %v1542 = vld [vmem:[%s1504 + $0x128] sm:$0xff]
        %v1543 = vld [vmem:[%s1504 + $0x130] sm:$0xff]
        %v1544 = vld [vmem:[%s1504 + $0x138] sm:$0xff]
        %v1545 = vld [vmem:[%s1504 + $0x140] sm:$0xff]
        %v1546 = vld [vmem:[%s1504 + $0x148] sm:$0xff]
        %v1551 = vrot.slane %v1458, 1
        %v1552 = vrot.slane %v1460, 1
        %v1553 = vsel %vm409, %v1551, %v1552
        %v1554 = vrot.slane %v1459, 1
        %v1555 = vrot.slane %v1461, 1
        %v1556 = vsel %vm409, %v1554, %v1555
        %v1559 = vsel %vm1159, %v1556, 0
        %v1561 = vsel %vm1159, %v1555, 0
        %1563 = vmatprep.subr.mxu0 %v1506
        %1564 = vmatpush1.msra.mxu0 %v1505
        %1565 = vmatprep.subr.mxu0 %v1508
        %1566 = vmatpush1.msra.mxu0 %v1507
        %1567 = vmatprep.subr.mxu0 %v1510
        %1568 = vmatpush1.msra.mxu0 %v1509
        %1569 = vmatprep.subr.mxu0 %v1512
        %1570 = vmatpush1.msra.mxu0 %v1511
        %1571 = vmatprep.subr.mxu0 %v1514
        %1572 = vmatpush1.msra.mxu0 %v1513
        %1573 = vmatprep.subr.mxu0 %v1516
        %1574 = vmatpush1.msra.mxu0 %v1515
        %1575 = vmatprep.subr.mxu0 %v1518
        %1576 = vmatpush1.msra.mxu0 %v1517
        %1577 = vmatprep.subr.mxu0 %v1520
        %1578 = vmatpush1.msra.mxu0 %v1519
        %1579 = vmatprep.subr.mxu0 %v1522
        %1580 = vmatpush1.msra.mxu0 %v1521
        %1581 = vmatprep.subr.mxu0 %v1524
        %1582 = vmatpush1.msra.mxu0 %v1523
        %1583 = vmatprep.subr.mxu0 %v1526
        %1584 = vmatpush1.msra.mxu0 %v1525
        %1585 = vmatprep.subr.mxu0 %v1528
        %1586 = vmatpush1.msra.mxu0 %v1527
        %1587 = vmatprep.subr.mxu0 %v1530
        %1588 = vmatpush1.msra.mxu0 %v1529
        %1589 = vmatprep.subr.mxu0 %v1532
        %1590 = vmatpush1.msra.mxu0 %v1531
        %1591 = vmatprep.subr.mxu0 %v1534
        %1592 = vmatpush1.msra.mxu0 %v1533
        %1593 = vmatprep.subr.mxu0 %v1536
        %1594 = vmatpush1.msra.mxu0 %v1535
        %1595 = vmatprep.subr.mxu0 %v1538
        %1596 = vmatpush1.msra.mxu0 %v1537
        %1597 = vmatprep.subr.mxu0 %v1540
        %1598 = vmatpush1.msra.mxu0 %v1539
        %1599 = vmatprep.subr.mxu0 %v1542
        %1600 = vmatpush1.msra.mxu0 %v1541
        %1601 = vmatprep.subr.mxu0 %v1544
        %1602 = vmatpush1.msra.mxu0 %v1543
        %1603 = vmatprep.subr.mxu0 %v1546
        %1604 = vmatpush1.msra.mxu0 %v1545
        %1605 = vmatprep.subr.mxu0 0.0
        %1606 = vmatpush1.msra.mxu0 0.0
        %1607 = vmatprep.subr.mxu0 0.0
        %1608 = vmatpush1.msra.mxu0 0.0
        %1609 = vmatprep.subr.mxu0 0.0
        %1610 = vmatpush1.msra.mxu0 0.0
        %1611 = vmatprep.subr.mxu0 0.0
        %1612 = vmatpush1.msra.mxu0 0.0
        %1613 = vmatprep.subr.mxu0 0.0
        %1614 = vmatpush1.msra.mxu0 0.0
        %1615 = vmatprep.subr.mxu0 0.0
        %1616 = vmatpush1.msra.mxu0 0.0
        %1617 = vmatprep.subr.mxu0 0.0
        %1618 = vmatpush1.msra.mxu0 0.0
        %1619 = vmatprep.subr.mxu0 0.0
        %1620 = vmatpush1.msra.mxu0 0.0
        %1621 = vmatprep.subr.mxu0 0.0
        %1622 = vmatpush1.msra.mxu0 0.0
        %1623 = vmatprep.subr.mxu0 0.0
        %1624 = vmatpush1.msra.mxu0 0.0
        %1625 = vmatprep.subr.mxu0 0.0
        %1626 = vmatpush1.msra.mxu0 0.0
        %1627 = vmatprep.mubr.f32.mxu0 %v1559
        %1628 = vmatmul.mubr.f32.gmra.mrb[0].mxu0 %v1553
        %v1629 = vpop.f32.mrb[0].mxu0
        %v1630 = vadd.f32 0.0, %v1629
        %v1631 = vpop.f32.mrb[0].mxu0
        %v1632 = vadd.f32 0.0, %v1631
        %1633 = vmatprep.mubr.f32.mxu0 %v1561
        %1634 = vmatmul.mubr.f32.gmra.mrb[0].mxu0 %v1552
        %v1635 = vpop.f32.mrb[0].mxu0
        %v1636 = vadd.f32 0.0, %v1635
        %v1637 = vpop.f32.mrb[0].mxu0
        %v1638 = vadd.f32 0.0, %v1637
        %1639 = vdwg.mxu0
        %v1640 = vsel %vm1159, %v1459, 0
        %v1642 = vsel %vm1159, %v1461, 0
        %1644 = vmatprep.subr.mxu0 %v1463
        %1645 = vmatpush1.msra.mxu0 %v1462
        %1646 = vmatprep.subr.mxu0 %v1465
        %1647 = vmatpush1.msra.mxu0 %v1464
        %1648 = vmatprep.subr.mxu0 %v1467
        %1649 = vmatpush1.msra.mxu0 %v1466
        %1650 = vmatprep.subr.mxu0 %v1469
        %1651 = vmatpush1.msra.mxu0 %v1468
        %1652 = vmatprep.subr.mxu0 %v1471
        %1653 = vmatpush1.msra.mxu0 %v1470
        %1654 = vmatprep.subr.mxu0 %v1473
        %1655 = vmatpush1.msra.mxu0 %v1472
        %1656 = vmatprep.subr.mxu0 %v1475
        %1657 = vmatpush1.msra.mxu0 %v1474
        %1658 = vmatprep.subr.mxu0 %v1477
        %1659 = vmatpush1.msra.mxu0 %v1476
        %1660 = vmatprep.subr.mxu0 %v1479
        %1661 = vmatpush1.msra.mxu0 %v1478
        %1662 = vmatprep.subr.mxu0 %v1481
        %1663 = vmatpush1.msra.mxu0 %v1480
        %1664 = vmatprep.subr.mxu0 %v1483
        %1665 = vmatpush1.msra.mxu0 %v1482
        %1666 = vmatprep.subr.mxu0 %v1485
        %1667 = vmatpush1.msra.mxu0 %v1484
        %1668 = vmatprep.subr.mxu0 %v1487
        %1669 = vmatpush1.msra.mxu0 %v1486
        %1670 = vmatprep.subr.mxu0 %v1489
        %1671 = vmatpush1.msra.mxu0 %v1488
        %1672 = vmatprep.subr.mxu0 %v1491
        %1673 = vmatpush1.msra.mxu0 %v1490
        %1674 = vmatprep.subr.mxu0 %v1493
        %1675 = vmatpush1.msra.mxu0 %v1492
        %1676 = vmatprep.subr.mxu0 %v1495
        %1677 = vmatpush1.msra.mxu0 %v1494
        %1678 = vmatprep.subr.mxu0 %v1497
        %1679 = vmatpush1.msra.mxu0 %v1496
        %1680 = vmatprep.subr.mxu0 %v1499
        %1681 = vmatpush1.msra.mxu0 %v1498
        %1682 = vmatprep.subr.mxu0 %v1501
        %1683 = vmatpush1.msra.mxu0 %v1500
        %1684 = vmatprep.subr.mxu0 %v1503
        %1685 = vmatpush1.msra.mxu0 %v1502
        %1686 = vmatprep.subr.mxu0 0.0
        %1687 = vmatpush1.msra.mxu0 0.0
        %1688 = vmatprep.subr.mxu0 0.0
        %1689 = vmatpush1.msra.mxu0 0.0
        %1690 = vmatprep.subr.mxu0 0.0
        %1691 = vmatpush1.msra.mxu0 0.0
        %1692 = vmatprep.subr.mxu0 0.0
        %1693 = vmatpush1.msra.mxu0 0.0
        %1694 = vmatprep.subr.mxu0 0.0
        %1695 = vmatpush1.msra.mxu0 0.0
        %1696 = vmatprep.subr.mxu0 0.0
        %1697 = vmatpush1.msra.mxu0 0.0
        %1698 = vmatprep.subr.mxu0 0.0
        %1699 = vmatpush1.msra.mxu0 0.0
        %1700 = vmatprep.subr.mxu0 0.0
        %1701 = vmatpush1.msra.mxu0 0.0
        %1702 = vmatprep.subr.mxu0 0.0
        %1703 = vmatpush1.msra.mxu0 0.0
        %1704 = vmatprep.subr.mxu0 0.0
        %1705 = vmatpush1.msra.mxu0 0.0
        %1706 = vmatprep.subr.mxu0 0.0
        %1707 = vmatpush1.msra.mxu0 0.0
        %1708 = vmatprep.mubr.f32.mxu0 %v1640
        %1709 = vmatmul.mubr.f32.gmra.mrb[0].mxu0 %v1458
        %v1710 = vpop.f32.mrb[0].mxu0
        %v1711 = vadd.f32 %v1630, %v1710
        %v1712 = vpop.f32.mrb[0].mxu0
        %v1713 = vadd.f32 %v1632, %v1712
        %1714 = vmatprep.mubr.f32.mxu0 %v1642
        %1715 = vmatmul.mubr.f32.gmra.mrb[0].mxu0 %v1460
        %v1716 = vpop.f32.mrb[0].mxu0
        %v1717 = vadd.f32 %v1636, %v1716
        %v1718 = vpop.f32.mrb[0].mxu0
        %v1719 = vadd.f32 %v1638, %v1718
        %1720 = vdwg.mxu0
        %s1721 = scalar_lea.vmem %s3, 672
        %v1722 = vld [vmem:[%s1721] sm:$0xff]
        %v1723 = vld [vmem:[%s1721 + $0x8] sm:$0xff]
        %v1724 = vld [vmem:[%s1721 + $0x10] sm:$0xff]
        %v1725 = vld [vmem:[%s1721 + $0x18] sm:$0xff]
        %v1726 = vld [vmem:[%s1721 + $0x20] sm:$0xff]
        %v1727 = vld [vmem:[%s1721 + $0x28] sm:$0xff]
        %v1728 = vld [vmem:[%s1721 + $0x30] sm:$0xff]
        %v1729 = vld [vmem:[%s1721 + $0x38] sm:$0xff]
        %v1730 = vld [vmem:[%s1721 + $0x40] sm:$0xff]
        %v1731 = vld [vmem:[%s1721 + $0x48] sm:$0xff]
        %v1732 = vld [vmem:[%s1721 + $0x50] sm:$0xff]
        %v1733 = vld [vmem:[%s1721 + $0x58] sm:$0xff]
        %v1734 = vld [vmem:[%s1721 + $0x60] sm:$0xff]
        %v1735 = vld [vmem:[%s1721 + $0x68] sm:$0xff]
        %v1736 = vld [vmem:[%s1721 + $0x70] sm:$0xff]
        %v1737 = vld [vmem:[%s1721 + $0x78] sm:$0xff]
        %v1738 = vld [vmem:[%s1721 + $0x80] sm:$0xff]
        %v1739 = vld [vmem:[%s1721 + $0x88] sm:$0xff]
        %v1740 = vld [vmem:[%s1721 + $0x90] sm:$0xff]
        %v1741 = vld [vmem:[%s1721 + $0x98] sm:$0xff]
        %v1742 = vld [vmem:[%s1721 + $0xa0] sm:$0xff]
        %v1743 = vld [vmem:[%s1721 + $0xa8] sm:$0xff]
        %v1744 = vld [vmem:[%s1721 + $0xb0] sm:$0xff]
        %v1745 = vld [vmem:[%s1721 + $0xb8] sm:$0xff]
        %v1746 = vld [vmem:[%s1721 + $0xc0] sm:$0xff]
        %v1747 = vld [vmem:[%s1721 + $0xc8] sm:$0xff]
        %v1748 = vld [vmem:[%s1721 + $0xd0] sm:$0xff]
        %v1749 = vld [vmem:[%s1721 + $0xd8] sm:$0xff]
        %v1750 = vld [vmem:[%s1721 + $0xe0] sm:$0xff]
        %v1751 = vld [vmem:[%s1721 + $0xe8] sm:$0xff]
        %v1752 = vld [vmem:[%s1721 + $0xf0] sm:$0xff]
        %v1753 = vld [vmem:[%s1721 + $0xf8] sm:$0xff]
        %v1754 = vld [vmem:[%s1721 + $0x100] sm:$0xff]
        %v1755 = vld [vmem:[%s1721 + $0x108] sm:$0xff]
        %v1756 = vld [vmem:[%s1721 + $0x110] sm:$0xff]
        %v1757 = vld [vmem:[%s1721 + $0x118] sm:$0xff]
        %v1758 = vld [vmem:[%s1721 + $0x120] sm:$0xff]
        %v1759 = vld [vmem:[%s1721 + $0x128] sm:$0xff]
        %v1760 = vld [vmem:[%s1721 + $0x130] sm:$0xff]
        %v1761 = vld [vmem:[%s1721 + $0x138] sm:$0xff]
        %v1762 = vld [vmem:[%s1721 + $0x140] sm:$0xff]
        %v1763 = vld [vmem:[%s1721 + $0x148] sm:$0xff]
        %v1764 = vrot.slane %v1458, 2
        %v1765 = vrot.slane %v1460, 2
        %v1766 = vsel %vm621, %v1764, %v1765
        %v1767 = vrot.slane %v1459, 2
        %v1768 = vrot.slane %v1461, 2
        %v1769 = vsel %vm621, %v1767, %v1768
        %v1772 = vsel %vm1159, %v1769, 0
        %v1774 = vsel %vm1159, %v1768, 0
        %1776 = vmatprep.subr.mxu0 %v1723
        %1777 = vmatpush1.msra.mxu0 %v1722
        %1778 = vmatprep.subr.mxu0 %v1725
        %1779 = vmatpush1.msra.mxu0 %v1724
        %1780 = vmatprep.subr.mxu0 %v1727
        %1781 = vmatpush1.msra.mxu0 %v1726
        %1782 = vmatprep.subr.mxu0 %v1729
        %1783 = vmatpush1.msra.mxu0 %v1728
        %1784 = vmatprep.subr.mxu0 %v1731
        %1785 = vmatpush1.msra.mxu0 %v1730
        %1786 = vmatprep.subr.mxu0 %v1733
        %1787 = vmatpush1.msra.mxu0 %v1732
        %1788 = vmatprep.subr.mxu0 %v1735
        %1789 = vmatpush1.msra.mxu0 %v1734
        %1790 = vmatprep.subr.mxu0 %v1737
        %1791 = vmatpush1.msra.mxu0 %v1736
        %1792 = vmatprep.subr.mxu0 %v1739
        %1793 = vmatpush1.msra.mxu0 %v1738
        %1794 = vmatprep.subr.mxu0 %v1741
        %1795 = vmatpush1.msra.mxu0 %v1740
        %1796 = vmatprep.subr.mxu0 %v1743
        %1797 = vmatpush1.msra.mxu0 %v1742
        %1798 = vmatprep.subr.mxu0 %v1745
        %1799 = vmatpush1.msra.mxu0 %v1744
        %1800 = vmatprep.subr.mxu0 %v1747
        %1801 = vmatpush1.msra.mxu0 %v1746
        %1802 = vmatprep.subr.mxu0 %v1749
        %1803 = vmatpush1.msra.mxu0 %v1748
        %1804 = vmatprep.subr.mxu0 %v1751
        %1805 = vmatpush1.msra.mxu0 %v1750
        %1806 = vmatprep.subr.mxu0 %v1753
        %1807 = vmatpush1.msra.mxu0 %v1752
        %1808 = vmatprep.subr.mxu0 %v1755
        %1809 = vmatpush1.msra.mxu0 %v1754
        %1810 = vmatprep.subr.mxu0 %v1757
        %1811 = vmatpush1.msra.mxu0 %v1756
        %1812 = vmatprep.subr.mxu0 %v1759
        %1813 = vmatpush1.msra.mxu0 %v1758
        %1814 = vmatprep.subr.mxu0 %v1761
        %1815 = vmatpush1.msra.mxu0 %v1760
        %1816 = vmatprep.subr.mxu0 %v1763
        %1817 = vmatpush1.msra.mxu0 %v1762
        %1818 = vmatprep.subr.mxu0 0.0
        %1819 = vmatpush1.msra.mxu0 0.0
        %1820 = vmatprep.subr.mxu0 0.0
        %1821 = vmatpush1.msra.mxu0 0.0
        %1822 = vmatprep.subr.mxu0 0.0
        %1823 = vmatpush1.msra.mxu0 0.0
        %1824 = vmatprep.subr.mxu0 0.0
        %1825 = vmatpush1.msra.mxu0 0.0
        %1826 = vmatprep.subr.mxu0 0.0
        %1827 = vmatpush1.msra.mxu0 0.0
        %1828 = vmatprep.subr.mxu0 0.0
        %1829 = vmatpush1.msra.mxu0 0.0
        %1830 = vmatprep.subr.mxu0 0.0
        %1831 = vmatpush1.msra.mxu0 0.0
        %1832 = vmatprep.subr.mxu0 0.0
        %1833 = vmatpush1.msra.mxu0 0.0
        %1834 = vmatprep.subr.mxu0 0.0
        %1835 = vmatpush1.msra.mxu0 0.0
        %1836 = vmatprep.subr.mxu0 0.0
        %1837 = vmatpush1.msra.mxu0 0.0
        %1838 = vmatprep.subr.mxu0 0.0
        %1839 = vmatpush1.msra.mxu0 0.0
        %1840 = vmatprep.mubr.f32.mxu0 %v1772
        %1841 = vmatmul.mubr.f32.gmra.mrb[0].mxu0 %v1766
        %v1842 = vpop.f32.mrb[0].mxu0
        %v1843 = vadd.f32 0.0, %v1842
        %v1844 = vpop.f32.mrb[0].mxu0
        %v1845 = vadd.f32 0.0, %v1844
        %1846 = vmatprep.mubr.f32.mxu0 %v1774
        %1847 = vmatmul.mubr.f32.gmra.mrb[0].mxu0 %v1765
        %v1848 = vpop.f32.mrb[0].mxu0
        %v1849 = vadd.f32 0.0, %v1848
        %v1850 = vpop.f32.mrb[0].mxu0
        %v1851 = vadd.f32 0.0, %v1850
        %1852 = vdwg.mxu0
        %v1853 = vadd.f32 %v1711, %v1843
        %v1854 = vadd.f32 %v1713, %v1845
        %v1855 = vadd.f32 %v1717, %v1849
        %v1856 = vadd.f32 %v1719, %v1851
        %s1857 = scalar_lea.vmem %s3, 1008
        %v1858 = vld [vmem:[%s1857] sm:$0xff]
        %v1859 = vld [vmem:[%s1857 + $0x8] sm:$0xff]
        %v1860 = vld [vmem:[%s1857 + $0x10] sm:$0xff]
        %v1861 = vld [vmem:[%s1857 + $0x18] sm:$0xff]
        %v1862 = vld [vmem:[%s1857 + $0x20] sm:$0xff]
        %v1863 = vld [vmem:[%s1857 + $0x28] sm:$0xff]
        %v1864 = vld [vmem:[%s1857 + $0x30] sm:$0xff]
        %v1865 = vld [vmem:[%s1857 + $0x38] sm:$0xff]
        %v1866 = vld [vmem:[%s1857 + $0x40] sm:$0xff]
        %v1867 = vld [vmem:[%s1857 + $0x48] sm:$0xff]
        %v1868 = vld [vmem:[%s1857 + $0x50] sm:$0xff]
        %v1869 = vld [vmem:[%s1857 + $0x58] sm:$0xff]
        %v1870 = vld [vmem:[%s1857 + $0x60] sm:$0xff]
        %v1871 = vld [vmem:[%s1857 + $0x68] sm:$0xff]
        %v1872 = vld [vmem:[%s1857 + $0x70] sm:$0xff]
        %v1873 = vld [vmem:[%s1857 + $0x78] sm:$0xff]
        %v1874 = vld [vmem:[%s1857 + $0x80] sm:$0xff]
        %v1875 = vld [vmem:[%s1857 + $0x88] sm:$0xff]
        %v1876 = vld [vmem:[%s1857 + $0x90] sm:$0xff]
        %v1877 = vld [vmem:[%s1857 + $0x98] sm:$0xff]
        %v1878 = vld [vmem:[%s1857 + $0xa0] sm:$0xff]
        %v1879 = vld [vmem:[%s1857 + $0xa8] sm:$0xff]
        %v1880 = vld [vmem:[%s1857 + $0xb0] sm:$0xff]
        %v1881 = vld [vmem:[%s1857 + $0xb8] sm:$0xff]
        %v1882 = vld [vmem:[%s1857 + $0xc0] sm:$0xff]
        %v1883 = vld [vmem:[%s1857 + $0xc8] sm:$0xff]
        %v1884 = vld [vmem:[%s1857 + $0xd0] sm:$0xff]
        %v1885 = vld [vmem:[%s1857 + $0xd8] sm:$0xff]
        %v1886 = vld [vmem:[%s1857 + $0xe0] sm:$0xff]
        %v1887 = vld [vmem:[%s1857 + $0xe8] sm:$0xff]
        %v1888 = vld [vmem:[%s1857 + $0xf0] sm:$0xff]
        %v1889 = vld [vmem:[%s1857 + $0xf8] sm:$0xff]
        %v1890 = vld [vmem:[%s1857 + $0x100] sm:$0xff]
        %v1891 = vld [vmem:[%s1857 + $0x108] sm:$0xff]
        %v1892 = vld [vmem:[%s1857 + $0x110] sm:$0xff]
        %v1893 = vld [vmem:[%s1857 + $0x118] sm:$0xff]
        %v1894 = vld [vmem:[%s1857 + $0x120] sm:$0xff]
        %v1895 = vld [vmem:[%s1857 + $0x128] sm:$0xff]
        %v1896 = vld [vmem:[%s1857 + $0x130] sm:$0xff]
        %v1897 = vld [vmem:[%s1857 + $0x138] sm:$0xff]
        %v1898 = vld [vmem:[%s1857 + $0x140] sm:$0xff]
        %v1899 = vld [vmem:[%s1857 + $0x148] sm:$0xff]
        %v1900 = vrot.slane %v1458, 3
        %v1901 = vrot.slane %v1460, 3
        %v1902 = vsel %vm743, %v1900, %v1901
        %v1903 = vrot.slane %v1459, 3
        %v1904 = vrot.slane %v1461, 3
        %v1905 = vsel %vm743, %v1903, %v1904
        %v1908 = vsel %vm1159, %v1905, 0
        %v1910 = vsel %vm1159, %v1904, 0
        %1912 = vmatprep.subr.mxu0 %v1859
        %1913 = vmatpush1.msra.mxu0 %v1858
        %1914 = vmatprep.subr.mxu0 %v1861
        %1915 = vmatpush1.msra.mxu0 %v1860
        %1916 = vmatprep.subr.mxu0 %v1863
        %1917 = vmatpush1.msra.mxu0 %v1862
        %1918 = vmatprep.subr.mxu0 %v1865
        %1919 = vmatpush1.msra.mxu0 %v1864
        %1920 = vmatprep.subr.mxu0 %v1867
        %1921 = vmatpush1.msra.mxu0 %v1866
        %1922 = vmatprep.subr.mxu0 %v1869
        %1923 = vmatpush1.msra.mxu0 %v1868
        %1924 = vmatprep.subr.mxu0 %v1871
        %1925 = vmatpush1.msra.mxu0 %v1870
        %1926 = vmatprep.subr.mxu0 %v1873
        %1927 = vmatpush1.msra.mxu0 %v1872
        %1928 = vmatprep.subr.mxu0 %v1875
        %1929 = vmatpush1.msra.mxu0 %v1874
        %1930 = vmatprep.subr.mxu0 %v1877
        %1931 = vmatpush1.msra.mxu0 %v1876
        %1932 = vmatprep.subr.mxu0 %v1879
        %1933 = vmatpush1.msra.mxu0 %v1878
        %1934 = vmatprep.subr.mxu0 %v1881
        %1935 = vmatpush1.msra.mxu0 %v1880
        %1936 = vmatprep.subr.mxu0 %v1883
        %1937 = vmatpush1.msra.mxu0 %v1882
        %1938 = vmatprep.subr.mxu0 %v1885
        %1939 = vmatpush1.msra.mxu0 %v1884
        %1940 = vmatprep.subr.mxu0 %v1887
        %1941 = vmatpush1.msra.mxu0 %v1886
        %1942 = vmatprep.subr.mxu0 %v1889
        %1943 = vmatpush1.msra.mxu0 %v1888
        %1944 = vmatprep.subr.mxu0 %v1891
        %1945 = vmatpush1.msra.mxu0 %v1890
        %1946 = vmatprep.subr.mxu0 %v1893
        %1947 = vmatpush1.msra.mxu0 %v1892
        %1948 = vmatprep.subr.mxu0 %v1895
        %1949 = vmatpush1.msra.mxu0 %v1894
        %1950 = vmatprep.subr.mxu0 %v1897
        %1951 = vmatpush1.msra.mxu0 %v1896
        %1952 = vmatprep.subr.mxu0 %v1899
        %1953 = vmatpush1.msra.mxu0 %v1898
        %1954 = vmatprep.subr.mxu0 0.0
        %1955 = vmatpush1.msra.mxu0 0.0
        %1956 = vmatprep.subr.mxu0 0.0
        %1957 = vmatpush1.msra.mxu0 0.0
        %1958 = vmatprep.subr.mxu0 0.0
        %1959 = vmatpush1.msra.mxu0 0.0
        %1960 = vmatprep.subr.mxu0 0.0
        %1961 = vmatpush1.msra.mxu0 0.0
        %1962 = vmatprep.subr.mxu0 0.0
        %1963 = vmatpush1.msra.mxu0 0.0
        %1964 = vmatprep.subr.mxu0 0.0
        %1965 = vmatpush1.msra.mxu0 0.0
        %1966 = vmatprep.subr.mxu0 0.0
        %1967 = vmatpush1.msra.mxu0 0.0
        %1968 = vmatprep.subr.mxu0 0.0
        %1969 = vmatpush1.msra.mxu0 0.0
        %1970 = vmatprep.subr.mxu0 0.0
        %1971 = vmatpush1.msra.mxu0 0.0
        %1972 = vmatprep.subr.mxu0 0.0
        %1973 = vmatpush1.msra.mxu0 0.0
        %1974 = vmatprep.subr.mxu0 0.0
        %1975 = vmatpush1.msra.mxu0 0.0
        %1976 = vmatprep.mubr.f32.mxu0 %v1908
        %1977 = vmatmul.mubr.f32.gmra.mrb[0].mxu0 %v1902
        %v1978 = vpop.f32.mrb[0].mxu0
        %v1979 = vadd.f32 0.0, %v1978
        %v1980 = vpop.f32.mrb[0].mxu0
        %v1981 = vadd.f32 0.0, %v1980
        %1982 = vmatprep.mubr.f32.mxu0 %v1910
        %1983 = vmatmul.mubr.f32.gmra.mrb[0].mxu0 %v1901
        %v1984 = vpop.f32.mrb[0].mxu0
        %v1985 = vadd.f32 0.0, %v1984
        %v1986 = vpop.f32.mrb[0].mxu0
        %v1987 = vadd.f32 0.0, %v1986
        %1988 = vdwg.mxu0
        %v1989 = vadd.f32 %v1853, %v1979
        %v1990 = vadd.f32 %v1854, %v1981
        %v1991 = vadd.f32 %v1855, %v1985
        %v1992 = vadd.f32 %v1856, %v1987
        %s1993 = scalar_lea.vmem %s3, 1344
        %v1994 = vld [vmem:[%s1993] sm:$0xff]
        %v1995 = vld [vmem:[%s1993 + $0x8] sm:$0xff]
        %v1996 = vld [vmem:[%s1993 + $0x10] sm:$0xff]
        %v1997 = vld [vmem:[%s1993 + $0x18] sm:$0xff]
        %v1998 = vld [vmem:[%s1993 + $0x20] sm:$0xff]
        %v1999 = vld [vmem:[%s1993 + $0x28] sm:$0xff]
        %v2000 = vld [vmem:[%s1993 + $0x30] sm:$0xff]
        %v2001 = vld [vmem:[%s1993 + $0x38] sm:$0xff]
        %v2002 = vld [vmem:[%s1993 + $0x40] sm:$0xff]
        %v2003 = vld [vmem:[%s1993 + $0x48] sm:$0xff]
        %v2004 = vld [vmem:[%s1993 + $0x50] sm:$0xff]
        %v2005 = vld [vmem:[%s1993 + $0x58] sm:$0xff]
        %v2006 = vld [vmem:[%s1993 + $0x60] sm:$0xff]
        %v2007 = vld [vmem:[%s1993 + $0x68] sm:$0xff]
        %v2008 = vld [vmem:[%s1993 + $0x70] sm:$0xff]
        %v2009 = vld [vmem:[%s1993 + $0x78] sm:$0xff]
        %v2010 = vld [vmem:[%s1993 + $0x80] sm:$0xff]
        %v2011 = vld [vmem:[%s1993 + $0x88] sm:$0xff]
        %v2012 = vld [vmem:[%s1993 + $0x90] sm:$0xff]
        %v2013 = vld [vmem:[%s1993 + $0x98] sm:$0xff]
        %v2014 = vld [vmem:[%s1993 + $0xa0] sm:$0xff]
        %v2015 = vld [vmem:[%s1993 + $0xa8] sm:$0xff]
        %v2016 = vld [vmem:[%s1993 + $0xb0] sm:$0xff]
        %v2017 = vld [vmem:[%s1993 + $0xb8] sm:$0xff]
        %v2018 = vld [vmem:[%s1993 + $0xc0] sm:$0xff]
        %v2019 = vld [vmem:[%s1993 + $0xc8] sm:$0xff]
        %v2020 = vld [vmem:[%s1993 + $0xd0] sm:$0xff]
        %v2021 = vld [vmem:[%s1993 + $0xd8] sm:$0xff]
        %v2022 = vld [vmem:[%s1993 + $0xe0] sm:$0xff]
        %v2023 = vld [vmem:[%s1993 + $0xe8] sm:$0xff]
        %v2024 = vld [vmem:[%s1993 + $0xf0] sm:$0xff]
        %v2025 = vld [vmem:[%s1993 + $0xf8] sm:$0xff]
        %v2026 = vld [vmem:[%s1993 + $0x100] sm:$0xff]
        %v2027 = vld [vmem:[%s1993 + $0x108] sm:$0xff]
        %v2028 = vld [vmem:[%s1993 + $0x110] sm:$0xff]
        %v2029 = vld [vmem:[%s1993 + $0x118] sm:$0xff]
        %v2030 = vld [vmem:[%s1993 + $0x120] sm:$0xff]
        %v2031 = vld [vmem:[%s1993 + $0x128] sm:$0xff]
        %v2032 = vld [vmem:[%s1993 + $0x130] sm:$0xff]
        %v2033 = vld [vmem:[%s1993 + $0x138] sm:$0xff]
        %v2034 = vld [vmem:[%s1993 + $0x140] sm:$0xff]
        %v2035 = vld [vmem:[%s1993 + $0x148] sm:$0xff]
        %v2036 = vrot.slane %v1458, 4
        %v2037 = vrot.slane %v1460, 4
        %v2038 = vsel %vm865, %v2036, %v2037
        %v2039 = vrot.slane %v1459, 4
        %v2040 = vrot.slane %v1461, 4
        %v2041 = vsel %vm865, %v2039, %v2040
        %v2044 = vsel %vm1159, %v2041, 0
        %v2046 = vsel %vm1159, %v2040, 0
        %2048 = vmatprep.subr.mxu0 %v1995
        %2049 = vmatpush1.msra.mxu0 %v1994
        %2050 = vmatprep.subr.mxu0 %v1997
        %2051 = vmatpush1.msra.mxu0 %v1996
        %2052 = vmatprep.subr.mxu0 %v1999
        %2053 = vmatpush1.msra.mxu0 %v1998
        %2054 = vmatprep.subr.mxu0 %v2001
        %2055 = vmatpush1.msra.mxu0 %v2000
        %2056 = vmatprep.subr.mxu0 %v2003
        %2057 = vmatpush1.msra.mxu0 %v2002
        %2058 = vmatprep.subr.mxu0 %v2005
        %2059 = vmatpush1.msra.mxu0 %v2004
        %2060 = vmatprep.subr.mxu0 %v2007
        %2061 = vmatpush1.msra.mxu0 %v2006
        %2062 = vmatprep.subr.mxu0 %v2009
        %2063 = vmatpush1.msra.mxu0 %v2008
        %2064 = vmatprep.subr.mxu0 %v2011
        %2065 = vmatpush1.msra.mxu0 %v2010
        %2066 = vmatprep.subr.mxu0 %v2013
        %2067 = vmatpush1.msra.mxu0 %v2012
        %2068 = vmatprep.subr.mxu0 %v2015
        %2069 = vmatpush1.msra.mxu0 %v2014
        %2070 = vmatprep.subr.mxu0 %v2017
        %2071 = vmatpush1.msra.mxu0 %v2016
        %2072 = vmatprep.subr.mxu0 %v2019
        %2073 = vmatpush1.msra.mxu0 %v2018
        %2074 = vmatprep.subr.mxu0 %v2021
        %2075 = vmatpush1.msra.mxu0 %v2020
        %2076 = vmatprep.subr.mxu0 %v2023
        %2077 = vmatpush1.msra.mxu0 %v2022
        %2078 = vmatprep.subr.mxu0 %v2025
        %2079 = vmatpush1.msra.mxu0 %v2024
        %2080 = vmatprep.subr.mxu0 %v2027
        %2081 = vmatpush1.msra.mxu0 %v2026
        %2082 = vmatprep.subr.mxu0 %v2029
        %2083 = vmatpush1.msra.mxu0 %v2028
        %2084 = vmatprep.subr.mxu0 %v2031
        %2085 = vmatpush1.msra.mxu0 %v2030
        %2086 = vmatprep.subr.mxu0 %v2033
        %2087 = vmatpush1.msra.mxu0 %v2032
        %2088 = vmatprep.subr.mxu0 %v2035
        %2089 = vmatpush1.msra.mxu0 %v2034
        %2090 = vmatprep.subr.mxu0 0.0
        %2091 = vmatpush1.msra.mxu0 0.0
        %2092 = vmatprep.subr.mxu0 0.0
        %2093 = vmatpush1.msra.mxu0 0.0
        %2094 = vmatprep.subr.mxu0 0.0
        %2095 = vmatpush1.msra.mxu0 0.0
        %2096 = vmatprep.subr.mxu0 0.0
        %2097 = vmatpush1.msra.mxu0 0.0
        %2098 = vmatprep.subr.mxu0 0.0
        %2099 = vmatpush1.msra.mxu0 0.0
        %2100 = vmatprep.subr.mxu0 0.0
        %2101 = vmatpush1.msra.mxu0 0.0
        %2102 = vmatprep.subr.mxu0 0.0
        %2103 = vmatpush1.msra.mxu0 0.0
        %2104 = vmatprep.subr.mxu0 0.0
        %2105 = vmatpush1.msra.mxu0 0.0
        %2106 = vmatprep.subr.mxu0 0.0
        %2107 = vmatpush1.msra.mxu0 0.0
        %2108 = vmatprep.subr.mxu0 0.0
        %2109 = vmatpush1.msra.mxu0 0.0
        %2110 = vmatprep.subr.mxu0 0.0
        %2111 = vmatpush1.msra.mxu0 0.0
        %2112 = vmatprep.mubr.f32.mxu0 %v2044
        %2113 = vmatmul.mubr.f32.gmra.mrb[0].mxu0 %v2038
        %v2114 = vpop.f32.mrb[0].mxu0
        %v2115 = vadd.f32 0.0, %v2114
        %v2116 = vpop.f32.mrb[0].mxu0
        %v2117 = vadd.f32 0.0, %v2116
        %2118 = vmatprep.mubr.f32.mxu0 %v2046
        %2119 = vmatmul.mubr.f32.gmra.mrb[0].mxu0 %v2037
        %v2120 = vpop.f32.mrb[0].mxu0
        %v2121 = vadd.f32 0.0, %v2120
        %v2122 = vpop.f32.mrb[0].mxu0
        %v2123 = vadd.f32 0.0, %v2122
        %2124 = vdwg.mxu0
        %v2125 = vadd.f32 %v1989, %v2115
        %v2126 = vadd.f32 %v1990, %v2117
        %v2127 = vadd.f32 %v1991, %v2121
        %v2128 = vadd.f32 %v1992, %v2123
        %v2129 = vld [vmem:[%s4] sm:$0x3]
        %v2131 = vlaneseq
        %v2132 = vshrl.u32 %v2131, 7
        %v2133 = vsub.s32 0, %v2132
        %v2134 = vrot.slane %v2129, %v2133
        %v2135 = vlaneseq
        %v2136 = vshrl.u32 %v2135, 7
        %v2137 = vsub.s32 1, %v2136
        %v2138 = vrot.slane %v2129, %v2137
        %v2141 = vadd.f32 %v2125, %v2134
        %v2142 = vadd.f32 %v2126, %v2138
        %v2143 = vadd.f32 %v2127, %v2134
        %v2144 = vadd.f32 %v2128, %v2138
        %v2145 = vmax.f32 %v2141, 0.0
        %v2146 = vmax.f32 %v2142, 0.0
        %v2147 = vmax.f32 %v2143, 0.0
        %v2148 = vmax.f32 %v2144, 0.0
        %v2150 = vsel %vm417, %v2146, 0
        %v2153 = vsel %vm417, %v2148, 0
        %2155 = vmatprep.subr.mxu0 %v1118
        %2156 = vmatpush1.msra.mxu0 %v1117
        %2157 = vmatprep.subr.mxu0 %v1120
        %2158 = vmatpush1.msra.mxu0 %v1119
        %2159 = vmatprep.subr.mxu0 %v1122
        %2160 = vmatpush1.msra.mxu0 %v1121
        %2161 = vmatprep.subr.mxu0 %v1124
        %2162 = vmatpush1.msra.mxu0 %v1123
        %2163 = vmatprep.subr.mxu0 %v1126
        %2164 = vmatpush1.msra.mxu0 %v1125
        %2165 = vmatprep.subr.mxu0 %v1128
        %2166 = vmatpush1.msra.mxu0 %v1127
        %2167 = vmatprep.subr.mxu0 %v1130
        %2168 = vmatpush1.msra.mxu0 %v1129
        %2169 = vmatprep.subr.mxu0 %v1132
        %2170 = vmatpush1.msra.mxu0 %v1131
        %2171 = vmatprep.subr.mxu0 %v1134
        %2172 = vmatpush1.msra.mxu0 %v1133
        %2173 = vmatprep.subr.mxu0 %v1136
        %2174 = vmatpush1.msra.mxu0 %v1135
        %2175 = vmatprep.subr.mxu0 %v1138
        %2176 = vmatpush1.msra.mxu0 %v1137
        %2177 = vmatprep.subr.mxu0 %v1140
        %2178 = vmatpush1.msra.mxu0 %v1139
        %2179 = vmatprep.subr.mxu0 %v1142
        %2180 = vmatpush1.msra.mxu0 %v1141
        %2181 = vmatprep.subr.mxu0 %v1144
        %2182 = vmatpush1.msra.mxu0 %v1143
        %2183 = vmatprep.subr.mxu0 %v1146
        %2184 = vmatpush1.msra.mxu0 %v1145
        %2185 = vmatprep.subr.mxu0 %v1148
        %2186 = vmatpush1.msra.mxu0 %v1147
        %2187 = vmatprep.subr.mxu0 %v1150
        %2188 = vmatpush1.msra.mxu0 %v1149
        %2189 = vmatprep.subr.mxu0 %v1152
        %2190 = vmatpush1.msra.mxu0 %v1151
        %2191 = vmatprep.subr.mxu0 %v1154
        %2192 = vmatpush1.msra.mxu0 %v1153
        %2193 = vmatprep.subr.mxu0 %v1156
        %2194 = vmatpush1.msra.mxu0 %v1155
        %2195 = vmatprep.subr.mxu0 0.0
        %2196 = vmatpush1.msra.mxu0 0.0
        %2197 = vmatprep.subr.mxu0 0.0
        %2198 = vmatpush1.msra.mxu0 0.0
        %2199 = vmatprep.subr.mxu0 0.0
        %2200 = vmatpush1.msra.mxu0 0.0
        %2201 = vmatprep.subr.mxu0 0.0
        %2202 = vmatpush1.msra.mxu0 0.0
        %2203 = vmatprep.subr.mxu0 0.0
        %2204 = vmatpush1.msra.mxu0 0.0
        %2205 = vmatprep.subr.mxu0 0.0
        %2206 = vmatpush1.msra.mxu0 0.0
        %2207 = vmatprep.subr.mxu0 0.0
        %2208 = vmatpush1.msra.mxu0 0.0
        %2209 = vmatprep.subr.mxu0 0.0
        %2210 = vmatpush1.msra.mxu0 0.0
        %2211 = vmatprep.subr.mxu0 0.0
        %2212 = vmatpush1.msra.mxu0 0.0
        %2213 = vmatprep.subr.mxu0 0.0
        %2214 = vmatpush1.msra.mxu0 0.0
        %2215 = vmatprep.subr.mxu0 0.0
        %2216 = vmatpush1.msra.mxu0 0.0
        %2217 = vmatprep.subr.mxu0 0.0
        %2218 = vmatpush1.msra.mxu0 0.0
        %2219 = vmatprep.mubr.f32.mxu0 %v2150
        %2220 = vmatmul.mubr.f32.gmra.mrb[0].mxu0 %v2145
        %v2221 = vpop.f32.mrb[0].mxu0
        %v2222 = vadd.f32 0.0, %v2221
        %v2223 = vpop.f32.mrb[0].mxu0
        %v2224 = vadd.f32 0.0, %v2223
        %2225 = vmatprep.mubr.f32.mxu0 %v2153
        %2226 = vmatmul.mubr.f32.gmra.mrb[0].mxu0 %v2147
        %v2227 = vpop.f32.mrb[0].mxu0
        %v2228 = vadd.f32 0.0, %v2227
        %v2229 = vpop.f32.mrb[0].mxu0
        %v2230 = vadd.f32 0.0, %v2229
        %2231 = vdwg.mxu0
        %v2232 = vmax.f32 %v2145, %v2222
        %v2233 = vmax.f32 %v2146, %v2224
        %v2234 = vmax.f32 %v2147, %v2228
        %v2235 = vmax.f32 %v2148, %v2230
        %vm2236 = vcmask 80896
        %v2237 = vsel %vm2236, %v1275, 0
        %vm2239 = vcmask 1041408
        %v2241 = vsel %vm2239, %v2234, 0
        %v2244 = vsel %vm2239, %v2235, 0
        %2246 = vmatprep.subr.mxu0 %v2233
        %2247 = vmatpush1.msra.mxu0 %v2232
        %2248 = vmatprep.subr.mxu0 %v2244
        %2249 = vmatpush1.msra.mxu0 %v2241
        %2250 = vmatprep.subr.mxu0 0.0
        %2251 = vmatpush1.msra.mxu0 0.0
        %2252 = vmatprep.subr.mxu0 0.0
        %2253 = vmatpush1.msra.mxu0 0.0
        %2254 = vmatprep.subr.mxu0 0.0
        %2255 = vmatpush1.msra.mxu0 0.0
        %2256 = vmatprep.subr.mxu0 0.0
        %2257 = vmatpush1.msra.mxu0 0.0
        %2258 = vmatprep.subr.mxu0 0.0
        %2259 = vmatpush1.msra.mxu0 0.0
        %2260 = vmatprep.subr.mxu0 0.0
        %2261 = vmatpush1.msra.mxu0 0.0
        %2262 = vmatprep.subr.mxu0 0.0
        %2263 = vmatpush1.msra.mxu0 0.0
        %2264 = vmatprep.subr.mxu0 0.0
        %2265 = vmatpush1.msra.mxu0 0.0
        %2266 = vmatprep.subr.mxu0 0.0
        %2267 = vmatpush1.msra.mxu0 0.0
        %2268 = vmatprep.subr.mxu0 0.0
        %2269 = vmatpush1.msra.mxu0 0.0
        %2270 = vmatprep.subr.mxu0 0.0
        %2271 = vmatpush1.msra.mxu0 0.0
        %2272 = vmatprep.subr.mxu0 0.0
        %2273 = vmatpush1.msra.mxu0 0.0
        %2274 = vmatprep.subr.mxu0 0.0
        %2275 = vmatpush1.msra.mxu0 0.0
        %2276 = vmatprep.subr.mxu0 0.0
        %2277 = vmatpush1.msra.mxu0 0.0
        %2278 = vmatprep.subr.mxu0 0.0
        %2279 = vmatpush1.msra.mxu0 0.0
        %2280 = vmatprep.subr.mxu0 0.0
        %2281 = vmatpush1.msra.mxu0 0.0
        %2282 = vmatprep.subr.mxu0 0.0
        %2283 = vmatpush1.msra.mxu0 0.0
        %2284 = vmatprep.subr.mxu0 0.0
        %2285 = vmatpush1.msra.mxu0 0.0
        %2286 = vmatprep.subr.mxu0 0.0
        %2287 = vmatpush1.msra.mxu0 0.0
        %2288 = vmatprep.subr.mxu0 0.0
        %2289 = vmatpush1.msra.mxu0 0.0
        %2290 = vmatprep.subr.mxu0 0.0
        %2291 = vmatpush1.msra.mxu0 0.0
        %2292 = vmatprep.subr.mxu0 0.0
        %2293 = vmatpush1.msra.mxu0 0.0
        %2294 = vmatprep.subr.mxu0 0.0
        %2295 = vmatpush1.msra.mxu0 0.0
        %2296 = vmatprep.subr.mxu0 0.0
        %2297 = vmatpush1.msra.mxu0 0.0
        %2298 = vmatprep.subr.mxu0 0.0
        %2299 = vmatpush1.msra.mxu0 0.0
        %2300 = vmatprep.subr.mxu0 0.0
        %2301 = vmatpush1.msra.mxu0 0.0
        %2302 = vmatprep.subr.mxu0 0.0
        %2303 = vmatpush1.msra.mxu0 0.0
        %2304 = vmatprep.subr.mxu0 0.0
        %2305 = vmatpush1.msra.mxu0 0.0
        %2306 = vmatprep.subr.mxu0 0.0
        %2307 = vmatpush1.msra.mxu0 0.0
        %2308 = vmatprep.subr.mxu0 0.0
        %2309 = vmatpush1.msra.mxu0 0.0
        %2310 = vmatprep.mubr.f32.mxu0 0.0
        %2311 = vmatmul.mubr.f32.gmra.mrb[0].mxu0 %v2237
        %v2312 = vpop.f32.mrb[0].mxu0
        %v2313 = vadd.f32 0.0, %v2312
        %v2314 = vpop.f32.mrb[0].mxu0
        %v2315 = vadd.f32 0.0, %v2314
        %2316 = vdwg.mxu0
        %v2317 = vsel %vm2236, %v1283, 0
        %2319 = vmatprep.subr.mxu0 %v2233
        %2320 = vmatpush1.msra.mxu0 %v2232
        %2321 = vmatprep.subr.mxu0 %v2244
        %2322 = vmatpush1.msra.mxu0 %v2241
        %2323 = vmatprep.subr.mxu0 0.0
        %2324 = vmatpush1.msra.mxu0 0.0
        %2325 = vmatprep.subr.mxu0 0.0
        %2326 = vmatpush1.msra.mxu0 0.0
        %2327 = vmatprep.subr.mxu0 0.0
        %2328 = vmatpush1.msra.mxu0 0.0
        %2329 = vmatprep.subr.mxu0 0.0
        %2330 = vmatpush1.msra.mxu0 0.0
        %2331 = vmatprep.subr.mxu0 0.0
        %2332 = vmatpush1.msra.mxu0 0.0
        %2333 = vmatprep.subr.mxu0 0.0
        %2334 = vmatpush1.msra.mxu0 0.0
        %2335 = vmatprep.subr.mxu0 0.0
        %2336 = vmatpush1.msra.mxu0 0.0
        %2337 = vmatprep.subr.mxu0 0.0
        %2338 = vmatpush1.msra.mxu0 0.0
        %2339 = vmatprep.subr.mxu0 0.0
        %2340 = vmatpush1.msra.mxu0 0.0
        %2341 = vmatprep.subr.mxu0 0.0
        %2342 = vmatpush1.msra.mxu0 0.0
        %2343 = vmatprep.subr.mxu0 0.0
        %2344 = vmatpush1.msra.mxu0 0.0
        %2345 = vmatprep.subr.mxu0 0.0
        %2346 = vmatpush1.msra.mxu0 0.0
        %2347 = vmatprep.subr.mxu0 0.0
        %2348 = vmatpush1.msra.mxu0 0.0
        %2349 = vmatprep.subr.mxu0 0.0
        %2350 = vmatpush1.msra.mxu0 0.0
        %2351 = vmatprep.subr.mxu0 0.0
        %2352 = vmatpush1.msra.mxu0 0.0
        %2353 = vmatprep.subr.mxu0 0.0
        %2354 = vmatpush1.msra.mxu0 0.0
        %2355 = vmatprep.subr.mxu0 0.0
        %2356 = vmatpush1.msra.mxu0 0.0
        %2357 = vmatprep.subr.mxu0 0.0
        %2358 = vmatpush1.msra.mxu0 0.0
        %2359 = vmatprep.subr.mxu0 0.0
        %2360 = vmatpush1.msra.mxu0 0.0
        %2361 = vmatprep.subr.mxu0 0.0
        %2362 = vmatpush1.msra.mxu0 0.0
        %2363 = vmatprep.subr.mxu0 0.0
        %2364 = vmatpush1.msra.mxu0 0.0
        %2365 = vmatprep.subr.mxu0 0.0
        %2366 = vmatpush1.msra.mxu0 0.0
        %2367 = vmatprep.subr.mxu0 0.0
        %2368 = vmatpush1.msra.mxu0 0.0
        %2369 = vmatprep.subr.mxu0 0.0
        %2370 = vmatpush1.msra.mxu0 0.0
        %2371 = vmatprep.subr.mxu0 0.0
        %2372 = vmatpush1.msra.mxu0 0.0
        %2373 = vmatprep.subr.mxu0 0.0
        %2374 = vmatpush1.msra.mxu0 0.0
        %2375 = vmatprep.subr.mxu0 0.0
        %2376 = vmatpush1.msra.mxu0 0.0
        %2377 = vmatprep.subr.mxu0 0.0
        %2378 = vmatpush1.msra.mxu0 0.0
        %2379 = vmatprep.subr.mxu0 0.0
        %2380 = vmatpush1.msra.mxu0 0.0
        %2381 = vmatprep.subr.mxu0 0.0
        %2382 = vmatpush1.msra.mxu0 0.0
        %2383 = vmatprep.mubr.f32.mxu0 0.0
        %2384 = vmatmul.mubr.f32.gmra.mrb[0].mxu0 %v2317
        %v2385 = vpop.f32.mrb[0].mxu0
        %v2386 = vadd.f32 0.0, %v2385
        %v2387 = vpop.f32.mrb[0].mxu0
        %v2388 = vadd.f32 0.0, %v2387
        %2389 = vdwg.mxu0
        %v2390 = vmax.f32 %v2313, %v2386
        %v2391 = vmax.f32 %v2315, %v2388
        %v2392 = vld [vmem:[%s5] sm:$0xff]
        %v2393 = vld [vmem:[%s5 + $0x8] sm:$0xff]
        %v2394 = vld [vmem:[%s5 + $0x10] sm:$0xff]
        %v2395 = vld [vmem:[%s5 + $0x18] sm:$0xff]
        %v2396 = vld [vmem:[%s5 + $0x20] sm:$0xff]
        %v2397 = vld [vmem:[%s5 + $0x28] sm:$0xff]
        %v2398 = vld [vmem:[%s5 + $0x30] sm:$0xff]
        %v2399 = vld [vmem:[%s5 + $0x38] sm:$0xff]
        %v2400 = vld [vmem:[%s5 + $0x40] sm:$0xff]
        %v2401 = vld [vmem:[%s5 + $0x48] sm:$0xff]
        %v2402 = vld [vmem:[%s5 + $0x50] sm:$0xff]
        %v2403 = vld [vmem:[%s5 + $0x58] sm:$0xff]
        %v2404 = vld [vmem:[%s5 + $0x60] sm:$0xff]
        %v2405 = vld [vmem:[%s5 + $0x68] sm:$0xff]
        %v2406 = vld [vmem:[%s5 + $0x70] sm:$0xff]
        %v2407 = vld [vmem:[%s5 + $0x78] sm:$0xff]
        %v2408 = vld [vmem:[%s5 + $0x80] sm:$0xff]
        %v2409 = vld [vmem:[%s5 + $0x88] sm:$0xff]
        %v2410 = vld [vmem:[%s5 + $0x90] sm:$0xff]
        %v2411 = vld [vmem:[%s5 + $0x98] sm:$0xff]
        %s2412 = scalar_lea.vmem %s5, 160
        %v2413 = vld [vmem:[%s2412] sm:$0xff]
        %v2414 = vld [vmem:[%s2412 + $0x8] sm:$0xff]
        %v2415 = vld [vmem:[%s2412 + $0x10] sm:$0xff]
        %v2416 = vld [vmem:[%s2412 + $0x18] sm:$0xff]
        %v2417 = vld [vmem:[%s2412 + $0x20] sm:$0xff]
        %v2418 = vld [vmem:[%s2412 + $0x28] sm:$0xff]
        %v2419 = vld [vmem:[%s2412 + $0x30] sm:$0xff]
        %v2420 = vld [vmem:[%s2412 + $0x38] sm:$0xff]
        %v2421 = vld [vmem:[%s2412 + $0x40] sm:$0xff]
        %v2422 = vld [vmem:[%s2412 + $0x48] sm:$0xff]
        %v2423 = vld [vmem:[%s2412 + $0x50] sm:$0xff]
        %v2424 = vld [vmem:[%s2412 + $0x58] sm:$0xff]
        %v2425 = vld [vmem:[%s2412 + $0x60] sm:$0xff]
        %v2426 = vld [vmem:[%s2412 + $0x68] sm:$0xff]
        %v2427 = vld [vmem:[%s2412 + $0x70] sm:$0xff]
        %v2428 = vld [vmem:[%s2412 + $0x78] sm:$0xff]
        %v2429 = vld [vmem:[%s2412 + $0x80] sm:$0xff]
        %v2430 = vld [vmem:[%s2412 + $0x88] sm:$0xff]
        %v2431 = vld [vmem:[%s2412 + $0x90] sm:$0xff]
        %v2432 = vld [vmem:[%s2412 + $0x98] sm:$0xff]
        %v2435 = vrot.slane %v2390, 1
        %v2436 = vrot.slane %v2391, 1
        %v2438 = vsel %vm417, %v2436, 0
        %2440 = vmatprep.subr.mxu0 0.0
        %2441 = vmatpush1.msra.mxu0 %v2413
        %2442 = vmatprep.subr.mxu0 0.0
        %2443 = vmatpush1.msra.mxu0 %v2414
        %2444 = vmatprep.subr.mxu0 0.0
        %2445 = vmatpush1.msra.mxu0 %v2415
        %2446 = vmatprep.subr.mxu0 0.0
        %2447 = vmatpush1.msra.mxu0 %v2416
        %2448 = vmatprep.subr.mxu0 0.0
        %2449 = vmatpush1.msra.mxu0 %v2417
        %2450 = vmatprep.subr.mxu0 0.0
        %2451 = vmatpush1.msra.mxu0 %v2418
        %2452 = vmatprep.subr.mxu0 0.0
        %2453 = vmatpush1.msra.mxu0 %v2419
        %2454 = vmatprep.subr.mxu0 0.0
        %2455 = vmatpush1.msra.mxu0 %v2420
        %2456 = vmatprep.subr.mxu0 0.0
        %2457 = vmatpush1.msra.mxu0 %v2421
        %2458 = vmatprep.subr.mxu0 0.0
        %2459 = vmatpush1.msra.mxu0 %v2422
        %2460 = vmatprep.subr.mxu0 0.0
        %2461 = vmatpush1.msra.mxu0 %v2423
        %2462 = vmatprep.subr.mxu0 0.0
        %2463 = vmatpush1.msra.mxu0 %v2424
        %2464 = vmatprep.subr.mxu0 0.0
        %2465 = vmatpush1.msra.mxu0 %v2425
        %2466 = vmatprep.subr.mxu0 0.0
        %2467 = vmatpush1.msra.mxu0 %v2426
        %2468 = vmatprep.subr.mxu0 0.0
        %2469 = vmatpush1.msra.mxu0 %v2427
        %2470 = vmatprep.subr.mxu0 0.0
        %2471 = vmatpush1.msra.mxu0 %v2428
        %2472 = vmatprep.subr.mxu0 0.0
        %2473 = vmatpush1.msra.mxu0 %v2429
        %2474 = vmatprep.subr.mxu0 0.0
        %2475 = vmatpush1.msra.mxu0 %v2430
        %2476 = vmatprep.subr.mxu0 0.0
        %2477 = vmatpush1.msra.mxu0 %v2431
        %2478 = vmatprep.subr.mxu0 0.0
        %2479 = vmatpush1.msra.mxu0 %v2432
        %2480 = vmatprep.subr.mxu0 0.0
        %2481 = vmatpush1.msra.mxu0 0.0
        %2482 = vmatprep.subr.mxu0 0.0
        %2483 = vmatpush1.msra.mxu0 0.0
        %2484 = vmatprep.subr.mxu0 0.0
        %2485 = vmatpush1.msra.mxu0 0.0
        %2486 = vmatprep.subr.mxu0 0.0
        %2487 = vmatpush1.msra.mxu0 0.0
        %2488 = vmatprep.subr.mxu0 0.0
        %2489 = vmatpush1.msra.mxu0 0.0
        %2490 = vmatprep.subr.mxu0 0.0
        %2491 = vmatpush1.msra.mxu0 0.0
        %2492 = vmatprep.subr.mxu0 0.0
        %2493 = vmatpush1.msra.mxu0 0.0
        %2494 = vmatprep.subr.mxu0 0.0
        %2495 = vmatpush1.msra.mxu0 0.0
        %2496 = vmatprep.subr.mxu0 0.0
        %2497 = vmatpush1.msra.mxu0 0.0
        %2498 = vmatprep.subr.mxu0 0.0
        %2499 = vmatpush1.msra.mxu0 0.0
        %2500 = vmatprep.subr.mxu0 0.0
        %2501 = vmatpush1.msra.mxu0 0.0
        %2502 = vmatprep.subr.mxu0 0.0
        %2503 = vmatpush1.msra.mxu0 0.0
        %2504 = vmatprep.mubr.f32.mxu0 %v2438
        %2505 = vmatmul.mubr.f32.gmra.mrb[0].mxu0 %v2435
        %v2506 = vpop.f32.mrb[0].mxu0
        %v2507 = vadd.f32 0.0, %v2506
        %v2508 = vpop.f32.mrb[0].mxu0
        %2509 = vdwg.mxu0
        %v2510 = vsel %vm417, %v2391, 0
        %2512 = vmatprep.subr.mxu0 0.0
        %2513 = vmatpush1.msra.mxu0 %v2392
        %2514 = vmatprep.subr.mxu0 0.0
        %2515 = vmatpush1.msra.mxu0 %v2393
        %2516 = vmatprep.subr.mxu0 0.0
        %2517 = vmatpush1.msra.mxu0 %v2394
        %2518 = vmatprep.subr.mxu0 0.0
        %2519 = vmatpush1.msra.mxu0 %v2395
        %2520 = vmatprep.subr.mxu0 0.0
        %2521 = vmatpush1.msra.mxu0 %v2396
        %2522 = vmatprep.subr.mxu0 0.0
        %2523 = vmatpush1.msra.mxu0 %v2397
        %2524 = vmatprep.subr.mxu0 0.0
        %2525 = vmatpush1.msra.mxu0 %v2398
        %2526 = vmatprep.subr.mxu0 0.0
        %2527 = vmatpush1.msra.mxu0 %v2399
        %2528 = vmatprep.subr.mxu0 0.0
        %2529 = vmatpush1.msra.mxu0 %v2400
        %2530 = vmatprep.subr.mxu0 0.0
        %2531 = vmatpush1.msra.mxu0 %v2401
        %2532 = vmatprep.subr.mxu0 0.0
        %2533 = vmatpush1.msra.mxu0 %v2402
        %2534 = vmatprep.subr.mxu0 0.0
        %2535 = vmatpush1.msra.mxu0 %v2403
        %2536 = vmatprep.subr.mxu0 0.0
        %2537 = vmatpush1.msra.mxu0 %v2404
        %2538 = vmatprep.subr.mxu0 0.0
        %2539 = vmatpush1.msra.mxu0 %v2405
        %2540 = vmatprep.subr.mxu0 0.0
        %2541 = vmatpush1.msra.mxu0 %v2406
        %2542 = vmatprep.subr.mxu0 0.0
        %2543 = vmatpush1.msra.mxu0 %v2407
        %2544 = vmatprep.subr.mxu0 0.0
        %2545 = vmatpush1.msra.mxu0 %v2408
        %2546 = vmatprep.subr.mxu0 0.0
        %2547 = vmatpush1.msra.mxu0 %v2409
        %2548 = vmatprep.subr.mxu0 0.0
        %2549 = vmatpush1.msra.mxu0 %v2410
        %2550 = vmatprep.subr.mxu0 0.0
        %2551 = vmatpush1.msra.mxu0 %v2411
        %2552 = vmatprep.subr.mxu0 0.0
        %2553 = vmatpush1.msra.mxu0 0.0
        %2554 = vmatprep.subr.mxu0 0.0
        %2555 = vmatpush1.msra.mxu0 0.0
        %2556 = vmatprep.subr.mxu0 0.0
        %2557 = vmatpush1.msra.mxu0 0.0
        %2558 = vmatprep.subr.mxu0 0.0
        %2559 = vmatpush1.msra.mxu0 0.0
        %2560 = vmatprep.subr.mxu0 0.0
        %2561 = vmatpush1.msra.mxu0 0.0
        %2562 = vmatprep.subr.mxu0 0.0
        %2563 = vmatpush1.msra.mxu0 0.0
        %2564 = vmatprep.subr.mxu0 0.0
        %2565 = vmatpush1.msra.mxu0 0.0
        %2566 = vmatprep.subr.mxu0 0.0
        %2567 = vmatpush1.msra.mxu0 0.0
        %2568 = vmatprep.subr.mxu0 0.0
        %2569 = vmatpush1.msra.mxu0 0.0
        %2570 = vmatprep.subr.mxu0 0.0
        %2571 = vmatpush1.msra.mxu0 0.0
        %2572 = vmatprep.subr.mxu0 0.0
        %2573 = vmatpush1.msra.mxu0 0.0
        %2574 = vmatprep.subr.mxu0 0.0
        %2575 = vmatpush1.msra.mxu0 0.0
        %2576 = vmatprep.mubr.f32.mxu0 %v2510
        %2577 = vmatmul.mubr.f32.gmra.mrb[0].mxu0 %v2390
        %v2578 = vpop.f32.mrb[0].mxu0
        %v2579 = vadd.f32 %v2507, %v2578
        %v2580 = vpop.f32.mrb[0].mxu0
        %2581 = vdwg.mxu0
        %s2582 = scalar_lea.vmem %s5, 320
        %v2583 = vld [vmem:[%s2582] sm:$0xff]
        %v2584 = vld [vmem:[%s2582 + $0x8] sm:$0xff]
        %v2585 = vld [vmem:[%s2582 + $0x10] sm:$0xff]
        %v2586 = vld [vmem:[%s2582 + $0x18] sm:$0xff]
        %v2587 = vld [vmem:[%s2582 + $0x20] sm:$0xff]
        %v2588 = vld [vmem:[%s2582 + $0x28] sm:$0xff]
        %v2589 = vld [vmem:[%s2582 + $0x30] sm:$0xff]
        %v2590 = vld [vmem:[%s2582 + $0x38] sm:$0xff]
        %v2591 = vld [vmem:[%s2582 + $0x40] sm:$0xff]
        %v2592 = vld [vmem:[%s2582 + $0x48] sm:$0xff]
        %v2593 = vld [vmem:[%s2582 + $0x50] sm:$0xff]
        %v2594 = vld [vmem:[%s2582 + $0x58] sm:$0xff]
        %v2595 = vld [vmem:[%s2582 + $0x60] sm:$0xff]
        %v2596 = vld [vmem:[%s2582 + $0x68] sm:$0xff]
        %v2597 = vld [vmem:[%s2582 + $0x70] sm:$0xff]
        %v2598 = vld [vmem:[%s2582 + $0x78] sm:$0xff]
        %v2599 = vld [vmem:[%s2582 + $0x80] sm:$0xff]
        %v2600 = vld [vmem:[%s2582 + $0x88] sm:$0xff]
        %v2601 = vld [vmem:[%s2582 + $0x90] sm:$0xff]
        %v2602 = vld [vmem:[%s2582 + $0x98] sm:$0xff]
        %v2603 = vrot.slane %v2390, 2
        %v2604 = vrot.slane %v2391, 2
        %v2606 = vsel %vm417, %v2604, 0
        %2608 = vmatprep.subr.mxu0 0.0
        %2609 = vmatpush1.msra.mxu0 %v2583
        %2610 = vmatprep.subr.mxu0 0.0
        %2611 = vmatpush1.msra.mxu0 %v2584
        %2612 = vmatprep.subr.mxu0 0.0
        %2613 = vmatpush1.msra.mxu0 %v2585
        %2614 = vmatprep.subr.mxu0 0.0
        %2615 = vmatpush1.msra.mxu0 %v2586
        %2616 = vmatprep.subr.mxu0 0.0
        %2617 = vmatpush1.msra.mxu0 %v2587
        %2618 = vmatprep.subr.mxu0 0.0
        %2619 = vmatpush1.msra.mxu0 %v2588
        %2620 = vmatprep.subr.mxu0 0.0
        %2621 = vmatpush1.msra.mxu0 %v2589
        %2622 = vmatprep.subr.mxu0 0.0
        %2623 = vmatpush1.msra.mxu0 %v2590
        %2624 = vmatprep.subr.mxu0 0.0
        %2625 = vmatpush1.msra.mxu0 %v2591
        %2626 = vmatprep.subr.mxu0 0.0
        %2627 = vmatpush1.msra.mxu0 %v2592
        %2628 = vmatprep.subr.mxu0 0.0
        %2629 = vmatpush1.msra.mxu0 %v2593
        %2630 = vmatprep.subr.mxu0 0.0
        %2631 = vmatpush1.msra.mxu0 %v2594
        %2632 = vmatprep.subr.mxu0 0.0
        %2633 = vmatpush1.msra.mxu0 %v2595
        %2634 = vmatprep.subr.mxu0 0.0
        %2635 = vmatpush1.msra.mxu0 %v2596
        %2636 = vmatprep.subr.mxu0 0.0
        %2637 = vmatpush1.msra.mxu0 %v2597
        %2638 = vmatprep.subr.mxu0 0.0
        %2639 = vmatpush1.msra.mxu0 %v2598
        %2640 = vmatprep.subr.mxu0 0.0
        %2641 = vmatpush1.msra.mxu0 %v2599
        %2642 = vmatprep.subr.mxu0 0.0
        %2643 = vmatpush1.msra.mxu0 %v2600
        %2644 = vmatprep.subr.mxu0 0.0
        %2645 = vmatpush1.msra.mxu0 %v2601
        %2646 = vmatprep.subr.mxu0 0.0
        %2647 = vmatpush1.msra.mxu0 %v2602
        %2648 = vmatprep.subr.mxu0 0.0
        %2649 = vmatpush1.msra.mxu0 0.0
        %2650 = vmatprep.subr.mxu0 0.0
        %2651 = vmatpush1.msra.mxu0 0.0
        %2652 = vmatprep.subr.mxu0 0.0
        %2653 = vmatpush1.msra.mxu0 0.0
        %2654 = vmatprep.subr.mxu0 0.0
        %2655 = vmatpush1.msra.mxu0 0.0
        %2656 = vmatprep.subr.mxu0 0.0
        %2657 = vmatpush1.msra.mxu0 0.0
        %2658 = vmatprep.subr.mxu0 0.0
        %2659 = vmatpush1.msra.mxu0 0.0
        %2660 = vmatprep.subr.mxu0 0.0
        %2661 = vmatpush1.msra.mxu0 0.0
        %2662 = vmatprep.subr.mxu0 0.0
        %2663 = vmatpush1.msra.mxu0 0.0
        %2664 = vmatprep.subr.mxu0 0.0
        %2665 = vmatpush1.msra.mxu0 0.0
        %2666 = vmatprep.subr.mxu0 0.0
        %2667 = vmatpush1.msra.mxu0 0.0
        %2668 = vmatprep.subr.mxu0 0.0
        %2669 = vmatpush1.msra.mxu0 0.0
        %2670 = vmatprep.subr.mxu0 0.0
        %2671 = vmatpush1.msra.mxu0 0.0
        %2672 = vmatprep.mubr.f32.mxu0 %v2606
        %2673 = vmatmul.mubr.f32.gmra.mrb[0].mxu0 %v2603
        %v2674 = vpop.f32.mrb[0].mxu0
        %v2675 = vadd.f32 0.0, %v2674
        %v2676 = vpop.f32.mrb[0].mxu0
        %2677 = vdwg.mxu0
        %v2678 = vadd.f32 %v2579, %v2675
        %s2679 = scalar_lea.vmem %s5, 480
        %v2680 = vld [vmem:[%s2679] sm:$0xff]
        %v2681 = vld [vmem:[%s2679 + $0x8] sm:$0xff]
        %v2682 = vld [vmem:[%s2679 + $0x10] sm:$0xff]
        %v2683 = vld [vmem:[%s2679 + $0x18] sm:$0xff]
        %v2684 = vld [vmem:[%s2679 + $0x20] sm:$0xff]
        %v2685 = vld [vmem:[%s2679 + $0x28] sm:$0xff]
        %v2686 = vld [vmem:[%s2679 + $0x30] sm:$0xff]
        %v2687 = vld [vmem:[%s2679 + $0x38] sm:$0xff]
        %v2688 = vld [vmem:[%s2679 + $0x40] sm:$0xff]
        %v2689 = vld [vmem:[%s2679 + $0x48] sm:$0xff]
        %v2690 = vld [vmem:[%s2679 + $0x50] sm:$0xff]
        %v2691 = vld [vmem:[%s2679 + $0x58] sm:$0xff]
        %v2692 = vld [vmem:[%s2679 + $0x60] sm:$0xff]
        %v2693 = vld [vmem:[%s2679 + $0x68] sm:$0xff]
        %v2694 = vld [vmem:[%s2679 + $0x70] sm:$0xff]
        %v2695 = vld [vmem:[%s2679 + $0x78] sm:$0xff]
        %v2696 = vld [vmem:[%s2679 + $0x80] sm:$0xff]
        %v2697 = vld [vmem:[%s2679 + $0x88] sm:$0xff]
        %v2698 = vld [vmem:[%s2679 + $0x90] sm:$0xff]
        %v2699 = vld [vmem:[%s2679 + $0x98] sm:$0xff]
        %v2700 = vrot.slane %v2390, 3
        %v2701 = vrot.slane %v2391, 3
        %v2703 = vsel %vm417, %v2701, 0
        %2705 = vmatprep.subr.mxu0 0.0
        %2706 = vmatpush1.msra.mxu0 %v2680
        %2707 = vmatprep.subr.mxu0 0.0
        %2708 = vmatpush1.msra.mxu0 %v2681
        %2709 = vmatprep.subr.mxu0 0.0
        %2710 = vmatpush1.msra.mxu0 %v2682
        %2711 = vmatprep.subr.mxu0 0.0
        %2712 = vmatpush1.msra.mxu0 %v2683
        %2713 = vmatprep.subr.mxu0 0.0
        %2714 = vmatpush1.msra.mxu0 %v2684
        %2715 = vmatprep.subr.mxu0 0.0
        %2716 = vmatpush1.msra.mxu0 %v2685
        %2717 = vmatprep.subr.mxu0 0.0
        %2718 = vmatpush1.msra.mxu0 %v2686
        %2719 = vmatprep.subr.mxu0 0.0
        %2720 = vmatpush1.msra.mxu0 %v2687
        %2721 = vmatprep.subr.mxu0 0.0
        %2722 = vmatpush1.msra.mxu0 %v2688
        %2723 = vmatprep.subr.mxu0 0.0
        %2724 = vmatpush1.msra.mxu0 %v2689
        %2725 = vmatprep.subr.mxu0 0.0
        %2726 = vmatpush1.msra.mxu0 %v2690
        %2727 = vmatprep.subr.mxu0 0.0
        %2728 = vmatpush1.msra.mxu0 %v2691
        %2729 = vmatprep.subr.mxu0 0.0
        %2730 = vmatpush1.msra.mxu0 %v2692
        %2731 = vmatprep.subr.mxu0 0.0
        %2732 = vmatpush1.msra.mxu0 %v2693
        %2733 = vmatprep.subr.mxu0 0.0
        %2734 = vmatpush1.msra.mxu0 %v2694
        %2735 = vmatprep.subr.mxu0 0.0
        %2736 = vmatpush1.msra.mxu0 %v2695
        %2737 = vmatprep.subr.mxu0 0.0
        %2738 = vmatpush1.msra.mxu0 %v2696
        %2739 = vmatprep.subr.mxu0 0.0
        %2740 = vmatpush1.msra.mxu0 %v2697
        %2741 = vmatprep.subr.mxu0 0.0
        %2742 = vmatpush1.msra.mxu0 %v2698
        %2743 = vmatprep.subr.mxu0 0.0
        %2744 = vmatpush1.msra.mxu0 %v2699
        %2745 = vmatprep.subr.mxu0 0.0
        %2746 = vmatpush1.msra.mxu0 0.0
        %2747 = vmatprep.subr.mxu0 0.0
        %2748 = vmatpush1.msra.mxu0 0.0
        %2749 = vmatprep.subr.mxu0 0.0
        %2750 = vmatpush1.msra.mxu0 0.0
        %2751 = vmatprep.subr.mxu0 0.0
        %2752 = vmatpush1.msra.mxu0 0.0
        %2753 = vmatprep.subr.mxu0 0.0
        %2754 = vmatpush1.msra.mxu0 0.0
        %2755 = vmatprep.subr.mxu0 0.0
        %2756 = vmatpush1.msra.mxu0 0.0
        %2757 = vmatprep.subr.mxu0 0.0
        %2758 = vmatpush1.msra.mxu0 0.0
        %2759 = vmatprep.subr.mxu0 0.0
        %2760 = vmatpush1.msra.mxu0 0.0
        %2761 = vmatprep.subr.mxu0 0.0
        %2762 = vmatpush1.msra.mxu0 0.0
        %2763 = vmatprep.subr.mxu0 0.0
        %2764 = vmatpush1.msra.mxu0 0.0
        %2765 = vmatprep.subr.mxu0 0.0
        %2766 = vmatpush1.msra.mxu0 0.0
        %2767 = vmatprep.subr.mxu0 0.0
        %2768 = vmatpush1.msra.mxu0 0.0
        %2769 = vmatprep.mubr.f32.mxu0 %v2703
        %2770 = vmatmul.mubr.f32.gmra.mrb[0].mxu0 %v2700
        %v2771 = vpop.f32.mrb[0].mxu0
        %v2772 = vadd.f32 0.0, %v2771
        %v2773 = vpop.f32.mrb[0].mxu0
        %2774 = vdwg.mxu0
        %v2775 = vadd.f32 %v2678, %v2772
        %s2776 = scalar_lea.vmem %s5, 640
        %v2777 = vld [vmem:[%s2776] sm:$0xff]
        %v2778 = vld [vmem:[%s2776 + $0x8] sm:$0xff]
        %v2779 = vld [vmem:[%s2776 + $0x10] sm:$0xff]
        %v2780 = vld [vmem:[%s2776 + $0x18] sm:$0xff]
        %v2781 = vld [vmem:[%s2776 + $0x20] sm:$0xff]
        %v2782 = vld [vmem:[%s2776 + $0x28] sm:$0xff]
        %v2783 = vld [vmem:[%s2776 + $0x30] sm:$0xff]
        %v2784 = vld [vmem:[%s2776 + $0x38] sm:$0xff]
        %v2785 = vld [vmem:[%s2776 + $0x40] sm:$0xff]
        %v2786 = vld [vmem:[%s2776 + $0x48] sm:$0xff]
        %v2787 = vld [vmem:[%s2776 + $0x50] sm:$0xff]
        %v2788 = vld [vmem:[%s2776 + $0x58] sm:$0xff]
        %v2789 = vld [vmem:[%s2776 + $0x60] sm:$0xff]
        %v2790 = vld [vmem:[%s2776 + $0x68] sm:$0xff]
        %v2791 = vld [vmem:[%s2776 + $0x70] sm:$0xff]
        %v2792 = vld [vmem:[%s2776 + $0x78] sm:$0xff]
        %v2793 = vld [vmem:[%s2776 + $0x80] sm:$0xff]
        %v2794 = vld [vmem:[%s2776 + $0x88] sm:$0xff]
        %v2795 = vld [vmem:[%s2776 + $0x90] sm:$0xff]
        %v2796 = vld [vmem:[%s2776 + $0x98] sm:$0xff]
        %v2797 = vrot.slane %v2390, 4
        %v2798 = vrot.slane %v2391, 4
        %v2800 = vsel %vm417, %v2798, 0
        %2802 = vmatprep.subr.mxu0 0.0
        %2803 = vmatpush1.msra.mxu0 %v2777
        %2804 = vmatprep.subr.mxu0 0.0
        %2805 = vmatpush1.msra.mxu0 %v2778
        %2806 = vmatprep.subr.mxu0 0.0
        %2807 = vmatpush1.msra.mxu0 %v2779
        %2808 = vmatprep.subr.mxu0 0.0
        %2809 = vmatpush1.msra.mxu0 %v2780
        %2810 = vmatprep.subr.mxu0 0.0
        %2811 = vmatpush1.msra.mxu0 %v2781
        %2812 = vmatprep.subr.mxu0 0.0
        %2813 = vmatpush1.msra.mxu0 %v2782
        %2814 = vmatprep.subr.mxu0 0.0
        %2815 = vmatpush1.msra.mxu0 %v2783
        %2816 = vmatprep.subr.mxu0 0.0
        %2817 = vmatpush1.msra.mxu0 %v2784
        %2818 = vmatprep.subr.mxu0 0.0
        %2819 = vmatpush1.msra.mxu0 %v2785
        %2820 = vmatprep.subr.mxu0 0.0
        %2821 = vmatpush1.msra.mxu0 %v2786
        %2822 = vmatprep.subr.mxu0 0.0
        %2823 = vmatpush1.msra.mxu0 %v2787
        %2824 = vmatprep.subr.mxu0 0.0
        %2825 = vmatpush1.msra.mxu0 %v2788
        %2826 = vmatprep.subr.mxu0 0.0
        %2827 = vmatpush1.msra.mxu0 %v2789
        %2828 = vmatprep.subr.mxu0 0.0
        %2829 = vmatpush1.msra.mxu0 %v2790
        %2830 = vmatprep.subr.mxu0 0.0
        %2831 = vmatpush1.msra.mxu0 %v2791
        %2832 = vmatprep.subr.mxu0 0.0
        %2833 = vmatpush1.msra.mxu0 %v2792
        %2834 = vmatprep.subr.mxu0 0.0
        %2835 = vmatpush1.msra.mxu0 %v2793
        %2836 = vmatprep.subr.mxu0 0.0
        %2837 = vmatpush1.msra.mxu0 %v2794
        %2838 = vmatprep.subr.mxu0 0.0
        %2839 = vmatpush1.msra.mxu0 %v2795
        %2840 = vmatprep.subr.mxu0 0.0
        %2841 = vmatpush1.msra.mxu0 %v2796
        %2842 = vmatprep.subr.mxu0 0.0
        %2843 = vmatpush1.msra.mxu0 0.0
        %2844 = vmatprep.subr.mxu0 0.0
        %2845 = vmatpush1.msra.mxu0 0.0
        %2846 = vmatprep.subr.mxu0 0.0
        %2847 = vmatpush1.msra.mxu0 0.0
        %2848 = vmatprep.subr.mxu0 0.0
        %2849 = vmatpush1.msra.mxu0 0.0
        %2850 = vmatprep.subr.mxu0 0.0
        %2851 = vmatpush1.msra.mxu0 0.0
        %2852 = vmatprep.subr.mxu0 0.0
        %2853 = vmatpush1.msra.mxu0 0.0
        %2854 = vmatprep.subr.mxu0 0.0
        %2855 = vmatpush1.msra.mxu0 0.0
        %2856 = vmatprep.subr.mxu0 0.0
        %2857 = vmatpush1.msra.mxu0 0.0
        %2858 = vmatprep.subr.mxu0 0.0
        %2859 = vmatpush1.msra.mxu0 0.0
        %2860 = vmatprep.subr.mxu0 0.0
        %2861 = vmatpush1.msra.mxu0 0.0
        %2862 = vmatprep.subr.mxu0 0.0
        %2863 = vmatpush1.msra.mxu0 0.0
        %2864 = vmatprep.subr.mxu0 0.0
        %2865 = vmatpush1.msra.mxu0 0.0
        %2866 = vmatprep.mubr.f32.mxu0 %v2800
        %2867 = vmatmul.mubr.f32.gmra.mrb[0].mxu0 %v2797
        %v2868 = vpop.f32.mrb[0].mxu0
        %v2869 = vadd.f32 0.0, %v2868
        %v2870 = vpop.f32.mrb[0].mxu0
        %2871 = vdwg.mxu0
        %v2872 = vadd.f32 %v2775, %v2869
        %v2873 = vld [vmem:[%s6] sm:$0x1]
        %v2874 = vadd.f32 %v2872, %v2873
        %v2875 = vmax.f32 %v2874, 0.0
        %v2876 = vld [vmem:[%s7] sm:$0xff]
        %v2877 = vld [vmem:[%s7 + $0x8] sm:$0xff]
        %v2878 = vld [vmem:[%s7 + $0x10] sm:$0xff]
        %v2879 = vld [vmem:[%s7 + $0x18] sm:$0xff]
        %v2880 = vld [vmem:[%s7 + $0x20] sm:$0xff]
        %v2881 = vld [vmem:[%s7 + $0x28] sm:$0xff]
        %v2882 = vld [vmem:[%s7 + $0x30] sm:$0xff]
        %v2883 = vld [vmem:[%s7 + $0x38] sm:$0xff]
        %v2884 = vld [vmem:[%s7 + $0x40] sm:$0xff]
        %v2885 = vld [vmem:[%s7 + $0x48] sm:$0xff]
        %v2886 = vld [vmem:[%s7 + $0x50] sm:$0xff]
        %v2887 = vld [vmem:[%s7 + $0x58] sm:$0xff]
        %v2888 = vld [vmem:[%s7 + $0x60] sm:$0xff]
        %v2889 = vld [vmem:[%s7 + $0x68] sm:$0xff]
        %v2890 = vld [vmem:[%s7 + $0x70] sm:$0xff]
        %v2891 = vld [vmem:[%s8] sm:$0x1]
        %vm2892 = vcmask 982016
        %v2894 = vsel %vm2892, %v2875, 0
        %2896 = vmatprep.subr.mxu0 0.0
        %2897 = vmatpush1.msra.mxu0 %v2876
        %2898 = vmatprep.subr.mxu0 0.0
        %2899 = vmatpush1.msra.mxu0 %v2877
        %2900 = vmatprep.subr.mxu0 0.0
        %2901 = vmatpush1.msra.mxu0 %v2878
        %2902 = vmatprep.subr.mxu0 0.0
        %2903 = vmatpush1.msra.mxu0 %v2879
        %2904 = vmatprep.subr.mxu0 0.0
        %2905 = vmatpush1.msra.mxu0 %v2880
        %2906 = vmatprep.subr.mxu0 0.0
        %2907 = vmatpush1.msra.mxu0 %v2881
        %2908 = vmatprep.subr.mxu0 0.0
        %2909 = vmatpush1.msra.mxu0 %v2882
        %2910 = vmatprep.subr.mxu0 0.0
        %2911 = vmatpush1.msra.mxu0 %v2883
        %2912 = vmatprep.subr.mxu0 0.0
        %2913 = vmatpush1.msra.mxu0 %v2884
        %2914 = vmatprep.subr.mxu0 0.0
        %2915 = vmatpush1.msra.mxu0 %v2885
        %2916 = vmatprep.subr.mxu0 0.0
        %2917 = vmatpush1.msra.mxu0 %v2886
        %2918 = vmatprep.subr.mxu0 0.0
        %2919 = vmatpush1.msra.mxu0 %v2887
        %2920 = vmatprep.subr.mxu0 0.0
        %2921 = vmatpush1.msra.mxu0 %v2888
        %2922 = vmatprep.subr.mxu0 0.0
        %2923 = vmatpush1.msra.mxu0 %v2889
        %2924 = vmatprep.subr.mxu0 0.0
        %2925 = vmatpush1.msra.mxu0 %v2890
        %2926 = vmatprep.subr.mxu0 0.0
        %2927 = vmatpush1.msra.mxu0 0.0
        %2928 = vmatprep.subr.mxu0 0.0
        %2929 = vmatpush1.msra.mxu0 0.0
        %2930 = vmatprep.subr.mxu0 0.0
        %2931 = vmatpush1.msra.mxu0 0.0
        %2932 = vmatprep.subr.mxu0 0.0
        %2933 = vmatpush1.msra.mxu0 0.0
        %2934 = vmatprep.subr.mxu0 0.0
        %2935 = vmatpush1.msra.mxu0 0.0
        %2936 = vmatprep.subr.mxu0 0.0
        %2937 = vmatpush1.msra.mxu0 0.0
        %2938 = vmatprep.subr.mxu0 0.0
        %2939 = vmatpush1.msra.mxu0 0.0
        %2940 = vmatprep.subr.mxu0 0.0
        %2941 = vmatpush1.msra.mxu0 0.0
        %2942 = vmatprep.subr.mxu0 0.0
        %2943 = vmatpush1.msra.mxu0 0.0
        %2944 = vmatprep.subr.mxu0 0.0
        %2945 = vmatpush1.msra.mxu0 0.0
        %2946 = vmatprep.subr.mxu0 0.0
        %2947 = vmatpush1.msra.mxu0 0.0
        %2948 = vmatprep.subr.mxu0 0.0
        %2949 = vmatpush1.msra.mxu0 0.0
        %2950 = vmatprep.subr.mxu0 0.0
        %2951 = vmatpush1.msra.mxu0 0.0
        %2952 = vmatprep.subr.mxu0 0.0
        %2953 = vmatpush1.msra.mxu0 0.0
        %2954 = vmatprep.subr.mxu0 0.0
        %2955 = vmatpush1.msra.mxu0 0.0
        %2956 = vmatprep.subr.mxu0 0.0
        %2957 = vmatpush1.msra.mxu0 0.0
        %2958 = vmatprep.subr.mxu0 0.0
        %2959 = vmatpush1.msra.mxu0 0.0
        %2960 = vmatprep.mubr.f32.mxu0 0.0
        %2961 = vmatmul.mubr.f32.gmra.mrb[0].mxu0 %v2894
        %v2962 = vpop.f32.mrb[0].mxu0
        %v2963 = vadd.f32 %v2891, %v2962
        %v2964 = vpop.f32.mrb[0].mxu0
        %2965 = vdwg.mxu0
        %v2966 = vmax.f32 %v2963, 0.0
        %v2967 = vld [vmem:[%s9] sm:$0xff]
        %v2968 = vld [vmem:[%s9 + $0x8] sm:$0xff]
        %v2969 = vld [vmem:[%s9 + $0x10] sm:$0xff]
        %v2970 = vld [vmem:[%s9 + $0x18] sm:$0xff]
        %v2971 = vld [vmem:[%s9 + $0x20] sm:$0xff]
        %v2972 = vld [vmem:[%s9 + $0x28] sm:$0xff]
        %v2973 = vld [vmem:[%s9 + $0x30] sm:$0xff]
        %v2974 = vld [vmem:[%s9 + $0x38] sm:$0xff]
        %v2975 = vld [vmem:[%s9 + $0x40] sm:$0xff]
        %v2976 = vld [vmem:[%s9 + $0x48] sm:$0xff]
        %v2977 = vld [vmem:[%s9 + $0x50] sm:$0xf]
        %v2978 = vld [vmem:[%s10] sm:$0x1]
        %vm2979 = vcmask 687104
        %v2981 = vsel %vm2979, %v2966, 0
        %v2984 = vsel %vm865, %v2977, 0
        %2986 = vmatprep.subr.mxu0 0.0
        %2987 = vmatpush1.msra.mxu0 %v2967
        %2988 = vmatprep.subr.mxu0 0.0
        %2989 = vmatpush1.msra.mxu0 %v2968
        %2990 = vmatprep.subr.mxu0 0.0
        %2991 = vmatpush1.msra.mxu0 %v2969
        %2992 = vmatprep.subr.mxu0 0.0
        %2993 = vmatpush1.msra.mxu0 %v2970
        %2994 = vmatprep.subr.mxu0 0.0
        %2995 = vmatpush1.msra.mxu0 %v2971
        %2996 = vmatprep.subr.mxu0 0.0
        %2997 = vmatpush1.msra.mxu0 %v2972
        %2998 = vmatprep.subr.mxu0 0.0
        %2999 = vmatpush1.msra.mxu0 %v2973
        %3000 = vmatprep.subr.mxu0 0.0
        %3001 = vmatpush1.msra.mxu0 %v2974
        %3002 = vmatprep.subr.mxu0 0.0
        %3003 = vmatpush1.msra.mxu0 %v2975
        %3004 = vmatprep.subr.mxu0 0.0
        %3005 = vmatpush1.msra.mxu0 %v2976
        %3006 = vmatprep.subr.mxu0 0.0
        %3007 = vmatpush1.msra.mxu0 %v2984
        %3008 = vmatprep.subr.mxu0 0.0
        %3009 = vmatpush1.msra.mxu0 0.0
        %3010 = vmatprep.subr.mxu0 0.0
        %3011 = vmatpush1.msra.mxu0 0.0
        %3012 = vmatprep.subr.mxu0 0.0
        %3013 = vmatpush1.msra.mxu0 0.0
        %3014 = vmatprep.subr.mxu0 0.0
        %3015 = vmatpush1.msra.mxu0 0.0
        %3016 = vmatprep.subr.mxu0 0.0
        %3017 = vmatpush1.msra.mxu0 0.0
        %3018 = vmatprep.subr.mxu0 0.0
        %3019 = vmatpush1.msra.mxu0 0.0
        %3020 = vmatprep.subr.mxu0 0.0
        %3021 = vmatpush1.msra.mxu0 0.0
        %3022 = vmatprep.subr.mxu0 0.0
        %3023 = vmatpush1.msra.mxu0 0.0
        %3024 = vmatprep.subr.mxu0 0.0
        %3025 = vmatpush1.msra.mxu0 0.0
        %3026 = vmatprep.subr.mxu0 0.0
        %3027 = vmatpush1.msra.mxu0 0.0
        %3028 = vmatprep.subr.mxu0 0.0
        %3029 = vmatpush1.msra.mxu0 0.0
        %3030 = vmatprep.subr.mxu0 0.0
        %3031 = vmatpush1.msra.mxu0 0.0
        %3032 = vmatprep.subr.mxu0 0.0
        %3033 = vmatpush1.msra.mxu0 0.0
        %3034 = vmatprep.subr.mxu0 0.0
        %3035 = vmatpush1.msra.mxu0 0.0
        %3036 = vmatprep.subr.mxu0 0.0
        %3037 = vmatpush1.msra.mxu0 0.0
        %3038 = vmatprep.subr.mxu0 0.0
        %3039 = vmatpush1.msra.mxu0 0.0
        %3040 = vmatprep.subr.mxu0 0.0
        %3041 = vmatpush1.msra.mxu0 0.0
        %3042 = vmatprep.subr.mxu0 0.0
        %3043 = vmatpush1.msra.mxu0 0.0
        %3044 = vmatprep.subr.mxu0 0.0
        %3045 = vmatpush1.msra.mxu0 0.0
        %3046 = vmatprep.subr.mxu0 0.0
        %3047 = vmatpush1.msra.mxu0 0.0
        %3048 = vmatprep.subr.mxu0 0.0
        %3049 = vmatpush1.msra.mxu0 0.0
        %3050 = vmatprep.mubr.f32.mxu0 0.0
        %3051 = vmatmul.mubr.f32.gmra.mrb[0].mxu0 %v2981
        %v3052 = vpop.f32.mrb[0].mxu0
        %v3053 = vadd.f32 %v2978, %v3052
        %v3054 = vpop.f32.mrb[0].mxu0
        %3055 = vdwg.mxu0
        %vm3056 = vcmask 73728
        %3057 = vst.msk [vmem:[%s378] sm:$0x1] %vm3056, %v3053
        %s3058 = sand.u32 %s269, 1
        %s3059 = scalar_lea.sflag [#allocation3], %s3058
        %s3060 = sand.u32 %s269, 1
        %s3061 = scalar_lea.vmem [#allocation2], %s3060
        // Predicated region
        $region65: #{lenet5_forward.1} parent=63 // pred_check
          %p3062 = pneg %p279
        $region66: #{lenet5_forward.1} parent=63 // pred_check_branch
          %3064 = sbr.rel (%p3062) target = $region68
        $region67: #{lenet5_forward.1} parent=63 // pred_region
          %s3066 = ssub.s32 16, 16
          %3067 = vsyncadd %s3059, %s3066
          %s3068 = smul.addr %s25, 16
          %s3069 = scalar_lea.hbm %s11, %s3068
          %s3071 = sshll.u32 %s3061, 4
          %s3072 = int_to_ptr.vmem [resolvable:$true] %s3071
          %3074 = dma.vmem_to_hbm [thread:$0]  %s3072, 16, %s3069, %s3059
        $region68: #{lenet5_forward.1} parent=63 // pred_fallthru
          _
      $region64: #{lenet5_forward.1} parent=5 // pred_fallthru
        _
      %p3075 = scmp.le.s32.totalorder 2, %s20
      // Predicated region
      $region69: #{lenet5_forward.1} parent=5 // pred_check
        %p3076 = pneg %p3075
      $region70: #{lenet5_forward.1} parent=5 // pred_check_branch
        %3078 = sbr.rel (%p3076) target = $region72
      $region71: #{lenet5_forward.1} parent=5 // pred_region
        %s3079 = ssub.s32 %s20, 2
        // Predicated region
        $region73: #{lenet5_forward.1} parent=71 // pred_check
          %p3080 = pneg %p285
        $region74: #{lenet5_forward.1} parent=71 // pred_check_branch
          %3082 = sbr.rel (%p3080) target = $region76
        $region75: #{lenet5_forward.1} parent=71 // pred_region
          %s3083 = sand.u32 %s270, 1
          %s3084 = scalar_lea.sflag [#allocation3], %s3083
          %s3085 = sand.u32 %s270, 1
          %s3086 = scalar_lea.vmem [#allocation2], %s3085
          %3087 = dma.done %s3084, 16
        $region76: #{lenet5_forward.1} parent=71 // pred_fallthru
          _
      $region72: #{lenet5_forward.1} parent=5 // pred_fallthru
        _
    $region6: #{lenet5_forward.1} parent=1 // loop_footer
      %s24 = sadd.s32 1, %s20
    $region7: #{lenet5_forward.1} parent=1 // loop_footer_branch
      %19 = sbr.rel target = $region3
    $region8: #{lenet5_forward.1} parent=1 // loop_exit
      _
    %3088 = vsyncpa [#allocation3], 1
    %s3089 = scalar_lea.sflag [#allocation3], 1
    %3090 = vsyncpa %s3089, 1

</llo_original>
